<compile_context>
chip_gen: v7x
topology: tpu7x:2x2x1
jax: 0.10.0
libtpu: 0.0.40
codegen_flags: <defaults>
</compile_context>

<pallas_src>
import functools

import jax
import jax.numpy as jnp
from jax.experimental import pallas as pl
from jax.experimental.pallas import tpu as pltpu


def down_kernel(x_ref, w1_ref, b1_ref, w2_ref, b2_ref, o_ref, *,
                scale, use_mxu):
    # x_ref : (bn, scale, c_in, l_out)  -- pooling window on a leading dim
    # o_ref : (bn, c_out, l_out)
    bn = o_ref.shape[0]
    l_out = o_ref.shape[2]

    # ---- MaxPool1d(kernel=stride=scale): elementwise VPU max over the
    #      `scale` window slices; the lane axis (l_out) stays dense. ----
    h = x_ref[:, 0, :, :].astype(jnp.float32)
    for s in range(1, scale):
        h = jnp.maximum(h, x_ref[:, s, :, :].astype(jnp.float32))

    def shifted(a):
        # Conv1d(k=3, padding=1): left/right neighbours with a zero column at
        # the sequence ends.  Contiguous lane slices only; each batch element
        # has its own (c, l_out) rows so no cross-batch leakage is possible
        # (no boundary masks needed).
        z = jnp.zeros_like(a[:, :, :1])
        prev = jnp.concatenate([z, a[:, :, :l_out - 1]], axis=-1)
        nxt = jnp.concatenate([a[:, :, 1:], z], axis=-1)
        return prev, nxt

    if use_mxu:
        def conv_bn_relu(a, w_ref, b_ref):
            # One MXU matmul per batch element: the three taps are stacked on
            # the contraction axis.  Cast to the MXU dtype BEFORE building the
            # shifted copies / stack (3x less cast volume); accumulate in f32.
            a = a.astype(w_ref.dtype)
            prev, nxt = shifted(a)
            stacked = jnp.concatenate([prev, a, nxt], axis=1)   # (bn, 3c, l)
            outs = []
            for b in range(bn):
                acc = jnp.dot(w_ref[...], stacked[b],
                              preferred_element_type=jnp.float32)   # (c_o, l)
                outs.append(jnp.maximum(acc + b_ref[...], 0.0))
            return jnp.stack(outs, axis=0)                      # (bn, c_o, l)
    else:
        def conv_bn_relu(a, w_ref, b_ref):
            # Tiny channel counts (test sizes): skip the MXU, do the conv as
            # scalar (SMEM) broadcast multiply-adds on the VPU.  f32 all the
            # way (v5e has no bf16 VPU).  BN scale is already folded into w.
            prev, nxt = shifted(a)
            c_i = a.shape[1]
            c_o = b_ref.shape[0]
            rows = []
            for o in range(c_o):
                acc = jnp.zeros((bn, l_out), jnp.float32)
                for i in range(c_i):
                    acc = acc + w_ref[o, 3 * i + 0] * prev[:, i, :]
                    acc = acc + w_ref[o, 3 * i + 1] * a[:, i, :]
                    acc = acc + w_ref[o, 3 * i + 2] * nxt[:, i, :]
                rows.append(jnp.maximum(acc + b_ref[o], 0.0)[:, None, :])
            return jnp.concatenate(rows, axis=1)                # (bn, c_o, l)

    h = conv_bn_relu(h, w1_ref, b1_ref)     # (bn, c_mid, l_out) f32
    h = conv_bn_relu(h, w2_ref, b2_ref)     # (bn, c_out, l_out) f32
    o_ref[...] = h.astype(o_ref.dtype)      # single full-block store


def down_forward(x, params, *, scale, eps=1e-5, max_batch_block=8,
                 mxu_dtype=jnp.bfloat16):
    (w1, g1, be1, m1, v1, w2, g2, be2, m2, v2) = params
    n, c_in, l_in = x.shape
    c_mid = w1.shape[0]
    c_out = w2.shape[0]
    l_out = l_in // scale

    # ---- Fold eval-mode BatchNorm into the conv weights (scale part) and a
    #      per-channel additive shift (applied in the kernel epilogue). ----
    inv1 = g1 / jnp.sqrt(v1 + eps)
    inv2 = g2 / jnp.sqrt(v2 + eps)
    w1s = w1 * inv1[:, None, None]                  # (c_mid, c_in, 3)
    w2s = w2 * inv2[:, None, None]                  # (c_out, c_mid, 3)
    b1 = (be1 - m1 * inv1).astype(jnp.float32)      # (c_mid,)
    b2 = (be2 - m2 * inv2).astype(jnp.float32)      # (c_out,)

    # ---- Layout: MaxPool1d silently drops the tail; put the pooling window
    #      on a leading block dim so l_out stays dense on the lane axis. ----
    xt = jnp.transpose(
        x[:, :, :l_out * scale].reshape(n, c_in, l_out, scale), (0, 3, 1, 2))
    # xt: (n, scale, c_in, l_out)

    # ---- Conv path: scalar VPU FMAs for tiny channels, MXU otherwise.
    #      (For production channel counts, 3*C should also be padded to the
    #      MXU contraction multiple: 128 on v5e, 256 on v6e/v7x.) ----
    use_mxu = max(c_mid * c_in, c_out * c_mid) * 3 > 1024

    # ---- Batch tiling: bound the per-step VMEM working set (v7x: 64 MiB),
    #      keep >= 2 grid steps so both v7x TensorCores get work, and pad
    #      awkward N instead of falling back to bn=1. ----
    itemsize = jnp.dtype(x.dtype).itemsize
    per_b = (2 * scale * c_in * l_out * itemsize           # input block, 2x buffered
             + 4 * l_out * (4 * c_in + 5 * c_mid + c_out)  # f32 intermediates
             + 2 * c_out * l_out * itemsize)               # output block, 2x buffered
    vmem_budget = 24 << 20
    bn = int(max(1, min(max_batch_block, vmem_budget // max(per_b, 1))))
    if n >= 2:
        bn = min(bn, n // 2)
    bn = max(bn, 1)
    n_pad = -(-n // bn) * bn
    if n_pad != n:
        xt = jnp.pad(xt, ((0, n_pad - n), (0, 0), (0, 0), (0, 0)))

    if use_mxu:
        # Taps stacked channel-major ([prev, h, nxt]) along the contraction
        # axis; BN scale already folded in; bf16 only at the MXU input.
        wa = jnp.transpose(w1s, (0, 2, 1)).reshape(c_mid, 3 * c_in).astype(mxu_dtype)
        wb = jnp.transpose(w2s, (0, 2, 1)).reshape(c_out, 3 * c_mid).astype(mxu_dtype)
        ba = b1.reshape(c_mid, 1)
        bb = b2.reshape(c_out, 1)
        w1_spec = pl.BlockSpec((c_mid, 3 * c_in), lambda i: (0, 0))
        w2_spec = pl.BlockSpec((c_out, 3 * c_mid), lambda i: (0, 0))
        b1_spec = pl.BlockSpec((c_mid, 1), lambda i: (0, 0))
        b2_spec = pl.BlockSpec((c_out, 1), lambda i: (0, 0))
    else:
        # Scalar weights in SMEM, flattened so w[o, 3*i + t] is tap t of input
        # channel i (matches the kernel's VPU loop ordering).
        wa = w1s.reshape(c_mid, 3 * c_in).astype(jnp.float32)
        wb = w2s.reshape(c_out, 3 * c_mid).astype(jnp.float32)
        ba, bb = b1, b2
        smem = pl.BlockSpec(memory_space=pltpu.MemorySpace.SMEM)
        w1_spec = b1_spec = w2_spec = b2_spec = smem

    kernel = functools.partial(down_kernel, scale=scale, use_mxu=use_mxu)
    out = pl.pallas_call(
        kernel,
        out_shape=jax.ShapeDtypeStruct((n_pad, c_out, l_out), x.dtype),
        grid=(n_pad // bn,),
        in_specs=[
            pl.BlockSpec((bn, scale, c_in, l_out), lambda i: (i, 0, 0, 0)),
            w1_spec, b1_spec, w2_spec, b2_spec,
        ],
        out_specs=pl.BlockSpec((bn, c_out, l_out), lambda i: (i, 0, 0)),
        compiler_params=pltpu.CompilerParams(
            dimension_semantics=("parallel",),
            vmem_limit_bytes=int(min(64 << 20, max(16 << 20, 4 * bn * per_b)))),
    )(xt, wa, ba, wb, bb)
    return out[:n] if n_pad != n else out


def down_reference(x, params, *, scale, eps=1e-5):
    """Pure-JAX f32 reference (XLA conv) for correctness checking."""
    (w1, g1, be1, m1, v1, w2, g2, be2, m2, v2) = params
    n, c, l = x.shape
    l_out = l // scale
    xp = x[:, :, :l_out * scale].reshape(n, c, l_out, scale).max(axis=-1)

    def conv_bn_relu(h, w, g, be, m, v):
        y = jax.lax.conv_general_dilated(
            h, w, window_strides=(1,), padding=((1, 1),),
            dimension_numbers=("NCH", "OIH", "NCH"))
        inv = g / jnp.sqrt(v + eps)
        y = y * inv[None, :, None] + (be - m * inv)[None, :, None]
        return jnp.maximum(y, 0.0)

    h = conv_bn_relu(xp, w1, g1, be1, m1, v1)
    return conv_bn_relu(h, w2, g2, be2, m2, v2)


if __name__ == "__main__":
    N, C_IN, L, SCALE = 2, 4, 16, 2
    C_OUT = 8
    C_MID = C_OUT   # DoubleConv default: mid_channels = out_channels

    key = jax.random.PRNGKey(0)
    ks = jax.random.split(key, 11)
    x = jax.random.normal(ks[0], (N, C_IN, L), dtype=jnp.float32)

    # Conv weights: (out_channels, in_channels, kernel_size=3), no bias.
    w1 = 0.2 * jax.random.normal(ks[1], (C_MID, C_IN, 3), dtype=jnp.float32)
    w2 = 0.2 * jax.random.normal(ks[2], (C_OUT, C_MID, 3), dtype=jnp.float32)
    # BatchNorm1d params (gamma, beta, running_mean, running_var) per conv.
    g1 = 1.0 + 0.1 * jax.random.normal(ks[3], (C_MID,), dtype=jnp.float32)
    be1 = 0.1 * jax.random.normal(ks[4], (C_MID,), dtype=jnp.float32)
    m1 = 0.1 * jax.random.normal(ks[5], (C_MID,), dtype=jnp.float32)
    v1 = 1.0 + 0.2 * jax.random.uniform(ks[6], (C_MID,), dtype=jnp.float32)
    g2 = 1.0 + 0.1 * jax.random.normal(ks[7], (C_OUT,), dtype=jnp.float32)
    be2 = 0.1 * jax.random.normal(ks[8], (C_OUT,), dtype=jnp.float32)
    m2 = 0.1 * jax.random.normal(ks[9], (C_OUT,), dtype=jnp.float32)
    v2 = 1.0 + 0.2 * jax.random.uniform(ks[10], (C_OUT,), dtype=jnp.float32)

    params = (w1, g1, be1, m1, v1, w2, g2, be2, m2, v2)

    out = down_forward(x, params, scale=SCALE)
    out = jax.block_until_ready(out)

    ref = down_reference(x, params, scale=SCALE)
    assert out.shape == (N, C_OUT, L // SCALE), out.shape
    # Small-channel path runs fully in f32 -> tight tolerance.
    assert jnp.allclose(out, ref, rtol=1e-4, atol=1e-4), (
        float(jnp.max(jnp.abs(out - ref))))

    print("KERNEL_OK")
</pallas_src>

<mosaic_0001>
module attributes {stable_mosaic.version = 11 : i64} {
  func.func @down_kernel(%arg0: i32, %arg1: memref<1x2x4x8xf32, #tpu.memory_space<vmem>>, %arg2: memref<8x12xf32, #tpu.memory_space<smem>>, %arg3: memref<8xf32, #tpu.memory_space<smem>>, %arg4: memref<8x24xf32, #tpu.memory_space<smem>>, %arg5: memref<8xf32, #tpu.memory_space<smem>>, %arg6: memref<1x8x8xf32, #tpu.memory_space<vmem>>) attributes {dimension_semantics = [#tpu.dimension_semantics<parallel>], iteration_bounds = array<i64: 2>, scalar_prefetch = 0 : i64, scratch_operands = 0 : i64, tpu.core_type = #tpu.core_type<tc>, window_params = [{transform_indices = @transform_0, window_bounds = array<i64: 1, 2, 4, 8>}, {transform_indices = @transform_1, window_bounds = array<i64: 8, 12>}, {transform_indices = @transform_2, window_bounds = array<i64: 8>}, {transform_indices = @transform_3, window_bounds = array<i64: 8, 24>}, {transform_indices = @transform_4, window_bounds = array<i64: 8>}, {transform_indices = @transform_5, window_bounds = array<i64: 1, 8, 8>}]} {
    %c0 = arith.constant 0 : index
    %c0_0 = arith.constant 0 : index
    %c0_1 = arith.constant 0 : index
    %c0_2 = arith.constant 0 : index
    %0 = vector.load %arg1[%c0, %c0_0, %c0_1, %c0_2] : memref<1x2x4x8xf32, #tpu.memory_space<vmem>>, vector<1x1x4x8xf32>
    %1 = vector.shape_cast %0 : vector<1x1x4x8xf32> to vector<1x4x8xf32>
    %c0_3 = arith.constant 0 : index
    %c1 = arith.constant 1 : index
    %c0_4 = arith.constant 0 : index
    %c0_5 = arith.constant 0 : index
    %2 = vector.load %arg1[%c0_3, %c1, %c0_4, %c0_5] : memref<1x2x4x8xf32, #tpu.memory_space<vmem>>, vector<1x1x4x8xf32>
    %3 = vector.shape_cast %2 : vector<1x1x4x8xf32> to vector<1x4x8xf32>
    %4 = arith.maximumf %1, %3 : vector<1x4x8xf32>
    %cst = arith.constant 0.000000e+00 : f32
    %5 = vector.broadcast %cst : f32 to vector<1x4x1xf32>
    %6 = vector.extract_strided_slice %4 {offsets = [0, 0, 0], sizes = [1, 4, 7], strides = [1, 1, 1]} : vector<1x4x8xf32> to vector<1x4x7xf32>
    %7 = tpu.concatenate %5, %6 in 2 : vector<1x4x1xf32>, vector<1x4x7xf32> -> vector<1x4x8xf32>
    %8 = vector.extract_strided_slice %4 {offsets = [0, 0, 1], sizes = [1, 4, 7], strides = [1, 1, 1]} : vector<1x4x8xf32> to vector<1x4x7xf32>
    %9 = tpu.concatenate %8, %5 in 2 : vector<1x4x7xf32>, vector<1x4x1xf32> -> vector<1x4x8xf32>
    %cst_6 = arith.constant 0.000000e+00 : f32
    %10 = vector.broadcast %cst_6 : f32 to vector<1x8xf32>
    %c0_7 = arith.constant 0 : index
    %c0_8 = arith.constant 0 : index
    %11 = memref.load %arg2[%c0_7, %c0_8] : memref<8x12xf32, #tpu.memory_space<smem>>
    %12 = vector.extract_strided_slice %7 {offsets = [0, 0, 0], sizes = [1, 1, 8], strides = [1, 1, 1]} : vector<1x4x8xf32> to vector<1x1x8xf32>
    %13 = vector.shape_cast %12 : vector<1x1x8xf32> to vector<1x8xf32>
    %14 = vector.broadcast %11 : f32 to vector<1x8xf32>
    %15 = arith.mulf %14, %13 : vector<1x8xf32>
    %16 = arith.addf %10, %15 : vector<1x8xf32>
    %c0_9 = arith.constant 0 : index
    %c1_10 = arith.constant 1 : index
    %17 = memref.load %arg2[%c0_9, %c1_10] : memref<8x12xf32, #tpu.memory_space<smem>>
    %18 = vector.extract_strided_slice %4 {offsets = [0, 0, 0], sizes = [1, 1, 8], strides = [1, 1, 1]} : vector<1x4x8xf32> to vector<1x1x8xf32>
    %19 = vector.shape_cast %18 : vector<1x1x8xf32> to vector<1x8xf32>
    %20 = vector.broadcast %17 : f32 to vector<1x8xf32>
    %21 = arith.mulf %20, %19 : vector<1x8xf32>
    %22 = arith.addf %16, %21 : vector<1x8xf32>
    %c0_11 = arith.constant 0 : index
    %c2 = arith.constant 2 : index
    %23 = memref.load %arg2[%c0_11, %c2] : memref<8x12xf32, #tpu.memory_space<smem>>
    %24 = vector.extract_strided_slice %9 {offsets = [0, 0, 0], sizes = [1, 1, 8], strides = [1, 1, 1]} : vector<1x4x8xf32> to vector<1x1x8xf32>
    %25 = vector.shape_cast %24 : vector<1x1x8xf32> to vector<1x8xf32>
    %26 = vector.broadcast %23 : f32 to vector<1x8xf32>
    %27 = arith.mulf %26, %25 : vector<1x8xf32>
    %28 = arith.addf %22, %27 : vector<1x8xf32>
    %c0_12 = arith.constant 0 : index
    %c3 = arith.constant 3 : index
    %29 = memref.load %arg2[%c0_12, %c3] : memref<8x12xf32, #tpu.memory_space<smem>>
    %30 = vector.extract_strided_slice %7 {offsets = [0, 1, 0], sizes = [1, 1, 8], strides = [1, 1, 1]} : vector<1x4x8xf32> to vector<1x1x8xf32>
    %31 = vector.shape_cast %30 : vector<1x1x8xf32> to vector<1x8xf32>
    %32 = vector.broadcast %29 : f32 to vector<1x8xf32>
    %33 = arith.mulf %32, %31 : vector<1x8xf32>
    %34 = arith.addf %28, %33 : vector<1x8xf32>
    %c0_13 = arith.constant 0 : index
    %c4 = arith.constant 4 : index
    %35 = memref.load %arg2[%c0_13, %c4] : memref<8x12xf32, #tpu.memory_space<smem>>
    %36 = vector.extract_strided_slice %4 {offsets = [0, 1, 0], sizes = [1, 1, 8], strides = [1, 1, 1]} : vector<1x4x8xf32> to vector<1x1x8xf32>
    %37 = vector.shape_cast %36 : vector<1x1x8xf32> to vector<1x8xf32>
    %38 = vector.broadcast %35 : f32 to vector<1x8xf32>
    %39 = arith.mulf %38, %37 : vector<1x8xf32>
    %40 = arith.addf %34, %39 : vector<1x8xf32>
    %c0_14 = arith.constant 0 : index
    %c5 = arith.constant 5 : index
    %41 = memref.load %arg2[%c0_14, %c5] : memref<8x12xf32, #tpu.memory_space<smem>>
    %42 = vector.extract_strided_slice %9 {offsets = [0, 1, 0], sizes = [1, 1, 8], strides = [1, 1, 1]} : vector<1x4x8xf32> to vector<1x1x8xf32>
    %43 = vector.shape_cast %42 : vector<1x1x8xf32> to vector<1x8xf32>
    %44 = vector.broadcast %41 : f32 to vector<1x8xf32>
    %45 = arith.mulf %44, %43 : vector<1x8xf32>
    %46 = arith.addf %40, %45 : vector<1x8xf32>
    %c0_15 = arith.constant 0 : index
    %c6 = arith.constant 6 : index
    %47 = memref.load %arg2[%c0_15, %c6] : memref<8x12xf32, #tpu.memory_space<smem>>
    %48 = vector.extract_strided_slice %7 {offsets = [0, 2, 0], sizes = [1, 1, 8], strides = [1, 1, 1]} : vector<1x4x8xf32> to vector<1x1x8xf32>
    %49 = vector.shape_cast %48 : vector<1x1x8xf32> to vector<1x8xf32>
    %50 = vector.broadcast %47 : f32 to vector<1x8xf32>
    %51 = arith.mulf %50, %49 : vector<1x8xf32>
    %52 = arith.addf %46, %51 : vector<1x8xf32>
    %c0_16 = arith.constant 0 : index
    %c7 = arith.constant 7 : index
    %53 = memref.load %arg2[%c0_16, %c7] : memref<8x12xf32, #tpu.memory_space<smem>>
    %54 = vector.extract_strided_slice %4 {offsets = [0, 2, 0], sizes = [1, 1, 8], strides = [1, 1, 1]} : vector<1x4x8xf32> to vector<1x1x8xf32>
    %55 = vector.shape_cast %54 : vector<1x1x8xf32> to vector<1x8xf32>
    %56 = vector.broadcast %53 : f32 to vector<1x8xf32>
    %57 = arith.mulf %56, %55 : vector<1x8xf32>
    %58 = arith.addf %52, %57 : vector<1x8xf32>
    %c0_17 = arith.constant 0 : index
    %c8 = arith.constant 8 : index
    %59 = memref.load %arg2[%c0_17, %c8] : memref<8x12xf32, #tpu.memory_space<smem>>
    %60 = vector.extract_strided_slice %9 {offsets = [0, 2, 0], sizes = [1, 1, 8], strides = [1, 1, 1]} : vector<1x4x8xf32> to vector<1x1x8xf32>
    %61 = vector.shape_cast %60 : vector<1x1x8xf32> to vector<1x8xf32>
    %62 = vector.broadcast %59 : f32 to vector<1x8xf32>
    %63 = arith.mulf %62, %61 : vector<1x8xf32>
    %64 = arith.addf %58, %63 : vector<1x8xf32>
    %c0_18 = arith.constant 0 : index
    %c9 = arith.constant 9 : index
    %65 = memref.load %arg2[%c0_18, %c9] : memref<8x12xf32, #tpu.memory_space<smem>>
    %66 = vector.extract_strided_slice %7 {offsets = [0, 3, 0], sizes = [1, 1, 8], strides = [1, 1, 1]} : vector<1x4x8xf32> to vector<1x1x8xf32>
    %67 = vector.shape_cast %66 : vector<1x1x8xf32> to vector<1x8xf32>
    %68 = vector.broadcast %65 : f32 to vector<1x8xf32>
    %69 = arith.mulf %68, %67 : vector<1x8xf32>
    %70 = arith.addf %64, %69 : vector<1x8xf32>
    %c0_19 = arith.constant 0 : index
    %c10 = arith.constant 10 : index
    %71 = memref.load %arg2[%c0_19, %c10] : memref<8x12xf32, #tpu.memory_space<smem>>
    %72 = vector.extract_strided_slice %4 {offsets = [0, 3, 0], sizes = [1, 1, 8], strides = [1, 1, 1]} : vector<1x4x8xf32> to vector<1x1x8xf32>
    %73 = vector.shape_cast %72 : vector<1x1x8xf32> to vector<1x8xf32>
    %74 = vector.broadcast %71 : f32 to vector<1x8xf32>
    %75 = arith.mulf %74, %73 : vector<1x8xf32>
    %76 = arith.addf %70, %75 : vector<1x8xf32>
    %c0_20 = arith.constant 0 : index
    %c11 = arith.constant 11 : index
    %77 = memref.load %arg2[%c0_20, %c11] : memref<8x12xf32, #tpu.memory_space<smem>>
    %78 = vector.extract_strided_slice %9 {offsets = [0, 3, 0], sizes = [1, 1, 8], strides = [1, 1, 1]} : vector<1x4x8xf32> to vector<1x1x8xf32>
    %79 = vector.shape_cast %78 : vector<1x1x8xf32> to vector<1x8xf32>
    %80 = vector.broadcast %77 : f32 to vector<1x8xf32>
    %81 = arith.mulf %80, %79 : vector<1x8xf32>
    %82 = arith.addf %76, %81 : vector<1x8xf32>
    %c0_21 = arith.constant 0 : index
    %83 = memref.load %arg3[%c0_21] : memref<8xf32, #tpu.memory_space<smem>>
    %84 = vector.broadcast %83 : f32 to vector<1x8xf32>
    %85 = arith.addf %82, %84 : vector<1x8xf32>
    %cst_22 = arith.constant 0.000000e+00 : f32
    %86 = vector.broadcast %cst_22 : f32 to vector<1x8xf32>
    %87 = arith.maximumf %85, %86 : vector<1x8xf32>
    %88 = vector.shape_cast %87 : vector<1x8xf32> to vector<1x1x8xf32>
    %cst_23 = arith.constant 0.000000e+00 : f32
    %89 = vector.broadcast %cst_23 : f32 to vector<1x8xf32>
    %c1_24 = arith.constant 1 : index
    %c0_25 = arith.constant 0 : index
    %90 = memref.load %arg2[%c1_24, %c0_25] : memref<8x12xf32, #tpu.memory_space<smem>>
    %91 = vector.extract_strided_slice %7 {offsets = [0, 0, 0], sizes = [1, 1, 8], strides = [1, 1, 1]} : vector<1x4x8xf32> to vector<1x1x8xf32>
    %92 = vector.shape_cast %91 : vector<1x1x8xf32> to vector<1x8xf32>
    %93 = vector.broadcast %90 : f32 to vector<1x8xf32>
    %94 = arith.mulf %93, %92 : vector<1x8xf32>
    %95 = arith.addf %89, %94 : vector<1x8xf32>
    %c1_26 = arith.constant 1 : index
    %c1_27 = arith.constant 1 : index
    %96 = memref.load %arg2[%c1_26, %c1_27] : memref<8x12xf32, #tpu.memory_space<smem>>
    %97 = vector.extract_strided_slice %4 {offsets = [0, 0, 0], sizes = [1, 1, 8], strides = [1, 1, 1]} : vector<1x4x8xf32> to vector<1x1x8xf32>
    %98 = vector.shape_cast %97 : vector<1x1x8xf32> to vector<1x8xf32>
    %99 = vector.broadcast %96 : f32 to vector<1x8xf32>
    %100 = arith.mulf %99, %98 : vector<1x8xf32>
    %101 = arith.addf %95, %100 : vector<1x8xf32>
    %c1_28 = arith.constant 1 : index
    %c2_29 = arith.constant 2 : index
    %102 = memref.load %arg2[%c1_28, %c2_29] : memref<8x12xf32, #tpu.memory_space<smem>>
    %103 = vector.extract_strided_slice %9 {offsets = [0, 0, 0], sizes = [1, 1, 8], strides = [1, 1, 1]} : vector<1x4x8xf32> to vector<1x1x8xf32>
    %104 = vector.shape_cast %103 : vector<1x1x8xf32> to vector<1x8xf32>
    %105 = vector.broadcast %102 : f32 to vector<1x8xf32>
    %106 = arith.mulf %105, %104 : vector<1x8xf32>
    %107 = arith.addf %101, %106 : vector<1x8xf32>
    %c1_30 = arith.constant 1 : index
    %c3_31 = arith.constant 3 : index
    %108 = memref.load %arg2[%c1_30, %c3_31] : memref<8x12xf32, #tpu.memory_space<smem>>
    %109 = vector.extract_strided_slice %7 {offsets = [0, 1, 0], sizes = [1, 1, 8], strides = [1, 1, 1]} : vector<1x4x8xf32> to vector<1x1x8xf32>
    %110 = vector.shape_cast %109 : vector<1x1x8xf32> to vector<1x8xf32>
    %111 = vector.broadcast %108 : f32 to vector<1x8xf32>
    %112 = arith.mulf %111, %110 : vector<1x8xf32>
    %113 = arith.addf %107, %112 : vector<1x8xf32>
    %c1_32 = arith.constant 1 : index
    %c4_33 = arith.constant 4 : index
    %114 = memref.load %arg2[%c1_32, %c4_33] : memref<8x12xf32, #tpu.memory_space<smem>>
    %115 = vector.extract_strided_slice %4 {offsets = [0, 1, 0], sizes = [1, 1, 8], strides = [1, 1, 1]} : vector<1x4x8xf32> to vector<1x1x8xf32>
    %116 = vector.shape_cast %115 : vector<1x1x8xf32> to vector<1x8xf32>
    %117 = vector.broadcast %114 : f32 to vector<1x8xf32>
    %118 = arith.mulf %117, %116 : vector<1x8xf32>
    %119 = arith.addf %113, %118 : vector<1x8xf32>
    %c1_34 = arith.constant 1 : index
    %c5_35 = arith.constant 5 : index
    %120 = memref.load %arg2[%c1_34, %c5_35] : memref<8x12xf32, #tpu.memory_space<smem>>
    %121 = vector.extract_strided_slice %9 {offsets = [0, 1, 0], sizes = [1, 1, 8], strides = [1, 1, 1]} : vector<1x4x8xf32> to vector<1x1x8xf32>
    %122 = vector.shape_cast %121 : vector<1x1x8xf32> to vector<1x8xf32>
    %123 = vector.broadcast %120 : f32 to vector<1x8xf32>
    %124 = arith.mulf %123, %122 : vector<1x8xf32>
    %125 = arith.addf %119, %124 : vector<1x8xf32>
    %c1_36 = arith.constant 1 : index
    %c6_37 = arith.constant 6 : index
    %126 = memref.load %arg2[%c1_36, %c6_37] : memref<8x12xf32, #tpu.memory_space<smem>>
    %127 = vector.extract_strided_slice %7 {offsets = [0, 2, 0], sizes = [1, 1, 8], strides = [1, 1, 1]} : vector<1x4x8xf32> to vector<1x1x8xf32>
    %128 = vector.shape_cast %127 : vector<1x1x8xf32> to vector<1x8xf32>
    %129 = vector.broadcast %126 : f32 to vector<1x8xf32>
    %130 = arith.mulf %129, %128 : vector<1x8xf32>
    %131 = arith.addf %125, %130 : vector<1x8xf32>
    %c1_38 = arith.constant 1 : index
    %c7_39 = arith.constant 7 : index
    %132 = memref.load %arg2[%c1_38, %c7_39] : memref<8x12xf32, #tpu.memory_space<smem>>
    %133 = vector.extract_strided_slice %4 {offsets = [0, 2, 0], sizes = [1, 1, 8], strides = [1, 1, 1]} : vector<1x4x8xf32> to vector<1x1x8xf32>
    %134 = vector.shape_cast %133 : vector<1x1x8xf32> to vector<1x8xf32>
    %135 = vector.broadcast %132 : f32 to vector<1x8xf32>
    %136 = arith.mulf %135, %134 : vector<1x8xf32>
    %137 = arith.addf %131, %136 : vector<1x8xf32>
    %c1_40 = arith.constant 1 : index
    %c8_41 = arith.constant 8 : index
    %138 = memref.load %arg2[%c1_40, %c8_41] : memref<8x12xf32, #tpu.memory_space<smem>>
    %139 = vector.extract_strided_slice %9 {offsets = [0, 2, 0], sizes = [1, 1, 8], strides = [1, 1, 1]} : vector<1x4x8xf32> to vector<1x1x8xf32>
    %140 = vector.shape_cast %139 : vector<1x1x8xf32> to vector<1x8xf32>
    %141 = vector.broadcast %138 : f32 to vector<1x8xf32>
    %142 = arith.mulf %141, %140 : vector<1x8xf32>
    %143 = arith.addf %137, %142 : vector<1x8xf32>
    %c1_42 = arith.constant 1 : index
    %c9_43 = arith.constant 9 : index
    %144 = memref.load %arg2[%c1_42, %c9_43] : memref<8x12xf32, #tpu.memory_space<smem>>
    %145 = vector.extract_strided_slice %7 {offsets = [0, 3, 0], sizes = [1, 1, 8], strides = [1, 1, 1]} : vector<1x4x8xf32> to vector<1x1x8xf32>
    %146 = vector.shape_cast %145 : vector<1x1x8xf32> to vector<1x8xf32>
    %147 = vector.broadcast %144 : f32 to vector<1x8xf32>
    %148 = arith.mulf %147, %146 : vector<1x8xf32>
    %149 = arith.addf %143, %148 : vector<1x8xf32>
    %c1_44 = arith.constant 1 : index
    %c10_45 = arith.constant 10 : index
    %150 = memref.load %arg2[%c1_44, %c10_45] : memref<8x12xf32, #tpu.memory_space<smem>>
    %151 = vector.extract_strided_slice %4 {offsets = [0, 3, 0], sizes = [1, 1, 8], strides = [1, 1, 1]} : vector<1x4x8xf32> to vector<1x1x8xf32>
    %152 = vector.shape_cast %151 : vector<1x1x8xf32> to vector<1x8xf32>
    %153 = vector.broadcast %150 : f32 to vector<1x8xf32>
    %154 = arith.mulf %153, %152 : vector<1x8xf32>
    %155 = arith.addf %149, %154 : vector<1x8xf32>
    %c1_46 = arith.constant 1 : index
    %c11_47 = arith.constant 11 : index
    %156 = memref.load %arg2[%c1_46, %c11_47] : memref<8x12xf32, #tpu.memory_space<smem>>
    %157 = vector.extract_strided_slice %9 {offsets = [0, 3, 0], sizes = [1, 1, 8], strides = [1, 1, 1]} : vector<1x4x8xf32> to vector<1x1x8xf32>
    %158 = vector.shape_cast %157 : vector<1x1x8xf32> to vector<1x8xf32>
    %159 = vector.broadcast %156 : f32 to vector<1x8xf32>
    %160 = arith.mulf %159, %158 : vector<1x8xf32>
    %161 = arith.addf %155, %160 : vector<1x8xf32>
    %c1_48 = arith.constant 1 : index
    %162 = memref.load %arg3[%c1_48] : memref<8xf32, #tpu.memory_space<smem>>
    %163 = vector.broadcast %162 : f32 to vector<1x8xf32>
    %164 = arith.addf %161, %163 : vector<1x8xf32>
    %cst_49 = arith.constant 0.000000e+00 : f32
    %165 = vector.broadcast %cst_49 : f32 to vector<1x8xf32>
    %166 = arith.maximumf %164, %165 : vector<1x8xf32>
    %167 = vector.shape_cast %166 : vector<1x8xf32> to vector<1x1x8xf32>
    %cst_50 = arith.constant 0.000000e+00 : f32
    %168 = vector.broadcast %cst_50 : f32 to vector<1x8xf32>
    %c2_51 = arith.constant 2 : index
    %c0_52 = arith.constant 0 : index
    %169 = memref.load %arg2[%c2_51, %c0_52] : memref<8x12xf32, #tpu.memory_space<smem>>
    %170 = vector.extract_strided_slice %7 {offsets = [0, 0, 0], sizes = [1, 1, 8], strides = [1, 1, 1]} : vector<1x4x8xf32> to vector<1x1x8xf32>
    %171 = vector.shape_cast %170 : vector<1x1x8xf32> to vector<1x8xf32>
    %172 = vector.broadcast %169 : f32 to vector<1x8xf32>
    %173 = arith.mulf %172, %171 : vector<1x8xf32>
    %174 = arith.addf %168, %173 : vector<1x8xf32>
    %c2_53 = arith.constant 2 : index
    %c1_54 = arith.constant 1 : index
    %175 = memref.load %arg2[%c2_53, %c1_54] : memref<8x12xf32, #tpu.memory_space<smem>>
    %176 = vector.extract_strided_slice %4 {offsets = [0, 0, 0], sizes = [1, 1, 8], strides = [1, 1, 1]} : vector<1x4x8xf32> to vector<1x1x8xf32>
    %177 = vector.shape_cast %176 : vector<1x1x8xf32> to vector<1x8xf32>
    %178 = vector.broadcast %175 : f32 to vector<1x8xf32>
    %179 = arith.mulf %178, %177 : vector<1x8xf32>
    %180 = arith.addf %174, %179 : vector<1x8xf32>
    %c2_55 = arith.constant 2 : index
    %c2_56 = arith.constant 2 : index
    %181 = memref.load %arg2[%c2_55, %c2_56] : memref<8x12xf32, #tpu.memory_space<smem>>
    %182 = vector.extract_strided_slice %9 {offsets = [0, 0, 0], sizes = [1, 1, 8], strides = [1, 1, 1]} : vector<1x4x8xf32> to vector<1x1x8xf32>
    %183 = vector.shape_cast %182 : vector<1x1x8xf32> to vector<1x8xf32>
    %184 = vector.broadcast %181 : f32 to vector<1x8xf32>
    %185 = arith.mulf %184, %183 : vector<1x8xf32>
    %186 = arith.addf %180, %185 : vector<1x8xf32>
    %c2_57 = arith.constant 2 : index
    %c3_58 = arith.constant 3 : index
    %187 = memref.load %arg2[%c2_57, %c3_58] : memref<8x12xf32, #tpu.memory_space<smem>>
    %188 = vector.extract_strided_slice %7 {offsets = [0, 1, 0], sizes = [1, 1, 8], strides = [1, 1, 1]} : vector<1x4x8xf32> to vector<1x1x8xf32>
    %189 = vector.shape_cast %188 : vector<1x1x8xf32> to vector<1x8xf32>
    %190 = vector.broadcast %187 : f32 to vector<1x8xf32>
    %191 = arith.mulf %190, %189 : vector<1x8xf32>
    %192 = arith.addf %186, %191 : vector<1x8xf32>
    %c2_59 = arith.constant 2 : index
    %c4_60 = arith.constant 4 : index
    %193 = memref.load %arg2[%c2_59, %c4_60] : memref<8x12xf32, #tpu.memory_space<smem>>
    %194 = vector.extract_strided_slice %4 {offsets = [0, 1, 0], sizes = [1, 1, 8], strides = [1, 1, 1]} : vector<1x4x8xf32> to vector<1x1x8xf32>
    %195 = vector.shape_cast %194 : vector<1x1x8xf32> to vector<1x8xf32>
    %196 = vector.broadcast %193 : f32 to vector<1x8xf32>
    %197 = arith.mulf %196, %195 : vector<1x8xf32>
    %198 = arith.addf %192, %197 : vector<1x8xf32>
    %c2_61 = arith.constant 2 : index
    %c5_62 = arith.constant 5 : index
    %199 = memref.load %arg2[%c2_61, %c5_62] : memref<8x12xf32, #tpu.memory_space<smem>>
    %200 = vector.extract_strided_slice %9 {offsets = [0, 1, 0], sizes = [1, 1, 8], strides = [1, 1, 1]} : vector<1x4x8xf32> to vector<1x1x8xf32>
    %201 = vector.shape_cast %200 : vector<1x1x8xf32> to vector<1x8xf32>
    %202 = vector.broadcast %199 : f32 to vector<1x8xf32>
    %203 = arith.mulf %202, %201 : vector<1x8xf32>
    %204 = arith.addf %198, %203 : vector<1x8xf32>
    %c2_63 = arith.constant 2 : index
    %c6_64 = arith.constant 6 : index
    %205 = memref.load %arg2[%c2_63, %c6_64] : memref<8x12xf32, #tpu.memory_space<smem>>
    %206 = vector.extract_strided_slice %7 {offsets = [0, 2, 0], sizes = [1, 1, 8], strides = [1, 1, 1]} : vector<1x4x8xf32> to vector<1x1x8xf32>
    %207 = vector.shape_cast %206 : vector<1x1x8xf32> to vector<1x8xf32>
    %208 = vector.broadcast %205 : f32 to vector<1x8xf32>
    %209 = arith.mulf %208, %207 : vector<1x8xf32>
    %210 = arith.addf %204, %209 : vector<1x8xf32>
    %c2_65 = arith.constant 2 : index
    %c7_66 = arith.constant 7 : index
    %211 = memref.load %arg2[%c2_65, %c7_66] : memref<8x12xf32, #tpu.memory_space<smem>>
    %212 = vector.extract_strided_slice %4 {offsets = [0, 2, 0], sizes = [1, 1, 8], strides = [1, 1, 1]} : vector<1x4x8xf32> to vector<1x1x8xf32>
    %213 = vector.shape_cast %212 : vector<1x1x8xf32> to vector<1x8xf32>
    %214 = vector.broadcast %211 : f32 to vector<1x8xf32>
    %215 = arith.mulf %214, %213 : vector<1x8xf32>
    %216 = arith.addf %210, %215 : vector<1x8xf32>
    %c2_67 = arith.constant 2 : index
    %c8_68 = arith.constant 8 : index
    %217 = memref.load %arg2[%c2_67, %c8_68] : memref<8x12xf32, #tpu.memory_space<smem>>
    %218 = vector.extract_strided_slice %9 {offsets = [0, 2, 0], sizes = [1, 1, 8], strides = [1, 1, 1]} : vector<1x4x8xf32> to vector<1x1x8xf32>
    %219 = vector.shape_cast %218 : vector<1x1x8xf32> to vector<1x8xf32>
    %220 = vector.broadcast %217 : f32 to vector<1x8xf32>
    %221 = arith.mulf %220, %219 : vector<1x8xf32>
    %222 = arith.addf %216, %221 : vector<1x8xf32>
    %c2_69 = arith.constant 2 : index
    %c9_70 = arith.constant 9 : index
    %223 = memref.load %arg2[%c2_69, %c9_70] : memref<8x12xf32, #tpu.memory_space<smem>>
    %224 = vector.extract_strided_slice %7 {offsets = [0, 3, 0], sizes = [1, 1, 8], strides = [1, 1, 1]} : vector<1x4x8xf32> to vector<1x1x8xf32>
    %225 = vector.shape_cast %224 : vector<1x1x8xf32> to vector<1x8xf32>
    %226 = vector.broadcast %223 : f32 to vector<1x8xf32>
    %227 = arith.mulf %226, %225 : vector<1x8xf32>
    %228 = arith.addf %222, %227 : vector<1x8xf32>
    %c2_71 = arith.constant 2 : index
    %c10_72 = arith.constant 10 : index
    %229 = memref.load %arg2[%c2_71, %c10_72] : memref<8x12xf32, #tpu.memory_space<smem>>
    %230 = vector.extract_strided_slice %4 {offsets = [0, 3, 0], sizes = [1, 1, 8], strides = [1, 1, 1]} : vector<1x4x8xf32> to vector<1x1x8xf32>
    %231 = vector.shape_cast %230 : vector<1x1x8xf32> to vector<1x8xf32>
    %232 = vector.broadcast %229 : f32 to vector<1x8xf32>
    %233 = arith.mulf %232, %231 : vector<1x8xf32>
    %234 = arith.addf %228, %233 : vector<1x8xf32>
    %c2_73 = arith.constant 2 : index
    %c11_74 = arith.constant 11 : index
    %235 = memref.load %arg2[%c2_73, %c11_74] : memref<8x12xf32, #tpu.memory_space<smem>>
    %236 = vector.extract_strided_slice %9 {offsets = [0, 3, 0], sizes = [1, 1, 8], strides = [1, 1, 1]} : vector<1x4x8xf32> to vector<1x1x8xf32>
    %237 = vector.shape_cast %236 : vector<1x1x8xf32> to vector<1x8xf32>
    %238 = vector.broadcast %235 : f32 to vector<1x8xf32>
    %239 = arith.mulf %238, %237 : vector<1x8xf32>
    %240 = arith.addf %234, %239 : vector<1x8xf32>
    %c2_75 = arith.constant 2 : index
    %241 = memref.load %arg3[%c2_75] : memref<8xf32, #tpu.memory_space<smem>>
    %242 = vector.broadcast %241 : f32 to vector<1x8xf32>
    %243 = arith.addf %240, %242 : vector<1x8xf32>
    %cst_76 = arith.constant 0.000000e+00 : f32
    %244 = vector.broadcast %cst_76 : f32 to vector<1x8xf32>
    %245 = arith.maximumf %243, %244 : vector<1x8xf32>
    %246 = vector.shape_cast %245 : vector<1x8xf32> to vector<1x1x8xf32>
    %cst_77 = arith.constant 0.000000e+00 : f32
    %247 = vector.broadcast %cst_77 : f32 to vector<1x8xf32>
    %c3_78 = arith.constant 3 : index
    %c0_79 = arith.constant 0 : index
    %248 = memref.load %arg2[%c3_78, %c0_79] : memref<8x12xf32, #tpu.memory_space<smem>>
    %249 = vector.extract_strided_slice %7 {offsets = [0, 0, 0], sizes = [1, 1, 8], strides = [1, 1, 1]} : vector<1x4x8xf32> to vector<1x1x8xf32>
    %250 = vector.shape_cast %249 : vector<1x1x8xf32> to vector<1x8xf32>
    %251 = vector.broadcast %248 : f32 to vector<1x8xf32>
    %252 = arith.mulf %251, %250 : vector<1x8xf32>
    %253 = arith.addf %247, %252 : vector<1x8xf32>
    %c3_80 = arith.constant 3 : index
    %c1_81 = arith.constant 1 : index
    %254 = memref.load %arg2[%c3_80, %c1_81] : memref<8x12xf32, #tpu.memory_space<smem>>
    %255 = vector.extract_strided_slice %4 {offsets = [0, 0, 0], sizes = [1, 1, 8], strides = [1, 1, 1]} : vector<1x4x8xf32> to vector<1x1x8xf32>
    %256 = vector.shape_cast %255 : vector<1x1x8xf32> to vector<1x8xf32>
    %257 = vector.broadcast %254 : f32 to vector<1x8xf32>
    %258 = arith.mulf %257, %256 : vector<1x8xf32>
    %259 = arith.addf %253, %258 : vector<1x8xf32>
    %c3_82 = arith.constant 3 : index
    %c2_83 = arith.constant 2 : index
    %260 = memref.load %arg2[%c3_82, %c2_83] : memref<8x12xf32, #tpu.memory_space<smem>>
    %261 = vector.extract_strided_slice %9 {offsets = [0, 0, 0], sizes = [1, 1, 8], strides = [1, 1, 1]} : vector<1x4x8xf32> to vector<1x1x8xf32>
    %262 = vector.shape_cast %261 : vector<1x1x8xf32> to vector<1x8xf32>
    %263 = vector.broadcast %260 : f32 to vector<1x8xf32>
    %264 = arith.mulf %263, %262 : vector<1x8xf32>
    %265 = arith.addf %259, %264 : vector<1x8xf32>
    %c3_84 = arith.constant 3 : index
    %c3_85 = arith.constant 3 : index
    %266 = memref.load %arg2[%c3_84, %c3_85] : memref<8x12xf32, #tpu.memory_space<smem>>
    %267 = vector.extract_strided_slice %7 {offsets = [0, 1, 0], sizes = [1, 1, 8], strides = [1, 1, 1]} : vector<1x4x8xf32> to vector<1x1x8xf32>
    %268 = vector.shape_cast %267 : vector<1x1x8xf32> to vector<1x8xf32>
    %269 = vector.broadcast %266 : f32 to vector<1x8xf32>
    %270 = arith.mulf %269, %268 : vector<1x8xf32>
    %271 = arith.addf %265, %270 : vector<1x8xf32>
    %c3_86 = arith.constant 3 : index
    %c4_87 = arith.constant 4 : index
    %272 = memref.load %arg2[%c3_86, %c4_87] : memref<8x12xf32, #tpu.memory_space<smem>>
    %273 = vector.extract_strided_slice %4 {offsets = [0, 1, 0], sizes = [1, 1, 8], strides = [1, 1, 1]} : vector<1x4x8xf32> to vector<1x1x8xf32>
    %274 = vector.shape_cast %273 : vector<1x1x8xf32> to vector<1x8xf32>
    %275 = vector.broadcast %272 : f32 to vector<1x8xf32>
    %276 = arith.mulf %275, %274 : vector<1x8xf32>
    %277 = arith.addf %271, %276 : vector<1x8xf32>
    %c3_88 = arith.constant 3 : index
    %c5_89 = arith.constant 5 : index
    %278 = memref.load %arg2[%c3_88, %c5_89] : memref<8x12xf32, #tpu.memory_space<smem>>
    %279 = vector.extract_strided_slice %9 {offsets = [0, 1, 0], sizes = [1, 1, 8], strides = [1, 1, 1]} : vector<1x4x8xf32> to vector<1x1x8xf32>
    %280 = vector.shape_cast %279 : vector<1x1x8xf32> to vector<1x8xf32>
    %281 = vector.broadcast %278 : f32 to vector<1x8xf32>
    %282 = arith.mulf %281, %280 : vector<1x8xf32>
    %283 = arith.addf %277, %282 : vector<1x8xf32>
    %c3_90 = arith.constant 3 : index
    %c6_91 = arith.constant 6 : index
    %284 = memref.load %arg2[%c3_90, %c6_91] : memref<8x12xf32, #tpu.memory_space<smem>>
    %285 = vector.extract_strided_slice %7 {offsets = [0, 2, 0], sizes = [1, 1, 8], strides = [1, 1, 1]} : vector<1x4x8xf32> to vector<1x1x8xf32>
    %286 = vector.shape_cast %285 : vector<1x1x8xf32> to vector<1x8xf32>
    %287 = vector.broadcast %284 : f32 to vector<1x8xf32>
    %288 = arith.mulf %287, %286 : vector<1x8xf32>
    %289 = arith.addf %283, %288 : vector<1x8xf32>
    %c3_92 = arith.constant 3 : index
    %c7_93 = arith.constant 7 : index
    %290 = memref.load %arg2[%c3_92, %c7_93] : memref<8x12xf32, #tpu.memory_space<smem>>
    %291 = vector.extract_strided_slice %4 {offsets = [0, 2, 0], sizes = [1, 1, 8], strides = [1, 1, 1]} : vector<1x4x8xf32> to vector<1x1x8xf32>
    %292 = vector.shape_cast %291 : vector<1x1x8xf32> to vector<1x8xf32>
    %293 = vector.broadcast %290 : f32 to vector<1x8xf32>
    %294 = arith.mulf %293, %292 : vector<1x8xf32>
    %295 = arith.addf %289, %294 : vector<1x8xf32>
    %c3_94 = arith.constant 3 : index
    %c8_95 = arith.constant 8 : index
    %296 = memref.load %arg2[%c3_94, %c8_95] : memref<8x12xf32, #tpu.memory_space<smem>>
    %297 = vector.extract_strided_slice %9 {offsets = [0, 2, 0], sizes = [1, 1, 8], strides = [1, 1, 1]} : vector<1x4x8xf32> to vector<1x1x8xf32>
    %298 = vector.shape_cast %297 : vector<1x1x8xf32> to vector<1x8xf32>
    %299 = vector.broadcast %296 : f32 to vector<1x8xf32>
    %300 = arith.mulf %299, %298 : vector<1x8xf32>
    %301 = arith.addf %295, %300 : vector<1x8xf32>
    %c3_96 = arith.constant 3 : index
    %c9_97 = arith.constant 9 : index
    %302 = memref.load %arg2[%c3_96, %c9_97] : memref<8x12xf32, #tpu.memory_space<smem>>
    %303 = vector.extract_strided_slice %7 {offsets = [0, 3, 0], sizes = [1, 1, 8], strides = [1, 1, 1]} : vector<1x4x8xf32> to vector<1x1x8xf32>
    %304 = vector.shape_cast %303 : vector<1x1x8xf32> to vector<1x8xf32>
    %305 = vector.broadcast %302 : f32 to vector<1x8xf32>
    %306 = arith.mulf %305, %304 : vector<1x8xf32>
    %307 = arith.addf %301, %306 : vector<1x8xf32>
    %c3_98 = arith.constant 3 : index
    %c10_99 = arith.constant 10 : index
    %308 = memref.load %arg2[%c3_98, %c10_99] : memref<8x12xf32, #tpu.memory_space<smem>>
    %309 = vector.extract_strided_slice %4 {offsets = [0, 3, 0], sizes = [1, 1, 8], strides = [1, 1, 1]} : vector<1x4x8xf32> to vector<1x1x8xf32>
    %310 = vector.shape_cast %309 : vector<1x1x8xf32> to vector<1x8xf32>
    %311 = vector.broadcast %308 : f32 to vector<1x8xf32>
    %312 = arith.mulf %311, %310 : vector<1x8xf32>
    %313 = arith.addf %307, %312 : vector<1x8xf32>
    %c3_100 = arith.constant 3 : index
    %c11_101 = arith.constant 11 : index
    %314 = memref.load %arg2[%c3_100, %c11_101] : memref<8x12xf32, #tpu.memory_space<smem>>
    %315 = vector.extract_strided_slice %9 {offsets = [0, 3, 0], sizes = [1, 1, 8], strides = [1, 1, 1]} : vector<1x4x8xf32> to vector<1x1x8xf32>
    %316 = vector.shape_cast %315 : vector<1x1x8xf32> to vector<1x8xf32>
    %317 = vector.broadcast %314 : f32 to vector<1x8xf32>
    %318 = arith.mulf %317, %316 : vector<1x8xf32>
    %319 = arith.addf %313, %318 : vector<1x8xf32>
    %c3_102 = arith.constant 3 : index
    %320 = memref.load %arg3[%c3_102] : memref<8xf32, #tpu.memory_space<smem>>
    %321 = vector.broadcast %320 : f32 to vector<1x8xf32>
    %322 = arith.addf %319, %321 : vector<1x8xf32>
    %cst_103 = arith.constant 0.000000e+00 : f32
    %323 = vector.broadcast %cst_103 : f32 to vector<1x8xf32>
    %324 = arith.maximumf %322, %323 : vector<1x8xf32>
    %325 = vector.shape_cast %324 : vector<1x8xf32> to vector<1x1x8xf32>
    %cst_104 = arith.constant 0.000000e+00 : f32
    %326 = vector.broadcast %cst_104 : f32 to vector<1x8xf32>
    %c4_105 = arith.constant 4 : index
    %c0_106 = arith.constant 0 : index
    %327 = memref.load %arg2[%c4_105, %c0_106] : memref<8x12xf32, #tpu.memory_space<smem>>
    %328 = vector.extract_strided_slice %7 {offsets = [0, 0, 0], sizes = [1, 1, 8], strides = [1, 1, 1]} : vector<1x4x8xf32> to vector<1x1x8xf32>
    %329 = vector.shape_cast %328 : vector<1x1x8xf32> to vector<1x8xf32>
    %330 = vector.broadcast %327 : f32 to vector<1x8xf32>
    %331 = arith.mulf %330, %329 : vector<1x8xf32>
    %332 = arith.addf %326, %331 : vector<1x8xf32>
    %c4_107 = arith.constant 4 : index
    %c1_108 = arith.constant 1 : index
    %333 = memref.load %arg2[%c4_107, %c1_108] : memref<8x12xf32, #tpu.memory_space<smem>>
    %334 = vector.extract_strided_slice %4 {offsets = [0, 0, 0], sizes = [1, 1, 8], strides = [1, 1, 1]} : vector<1x4x8xf32> to vector<1x1x8xf32>
    %335 = vector.shape_cast %334 : vector<1x1x8xf32> to vector<1x8xf32>
    %336 = vector.broadcast %333 : f32 to vector<1x8xf32>
    %337 = arith.mulf %336, %335 : vector<1x8xf32>
    %338 = arith.addf %332, %337 : vector<1x8xf32>
    %c4_109 = arith.constant 4 : index
    %c2_110 = arith.constant 2 : index
    %339 = memref.load %arg2[%c4_109, %c2_110] : memref<8x12xf32, #tpu.memory_space<smem>>
    %340 = vector.extract_strided_slice %9 {offsets = [0, 0, 0], sizes = [1, 1, 8], strides = [1, 1, 1]} : vector<1x4x8xf32> to vector<1x1x8xf32>
    %341 = vector.shape_cast %340 : vector<1x1x8xf32> to vector<1x8xf32>
    %342 = vector.broadcast %339 : f32 to vector<1x8xf32>
    %343 = arith.mulf %342, %341 : vector<1x8xf32>
    %344 = arith.addf %338, %343 : vector<1x8xf32>
    %c4_111 = arith.constant 4 : index
    %c3_112 = arith.constant 3 : index
    %345 = memref.load %arg2[%c4_111, %c3_112] : memref<8x12xf32, #tpu.memory_space<smem>>
    %346 = vector.extract_strided_slice %7 {offsets = [0, 1, 0], sizes = [1, 1, 8], strides = [1, 1, 1]} : vector<1x4x8xf32> to vector<1x1x8xf32>
    %347 = vector.shape_cast %346 : vector<1x1x8xf32> to vector<1x8xf32>
    %348 = vector.broadcast %345 : f32 to vector<1x8xf32>
    %349 = arith.mulf %348, %347 : vector<1x8xf32>
    %350 = arith.addf %344, %349 : vector<1x8xf32>
    %c4_113 = arith.constant 4 : index
    %c4_114 = arith.constant 4 : index
    %351 = memref.load %arg2[%c4_113, %c4_114] : memref<8x12xf32, #tpu.memory_space<smem>>
    %352 = vector.extract_strided_slice %4 {offsets = [0, 1, 0], sizes = [1, 1, 8], strides = [1, 1, 1]} : vector<1x4x8xf32> to vector<1x1x8xf32>
    %353 = vector.shape_cast %352 : vector<1x1x8xf32> to vector<1x8xf32>
    %354 = vector.broadcast %351 : f32 to vector<1x8xf32>
    %355 = arith.mulf %354, %353 : vector<1x8xf32>
    %356 = arith.addf %350, %355 : vector<1x8xf32>
    %c4_115 = arith.constant 4 : index
    %c5_116 = arith.constant 5 : index
    %357 = memref.load %arg2[%c4_115, %c5_116] : memref<8x12xf32, #tpu.memory_space<smem>>
    %358 = vector.extract_strided_slice %9 {offsets = [0, 1, 0], sizes = [1, 1, 8], strides = [1, 1, 1]} : vector<1x4x8xf32> to vector<1x1x8xf32>
    %359 = vector.shape_cast %358 : vector<1x1x8xf32> to vector<1x8xf32>
    %360 = vector.broadcast %357 : f32 to vector<1x8xf32>
    %361 = arith.mulf %360, %359 : vector<1x8xf32>
    %362 = arith.addf %356, %361 : vector<1x8xf32>
    %c4_117 = arith.constant 4 : index
    %c6_118 = arith.constant 6 : index
    %363 = memref.load %arg2[%c4_117, %c6_118] : memref<8x12xf32, #tpu.memory_space<smem>>
    %364 = vector.extract_strided_slice %7 {offsets = [0, 2, 0], sizes = [1, 1, 8], strides = [1, 1, 1]} : vector<1x4x8xf32> to vector<1x1x8xf32>
    %365 = vector.shape_cast %364 : vector<1x1x8xf32> to vector<1x8xf32>
    %366 = vector.broadcast %363 : f32 to vector<1x8xf32>
    %367 = arith.mulf %366, %365 : vector<1x8xf32>
    %368 = arith.addf %362, %367 : vector<1x8xf32>
    %c4_119 = arith.constant 4 : index
    %c7_120 = arith.constant 7 : index
    %369 = memref.load %arg2[%c4_119, %c7_120] : memref<8x12xf32, #tpu.memory_space<smem>>
    %370 = vector.extract_strided_slice %4 {offsets = [0, 2, 0], sizes = [1, 1, 8], strides = [1, 1, 1]} : vector<1x4x8xf32> to vector<1x1x8xf32>
    %371 = vector.shape_cast %370 : vector<1x1x8xf32> to vector<1x8xf32>
    %372 = vector.broadcast %369 : f32 to vector<1x8xf32>
    %373 = arith.mulf %372, %371 : vector<1x8xf32>
    %374 = arith.addf %368, %373 : vector<1x8xf32>
    %c4_121 = arith.constant 4 : index
    %c8_122 = arith.constant 8 : index
    %375 = memref.load %arg2[%c4_121, %c8_122] : memref<8x12xf32, #tpu.memory_space<smem>>
    %376 = vector.extract_strided_slice %9 {offsets = [0, 2, 0], sizes = [1, 1, 8], strides = [1, 1, 1]} : vector<1x4x8xf32> to vector<1x1x8xf32>
    %377 = vector.shape_cast %376 : vector<1x1x8xf32> to vector<1x8xf32>
    %378 = vector.broadcast %375 : f32 to vector<1x8xf32>
    %379 = arith.mulf %378, %377 : vector<1x8xf32>
    %380 = arith.addf %374, %379 : vector<1x8xf32>
    %c4_123 = arith.constant 4 : index
    %c9_124 = arith.constant 9 : index
    %381 = memref.load %arg2[%c4_123, %c9_124] : memref<8x12xf32, #tpu.memory_space<smem>>
    %382 = vector.extract_strided_slice %7 {offsets = [0, 3, 0], sizes = [1, 1, 8], strides = [1, 1, 1]} : vector<1x4x8xf32> to vector<1x1x8xf32>
    %383 = vector.shape_cast %382 : vector<1x1x8xf32> to vector<1x8xf32>
    %384 = vector.broadcast %381 : f32 to vector<1x8xf32>
    %385 = arith.mulf %384, %383 : vector<1x8xf32>
    %386 = arith.addf %380, %385 : vector<1x8xf32>
    %c4_125 = arith.constant 4 : index
    %c10_126 = arith.constant 10 : index
    %387 = memref.load %arg2[%c4_125, %c10_126] : memref<8x12xf32, #tpu.memory_space<smem>>
    %388 = vector.extract_strided_slice %4 {offsets = [0, 3, 0], sizes = [1, 1, 8], strides = [1, 1, 1]} : vector<1x4x8xf32> to vector<1x1x8xf32>
    %389 = vector.shape_cast %388 : vector<1x1x8xf32> to vector<1x8xf32>
    %390 = vector.broadcast %387 : f32 to vector<1x8xf32>
    %391 = arith.mulf %390, %389 : vector<1x8xf32>
    %392 = arith.addf %386, %391 : vector<1x8xf32>
    %c4_127 = arith.constant 4 : index
    %c11_128 = arith.constant 11 : index
    %393 = memref.load %arg2[%c4_127, %c11_128] : memref<8x12xf32, #tpu.memory_space<smem>>
    %394 = vector.extract_strided_slice %9 {offsets = [0, 3, 0], sizes = [1, 1, 8], strides = [1, 1, 1]} : vector<1x4x8xf32> to vector<1x1x8xf32>
    %395 = vector.shape_cast %394 : vector<1x1x8xf32> to vector<1x8xf32>
    %396 = vector.broadcast %393 : f32 to vector<1x8xf32>
    %397 = arith.mulf %396, %395 : vector<1x8xf32>
    %398 = arith.addf %392, %397 : vector<1x8xf32>
    %c4_129 = arith.constant 4 : index
    %399 = memref.load %arg3[%c4_129] : memref<8xf32, #tpu.memory_space<smem>>
    %400 = vector.broadcast %399 : f32 to vector<1x8xf32>
    %401 = arith.addf %398, %400 : vector<1x8xf32>
    %cst_130 = arith.constant 0.000000e+00 : f32
    %402 = vector.broadcast %cst_130 : f32 to vector<1x8xf32>
    %403 = arith.maximumf %401, %402 : vector<1x8xf32>
    %404 = vector.shape_cast %403 : vector<1x8xf32> to vector<1x1x8xf32>
    %cst_131 = arith.constant 0.000000e+00 : f32
    %405 = vector.broadcast %cst_131 : f32 to vector<1x8xf32>
    %c5_132 = arith.constant 5 : index
    %c0_133 = arith.constant 0 : index
    %406 = memref.load %arg2[%c5_132, %c0_133] : memref<8x12xf32, #tpu.memory_space<smem>>
    %407 = vector.extract_strided_slice %7 {offsets = [0, 0, 0], sizes = [1, 1, 8], strides = [1, 1, 1]} : vector<1x4x8xf32> to vector<1x1x8xf32>
    %408 = vector.shape_cast %407 : vector<1x1x8xf32> to vector<1x8xf32>
    %409 = vector.broadcast %406 : f32 to vector<1x8xf32>
    %410 = arith.mulf %409, %408 : vector<1x8xf32>
    %411 = arith.addf %405, %410 : vector<1x8xf32>
    %c5_134 = arith.constant 5 : index
    %c1_135 = arith.constant 1 : index
    %412 = memref.load %arg2[%c5_134, %c1_135] : memref<8x12xf32, #tpu.memory_space<smem>>
    %413 = vector.extract_strided_slice %4 {offsets = [0, 0, 0], sizes = [1, 1, 8], strides = [1, 1, 1]} : vector<1x4x8xf32> to vector<1x1x8xf32>
    %414 = vector.shape_cast %413 : vector<1x1x8xf32> to vector<1x8xf32>
    %415 = vector.broadcast %412 : f32 to vector<1x8xf32>
    %416 = arith.mulf %415, %414 : vector<1x8xf32>
    %417 = arith.addf %411, %416 : vector<1x8xf32>
    %c5_136 = arith.constant 5 : index
    %c2_137 = arith.constant 2 : index
    %418 = memref.load %arg2[%c5_136, %c2_137] : memref<8x12xf32, #tpu.memory_space<smem>>
    %419 = vector.extract_strided_slice %9 {offsets = [0, 0, 0], sizes = [1, 1, 8], strides = [1, 1, 1]} : vector<1x4x8xf32> to vector<1x1x8xf32>
    %420 = vector.shape_cast %419 : vector<1x1x8xf32> to vector<1x8xf32>
    %421 = vector.broadcast %418 : f32 to vector<1x8xf32>
    %422 = arith.mulf %421, %420 : vector<1x8xf32>
    %423 = arith.addf %417, %422 : vector<1x8xf32>
    %c5_138 = arith.constant 5 : index
    %c3_139 = arith.constant 3 : index
    %424 = memref.load %arg2[%c5_138, %c3_139] : memref<8x12xf32, #tpu.memory_space<smem>>
    %425 = vector.extract_strided_slice %7 {offsets = [0, 1, 0], sizes = [1, 1, 8], strides = [1, 1, 1]} : vector<1x4x8xf32> to vector<1x1x8xf32>
    %426 = vector.shape_cast %425 : vector<1x1x8xf32> to vector<1x8xf32>
    %427 = vector.broadcast %424 : f32 to vector<1x8xf32>
    %428 = arith.mulf %427, %426 : vector<1x8xf32>
    %429 = arith.addf %423, %428 : vector<1x8xf32>
    %c5_140 = arith.constant 5 : index
    %c4_141 = arith.constant 4 : index
    %430 = memref.load %arg2[%c5_140, %c4_141] : memref<8x12xf32, #tpu.memory_space<smem>>
    %431 = vector.extract_strided_slice %4 {offsets = [0, 1, 0], sizes = [1, 1, 8], strides = [1, 1, 1]} : vector<1x4x8xf32> to vector<1x1x8xf32>
    %432 = vector.shape_cast %431 : vector<1x1x8xf32> to vector<1x8xf32>
    %433 = vector.broadcast %430 : f32 to vector<1x8xf32>
    %434 = arith.mulf %433, %432 : vector<1x8xf32>
    %435 = arith.addf %429, %434 : vector<1x8xf32>
    %c5_142 = arith.constant 5 : index
    %c5_143 = arith.constant 5 : index
    %436 = memref.load %arg2[%c5_142, %c5_143] : memref<8x12xf32, #tpu.memory_space<smem>>
    %437 = vector.extract_strided_slice %9 {offsets = [0, 1, 0], sizes = [1, 1, 8], strides = [1, 1, 1]} : vector<1x4x8xf32> to vector<1x1x8xf32>
    %438 = vector.shape_cast %437 : vector<1x1x8xf32> to vector<1x8xf32>
    %439 = vector.broadcast %436 : f32 to vector<1x8xf32>
    %440 = arith.mulf %439, %438 : vector<1x8xf32>
    %441 = arith.addf %435, %440 : vector<1x8xf32>
    %c5_144 = arith.constant 5 : index
    %c6_145 = arith.constant 6 : index
    %442 = memref.load %arg2[%c5_144, %c6_145] : memref<8x12xf32, #tpu.memory_space<smem>>
    %443 = vector.extract_strided_slice %7 {offsets = [0, 2, 0], sizes = [1, 1, 8], strides = [1, 1, 1]} : vector<1x4x8xf32> to vector<1x1x8xf32>
    %444 = vector.shape_cast %443 : vector<1x1x8xf32> to vector<1x8xf32>
    %445 = vector.broadcast %442 : f32 to vector<1x8xf32>
    %446 = arith.mulf %445, %444 : vector<1x8xf32>
    %447 = arith.addf %441, %446 : vector<1x8xf32>
    %c5_146 = arith.constant 5 : index
    %c7_147 = arith.constant 7 : index
    %448 = memref.load %arg2[%c5_146, %c7_147] : memref<8x12xf32, #tpu.memory_space<smem>>
    %449 = vector.extract_strided_slice %4 {offsets = [0, 2, 0], sizes = [1, 1, 8], strides = [1, 1, 1]} : vector<1x4x8xf32> to vector<1x1x8xf32>
    %450 = vector.shape_cast %449 : vector<1x1x8xf32> to vector<1x8xf32>
    %451 = vector.broadcast %448 : f32 to vector<1x8xf32>
    %452 = arith.mulf %451, %450 : vector<1x8xf32>
    %453 = arith.addf %447, %452 : vector<1x8xf32>
    %c5_148 = arith.constant 5 : index
    %c8_149 = arith.constant 8 : index
    %454 = memref.load %arg2[%c5_148, %c8_149] : memref<8x12xf32, #tpu.memory_space<smem>>
    %455 = vector.extract_strided_slice %9 {offsets = [0, 2, 0], sizes = [1, 1, 8], strides = [1, 1, 1]} : vector<1x4x8xf32> to vector<1x1x8xf32>
    %456 = vector.shape_cast %455 : vector<1x1x8xf32> to vector<1x8xf32>
    %457 = vector.broadcast %454 : f32 to vector<1x8xf32>
    %458 = arith.mulf %457, %456 : vector<1x8xf32>
    %459 = arith.addf %453, %458 : vector<1x8xf32>
    %c5_150 = arith.constant 5 : index
    %c9_151 = arith.constant 9 : index
    %460 = memref.load %arg2[%c5_150, %c9_151] : memref<8x12xf32, #tpu.memory_space<smem>>
    %461 = vector.extract_strided_slice %7 {offsets = [0, 3, 0], sizes = [1, 1, 8], strides = [1, 1, 1]} : vector<1x4x8xf32> to vector<1x1x8xf32>
    %462 = vector.shape_cast %461 : vector<1x1x8xf32> to vector<1x8xf32>
    %463 = vector.broadcast %460 : f32 to vector<1x8xf32>
    %464 = arith.mulf %463, %462 : vector<1x8xf32>
    %465 = arith.addf %459, %464 : vector<1x8xf32>
    %c5_152 = arith.constant 5 : index
    %c10_153 = arith.constant 10 : index
    %466 = memref.load %arg2[%c5_152, %c10_153] : memref<8x12xf32, #tpu.memory_space<smem>>
    %467 = vector.extract_strided_slice %4 {offsets = [0, 3, 0], sizes = [1, 1, 8], strides = [1, 1, 1]} : vector<1x4x8xf32> to vector<1x1x8xf32>
    %468 = vector.shape_cast %467 : vector<1x1x8xf32> to vector<1x8xf32>
    %469 = vector.broadcast %466 : f32 to vector<1x8xf32>
    %470 = arith.mulf %469, %468 : vector<1x8xf32>
    %471 = arith.addf %465, %470 : vector<1x8xf32>
    %c5_154 = arith.constant 5 : index
    %c11_155 = arith.constant 11 : index
    %472 = memref.load %arg2[%c5_154, %c11_155] : memref<8x12xf32, #tpu.memory_space<smem>>
    %473 = vector.extract_strided_slice %9 {offsets = [0, 3, 0], sizes = [1, 1, 8], strides = [1, 1, 1]} : vector<1x4x8xf32> to vector<1x1x8xf32>
    %474 = vector.shape_cast %473 : vector<1x1x8xf32> to vector<1x8xf32>
    %475 = vector.broadcast %472 : f32 to vector<1x8xf32>
    %476 = arith.mulf %475, %474 : vector<1x8xf32>
    %477 = arith.addf %471, %476 : vector<1x8xf32>
    %c5_156 = arith.constant 5 : index
    %478 = memref.load %arg3[%c5_156] : memref<8xf32, #tpu.memory_space<smem>>
    %479 = vector.broadcast %478 : f32 to vector<1x8xf32>
    %480 = arith.addf %477, %479 : vector<1x8xf32>
    %cst_157 = arith.constant 0.000000e+00 : f32
    %481 = vector.broadcast %cst_157 : f32 to vector<1x8xf32>
    %482 = arith.maximumf %480, %481 : vector<1x8xf32>
    %483 = vector.shape_cast %482 : vector<1x8xf32> to vector<1x1x8xf32>
    %cst_158 = arith.constant 0.000000e+00 : f32
    %484 = vector.broadcast %cst_158 : f32 to vector<1x8xf32>
    %c6_159 = arith.constant 6 : index
    %c0_160 = arith.constant 0 : index
    %485 = memref.load %arg2[%c6_159, %c0_160] : memref<8x12xf32, #tpu.memory_space<smem>>
    %486 = vector.extract_strided_slice %7 {offsets = [0, 0, 0], sizes = [1, 1, 8], strides = [1, 1, 1]} : vector<1x4x8xf32> to vector<1x1x8xf32>
    %487 = vector.shape_cast %486 : vector<1x1x8xf32> to vector<1x8xf32>
    %488 = vector.broadcast %485 : f32 to vector<1x8xf32>
    %489 = arith.mulf %488, %487 : vector<1x8xf32>
    %490 = arith.addf %484, %489 : vector<1x8xf32>
    %c6_161 = arith.constant 6 : index
    %c1_162 = arith.constant 1 : index
    %491 = memref.load %arg2[%c6_161, %c1_162] : memref<8x12xf32, #tpu.memory_space<smem>>
    %492 = vector.extract_strided_slice %4 {offsets = [0, 0, 0], sizes = [1, 1, 8], strides = [1, 1, 1]} : vector<1x4x8xf32> to vector<1x1x8xf32>
    %493 = vector.shape_cast %492 : vector<1x1x8xf32> to vector<1x8xf32>
    %494 = vector.broadcast %491 : f32 to vector<1x8xf32>
    %495 = arith.mulf %494, %493 : vector<1x8xf32>
    %496 = arith.addf %490, %495 : vector<1x8xf32>
    %c6_163 = arith.constant 6 : index
    %c2_164 = arith.constant 2 : index
    %497 = memref.load %arg2[%c6_163, %c2_164] : memref<8x12xf32, #tpu.memory_space<smem>>
    %498 = vector.extract_strided_slice %9 {offsets = [0, 0, 0], sizes = [1, 1, 8], strides = [1, 1, 1]} : vector<1x4x8xf32> to vector<1x1x8xf32>
    %499 = vector.shape_cast %498 : vector<1x1x8xf32> to vector<1x8xf32>
    %500 = vector.broadcast %497 : f32 to vector<1x8xf32>
    %501 = arith.mulf %500, %499 : vector<1x8xf32>
    %502 = arith.addf %496, %501 : vector<1x8xf32>
    %c6_165 = arith.constant 6 : index
    %c3_166 = arith.constant 3 : index
    %503 = memref.load %arg2[%c6_165, %c3_166] : memref<8x12xf32, #tpu.memory_space<smem>>
    %504 = vector.extract_strided_slice %7 {offsets = [0, 1, 0], sizes = [1, 1, 8], strides = [1, 1, 1]} : vector<1x4x8xf32> to vector<1x1x8xf32>
    %505 = vector.shape_cast %504 : vector<1x1x8xf32> to vector<1x8xf32>
    %506 = vector.broadcast %503 : f32 to vector<1x8xf32>
    %507 = arith.mulf %506, %505 : vector<1x8xf32>
    %508 = arith.addf %502, %507 : vector<1x8xf32>
    %c6_167 = arith.constant 6 : index
    %c4_168 = arith.constant 4 : index
    %509 = memref.load %arg2[%c6_167, %c4_168] : memref<8x12xf32, #tpu.memory_space<smem>>
    %510 = vector.extract_strided_slice %4 {offsets = [0, 1, 0], sizes = [1, 1, 8], strides = [1, 1, 1]} : vector<1x4x8xf32> to vector<1x1x8xf32>
    %511 = vector.shape_cast %510 : vector<1x1x8xf32> to vector<1x8xf32>
    %512 = vector.broadcast %509 : f32 to vector<1x8xf32>
    %513 = arith.mulf %512, %511 : vector<1x8xf32>
    %514 = arith.addf %508, %513 : vector<1x8xf32>
    %c6_169 = arith.constant 6 : index
    %c5_170 = arith.constant 5 : index
    %515 = memref.load %arg2[%c6_169, %c5_170] : memref<8x12xf32, #tpu.memory_space<smem>>
    %516 = vector.extract_strided_slice %9 {offsets = [0, 1, 0], sizes = [1, 1, 8], strides = [1, 1, 1]} : vector<1x4x8xf32> to vector<1x1x8xf32>
    %517 = vector.shape_cast %516 : vector<1x1x8xf32> to vector<1x8xf32>
    %518 = vector.broadcast %515 : f32 to vector<1x8xf32>
    %519 = arith.mulf %518, %517 : vector<1x8xf32>
    %520 = arith.addf %514, %519 : vector<1x8xf32>
    %c6_171 = arith.constant 6 : index
    %c6_172 = arith.constant 6 : index
    %521 = memref.load %arg2[%c6_171, %c6_172] : memref<8x12xf32, #tpu.memory_space<smem>>
    %522 = vector.extract_strided_slice %7 {offsets = [0, 2, 0], sizes = [1, 1, 8], strides = [1, 1, 1]} : vector<1x4x8xf32> to vector<1x1x8xf32>
    %523 = vector.shape_cast %522 : vector<1x1x8xf32> to vector<1x8xf32>
    %524 = vector.broadcast %521 : f32 to vector<1x8xf32>
    %525 = arith.mulf %524, %523 : vector<1x8xf32>
    %526 = arith.addf %520, %525 : vector<1x8xf32>
    %c6_173 = arith.constant 6 : index
    %c7_174 = arith.constant 7 : index
    %527 = memref.load %arg2[%c6_173, %c7_174] : memref<8x12xf32, #tpu.memory_space<smem>>
    %528 = vector.extract_strided_slice %4 {offsets = [0, 2, 0], sizes = [1, 1, 8], strides = [1, 1, 1]} : vector<1x4x8xf32> to vector<1x1x8xf32>
    %529 = vector.shape_cast %528 : vector<1x1x8xf32> to vector<1x8xf32>
    %530 = vector.broadcast %527 : f32 to vector<1x8xf32>
    %531 = arith.mulf %530, %529 : vector<1x8xf32>
    %532 = arith.addf %526, %531 : vector<1x8xf32>
    %c6_175 = arith.constant 6 : index
    %c8_176 = arith.constant 8 : index
    %533 = memref.load %arg2[%c6_175, %c8_176] : memref<8x12xf32, #tpu.memory_space<smem>>
    %534 = vector.extract_strided_slice %9 {offsets = [0, 2, 0], sizes = [1, 1, 8], strides = [1, 1, 1]} : vector<1x4x8xf32> to vector<1x1x8xf32>
    %535 = vector.shape_cast %534 : vector<1x1x8xf32> to vector<1x8xf32>
    %536 = vector.broadcast %533 : f32 to vector<1x8xf32>
    %537 = arith.mulf %536, %535 : vector<1x8xf32>
    %538 = arith.addf %532, %537 : vector<1x8xf32>
    %c6_177 = arith.constant 6 : index
    %c9_178 = arith.constant 9 : index
    %539 = memref.load %arg2[%c6_177, %c9_178] : memref<8x12xf32, #tpu.memory_space<smem>>
    %540 = vector.extract_strided_slice %7 {offsets = [0, 3, 0], sizes = [1, 1, 8], strides = [1, 1, 1]} : vector<1x4x8xf32> to vector<1x1x8xf32>
    %541 = vector.shape_cast %540 : vector<1x1x8xf32> to vector<1x8xf32>
    %542 = vector.broadcast %539 : f32 to vector<1x8xf32>
    %543 = arith.mulf %542, %541 : vector<1x8xf32>
    %544 = arith.addf %538, %543 : vector<1x8xf32>
    %c6_179 = arith.constant 6 : index
    %c10_180 = arith.constant 10 : index
    %545 = memref.load %arg2[%c6_179, %c10_180] : memref<8x12xf32, #tpu.memory_space<smem>>
    %546 = vector.extract_strided_slice %4 {offsets = [0, 3, 0], sizes = [1, 1, 8], strides = [1, 1, 1]} : vector<1x4x8xf32> to vector<1x1x8xf32>
    %547 = vector.shape_cast %546 : vector<1x1x8xf32> to vector<1x8xf32>
    %548 = vector.broadcast %545 : f32 to vector<1x8xf32>
    %549 = arith.mulf %548, %547 : vector<1x8xf32>
    %550 = arith.addf %544, %549 : vector<1x8xf32>
    %c6_181 = arith.constant 6 : index
    %c11_182 = arith.constant 11 : index
    %551 = memref.load %arg2[%c6_181, %c11_182] : memref<8x12xf32, #tpu.memory_space<smem>>
    %552 = vector.extract_strided_slice %9 {offsets = [0, 3, 0], sizes = [1, 1, 8], strides = [1, 1, 1]} : vector<1x4x8xf32> to vector<1x1x8xf32>
    %553 = vector.shape_cast %552 : vector<1x1x8xf32> to vector<1x8xf32>
    %554 = vector.broadcast %551 : f32 to vector<1x8xf32>
    %555 = arith.mulf %554, %553 : vector<1x8xf32>
    %556 = arith.addf %550, %555 : vector<1x8xf32>
    %c6_183 = arith.constant 6 : index
    %557 = memref.load %arg3[%c6_183] : memref<8xf32, #tpu.memory_space<smem>>
    %558 = vector.broadcast %557 : f32 to vector<1x8xf32>
    %559 = arith.addf %556, %558 : vector<1x8xf32>
    %cst_184 = arith.constant 0.000000e+00 : f32
    %560 = vector.broadcast %cst_184 : f32 to vector<1x8xf32>
    %561 = arith.maximumf %559, %560 : vector<1x8xf32>
    %562 = vector.shape_cast %561 : vector<1x8xf32> to vector<1x1x8xf32>
    %cst_185 = arith.constant 0.000000e+00 : f32
    %563 = vector.broadcast %cst_185 : f32 to vector<1x8xf32>
    %c7_186 = arith.constant 7 : index
    %c0_187 = arith.constant 0 : index
    %564 = memref.load %arg2[%c7_186, %c0_187] : memref<8x12xf32, #tpu.memory_space<smem>>
    %565 = vector.extract_strided_slice %7 {offsets = [0, 0, 0], sizes = [1, 1, 8], strides = [1, 1, 1]} : vector<1x4x8xf32> to vector<1x1x8xf32>
    %566 = vector.shape_cast %565 : vector<1x1x8xf32> to vector<1x8xf32>
    %567 = vector.broadcast %564 : f32 to vector<1x8xf32>
    %568 = arith.mulf %567, %566 : vector<1x8xf32>
    %569 = arith.addf %563, %568 : vector<1x8xf32>
    %c7_188 = arith.constant 7 : index
    %c1_189 = arith.constant 1 : index
    %570 = memref.load %arg2[%c7_188, %c1_189] : memref<8x12xf32, #tpu.memory_space<smem>>
    %571 = vector.extract_strided_slice %4 {offsets = [0, 0, 0], sizes = [1, 1, 8], strides = [1, 1, 1]} : vector<1x4x8xf32> to vector<1x1x8xf32>
    %572 = vector.shape_cast %571 : vector<1x1x8xf32> to vector<1x8xf32>
    %573 = vector.broadcast %570 : f32 to vector<1x8xf32>
    %574 = arith.mulf %573, %572 : vector<1x8xf32>
    %575 = arith.addf %569, %574 : vector<1x8xf32>
    %c7_190 = arith.constant 7 : index
    %c2_191 = arith.constant 2 : index
    %576 = memref.load %arg2[%c7_190, %c2_191] : memref<8x12xf32, #tpu.memory_space<smem>>
    %577 = vector.extract_strided_slice %9 {offsets = [0, 0, 0], sizes = [1, 1, 8], strides = [1, 1, 1]} : vector<1x4x8xf32> to vector<1x1x8xf32>
    %578 = vector.shape_cast %577 : vector<1x1x8xf32> to vector<1x8xf32>
    %579 = vector.broadcast %576 : f32 to vector<1x8xf32>
    %580 = arith.mulf %579, %578 : vector<1x8xf32>
    %581 = arith.addf %575, %580 : vector<1x8xf32>
    %c7_192 = arith.constant 7 : index
    %c3_193 = arith.constant 3 : index
    %582 = memref.load %arg2[%c7_192, %c3_193] : memref<8x12xf32, #tpu.memory_space<smem>>
    %583 = vector.extract_strided_slice %7 {offsets = [0, 1, 0], sizes = [1, 1, 8], strides = [1, 1, 1]} : vector<1x4x8xf32> to vector<1x1x8xf32>
    %584 = vector.shape_cast %583 : vector<1x1x8xf32> to vector<1x8xf32>
    %585 = vector.broadcast %582 : f32 to vector<1x8xf32>
    %586 = arith.mulf %585, %584 : vector<1x8xf32>
    %587 = arith.addf %581, %586 : vector<1x8xf32>
    %c7_194 = arith.constant 7 : index
    %c4_195 = arith.constant 4 : index
    %588 = memref.load %arg2[%c7_194, %c4_195] : memref<8x12xf32, #tpu.memory_space<smem>>
    %589 = vector.extract_strided_slice %4 {offsets = [0, 1, 0], sizes = [1, 1, 8], strides = [1, 1, 1]} : vector<1x4x8xf32> to vector<1x1x8xf32>
    %590 = vector.shape_cast %589 : vector<1x1x8xf32> to vector<1x8xf32>
    %591 = vector.broadcast %588 : f32 to vector<1x8xf32>
    %592 = arith.mulf %591, %590 : vector<1x8xf32>
    %593 = arith.addf %587, %592 : vector<1x8xf32>
    %c7_196 = arith.constant 7 : index
    %c5_197 = arith.constant 5 : index
    %594 = memref.load %arg2[%c7_196, %c5_197] : memref<8x12xf32, #tpu.memory_space<smem>>
    %595 = vector.extract_strided_slice %9 {offsets = [0, 1, 0], sizes = [1, 1, 8], strides = [1, 1, 1]} : vector<1x4x8xf32> to vector<1x1x8xf32>
    %596 = vector.shape_cast %595 : vector<1x1x8xf32> to vector<1x8xf32>
    %597 = vector.broadcast %594 : f32 to vector<1x8xf32>
    %598 = arith.mulf %597, %596 : vector<1x8xf32>
    %599 = arith.addf %593, %598 : vector<1x8xf32>
    %c7_198 = arith.constant 7 : index
    %c6_199 = arith.constant 6 : index
    %600 = memref.load %arg2[%c7_198, %c6_199] : memref<8x12xf32, #tpu.memory_space<smem>>
    %601 = vector.extract_strided_slice %7 {offsets = [0, 2, 0], sizes = [1, 1, 8], strides = [1, 1, 1]} : vector<1x4x8xf32> to vector<1x1x8xf32>
    %602 = vector.shape_cast %601 : vector<1x1x8xf32> to vector<1x8xf32>
    %603 = vector.broadcast %600 : f32 to vector<1x8xf32>
    %604 = arith.mulf %603, %602 : vector<1x8xf32>
    %605 = arith.addf %599, %604 : vector<1x8xf32>
    %c7_200 = arith.constant 7 : index
    %c7_201 = arith.constant 7 : index
    %606 = memref.load %arg2[%c7_200, %c7_201] : memref<8x12xf32, #tpu.memory_space<smem>>
    %607 = vector.extract_strided_slice %4 {offsets = [0, 2, 0], sizes = [1, 1, 8], strides = [1, 1, 1]} : vector<1x4x8xf32> to vector<1x1x8xf32>
    %608 = vector.shape_cast %607 : vector<1x1x8xf32> to vector<1x8xf32>
    %609 = vector.broadcast %606 : f32 to vector<1x8xf32>
    %610 = arith.mulf %609, %608 : vector<1x8xf32>
    %611 = arith.addf %605, %610 : vector<1x8xf32>
    %c7_202 = arith.constant 7 : index
    %c8_203 = arith.constant 8 : index
    %612 = memref.load %arg2[%c7_202, %c8_203] : memref<8x12xf32, #tpu.memory_space<smem>>
    %613 = vector.extract_strided_slice %9 {offsets = [0, 2, 0], sizes = [1, 1, 8], strides = [1, 1, 1]} : vector<1x4x8xf32> to vector<1x1x8xf32>
    %614 = vector.shape_cast %613 : vector<1x1x8xf32> to vector<1x8xf32>
    %615 = vector.broadcast %612 : f32 to vector<1x8xf32>
    %616 = arith.mulf %615, %614 : vector<1x8xf32>
    %617 = arith.addf %611, %616 : vector<1x8xf32>
    %c7_204 = arith.constant 7 : index
    %c9_205 = arith.constant 9 : index
    %618 = memref.load %arg2[%c7_204, %c9_205] : memref<8x12xf32, #tpu.memory_space<smem>>
    %619 = vector.extract_strided_slice %7 {offsets = [0, 3, 0], sizes = [1, 1, 8], strides = [1, 1, 1]} : vector<1x4x8xf32> to vector<1x1x8xf32>
    %620 = vector.shape_cast %619 : vector<1x1x8xf32> to vector<1x8xf32>
    %621 = vector.broadcast %618 : f32 to vector<1x8xf32>
    %622 = arith.mulf %621, %620 : vector<1x8xf32>
    %623 = arith.addf %617, %622 : vector<1x8xf32>
    %c7_206 = arith.constant 7 : index
    %c10_207 = arith.constant 10 : index
    %624 = memref.load %arg2[%c7_206, %c10_207] : memref<8x12xf32, #tpu.memory_space<smem>>
    %625 = vector.extract_strided_slice %4 {offsets = [0, 3, 0], sizes = [1, 1, 8], strides = [1, 1, 1]} : vector<1x4x8xf32> to vector<1x1x8xf32>
    %626 = vector.shape_cast %625 : vector<1x1x8xf32> to vector<1x8xf32>
    %627 = vector.broadcast %624 : f32 to vector<1x8xf32>
    %628 = arith.mulf %627, %626 : vector<1x8xf32>
    %629 = arith.addf %623, %628 : vector<1x8xf32>
    %c7_208 = arith.constant 7 : index
    %c11_209 = arith.constant 11 : index
    %630 = memref.load %arg2[%c7_208, %c11_209] : memref<8x12xf32, #tpu.memory_space<smem>>
    %631 = vector.extract_strided_slice %9 {offsets = [0, 3, 0], sizes = [1, 1, 8], strides = [1, 1, 1]} : vector<1x4x8xf32> to vector<1x1x8xf32>
    %632 = vector.shape_cast %631 : vector<1x1x8xf32> to vector<1x8xf32>
    %633 = vector.broadcast %630 : f32 to vector<1x8xf32>
    %634 = arith.mulf %633, %632 : vector<1x8xf32>
    %635 = arith.addf %629, %634 : vector<1x8xf32>
    %c7_210 = arith.constant 7 : index
    %636 = memref.load %arg3[%c7_210] : memref<8xf32, #tpu.memory_space<smem>>
    %637 = vector.broadcast %636 : f32 to vector<1x8xf32>
    %638 = arith.addf %635, %637 : vector<1x8xf32>
    %cst_211 = arith.constant 0.000000e+00 : f32
    %639 = vector.broadcast %cst_211 : f32 to vector<1x8xf32>
    %640 = arith.maximumf %638, %639 : vector<1x8xf32>
    %641 = vector.shape_cast %640 : vector<1x8xf32> to vector<1x1x8xf32>
    %642 = tpu.concatenate %88, %167, %246, %325, %404, %483, %562, %641 in 1 : vector<1x1x8xf32>, vector<1x1x8xf32>, vector<1x1x8xf32>, vector<1x1x8xf32>, vector<1x1x8xf32>, vector<1x1x8xf32>, vector<1x1x8xf32>, vector<1x1x8xf32> -> vector<1x8x8xf32>
    %cst_212 = arith.constant 0.000000e+00 : f32
    %643 = vector.broadcast %cst_212 : f32 to vector<1x8x1xf32>
    %644 = vector.extract_strided_slice %642 {offsets = [0, 0, 0], sizes = [1, 8, 7], strides = [1, 1, 1]} : vector<1x8x8xf32> to vector<1x8x7xf32>
    %645 = tpu.concatenate %643, %644 in 2 : vector<1x8x1xf32>, vector<1x8x7xf32> -> vector<1x8x8xf32>
    %646 = vector.extract_strided_slice %642 {offsets = [0, 0, 1], sizes = [1, 8, 7], strides = [1, 1, 1]} : vector<1x8x8xf32> to vector<1x8x7xf32>
    %647 = tpu.concatenate %646, %643 in 2 : vector<1x8x7xf32>, vector<1x8x1xf32> -> vector<1x8x8xf32>
    %cst_213 = arith.constant 0.000000e+00 : f32
    %648 = vector.broadcast %cst_213 : f32 to vector<1x8xf32>
    %c0_214 = arith.constant 0 : index
    %c0_215 = arith.constant 0 : index
    %649 = memref.load %arg4[%c0_214, %c0_215] : memref<8x24xf32, #tpu.memory_space<smem>>
    %650 = vector.extract_strided_slice %645 {offsets = [0, 0, 0], sizes = [1, 1, 8], strides = [1, 1, 1]} : vector<1x8x8xf32> to vector<1x1x8xf32>
    %651 = vector.shape_cast %650 : vector<1x1x8xf32> to vector<1x8xf32>
    %652 = vector.broadcast %649 : f32 to vector<1x8xf32>
    %653 = arith.mulf %652, %651 : vector<1x8xf32>
    %654 = arith.addf %648, %653 : vector<1x8xf32>
    %c0_216 = arith.constant 0 : index
    %c1_217 = arith.constant 1 : index
    %655 = memref.load %arg4[%c0_216, %c1_217] : memref<8x24xf32, #tpu.memory_space<smem>>
    %656 = vector.extract_strided_slice %642 {offsets = [0, 0, 0], sizes = [1, 1, 8], strides = [1, 1, 1]} : vector<1x8x8xf32> to vector<1x1x8xf32>
    %657 = vector.shape_cast %656 : vector<1x1x8xf32> to vector<1x8xf32>
    %658 = vector.broadcast %655 : f32 to vector<1x8xf32>
    %659 = arith.mulf %658, %657 : vector<1x8xf32>
    %660 = arith.addf %654, %659 : vector<1x8xf32>
    %c0_218 = arith.constant 0 : index
    %c2_219 = arith.constant 2 : index
    %661 = memref.load %arg4[%c0_218, %c2_219] : memref<8x24xf32, #tpu.memory_space<smem>>
    %662 = vector.extract_strided_slice %647 {offsets = [0, 0, 0], sizes = [1, 1, 8], strides = [1, 1, 1]} : vector<1x8x8xf32> to vector<1x1x8xf32>
    %663 = vector.shape_cast %662 : vector<1x1x8xf32> to vector<1x8xf32>
    %664 = vector.broadcast %661 : f32 to vector<1x8xf32>
    %665 = arith.mulf %664, %663 : vector<1x8xf32>
    %666 = arith.addf %660, %665 : vector<1x8xf32>
    %c0_220 = arith.constant 0 : index
    %c3_221 = arith.constant 3 : index
    %667 = memref.load %arg4[%c0_220, %c3_221] : memref<8x24xf32, #tpu.memory_space<smem>>
    %668 = vector.extract_strided_slice %645 {offsets = [0, 1, 0], sizes = [1, 1, 8], strides = [1, 1, 1]} : vector<1x8x8xf32> to vector<1x1x8xf32>
    %669 = vector.shape_cast %668 : vector<1x1x8xf32> to vector<1x8xf32>
    %670 = vector.broadcast %667 : f32 to vector<1x8xf32>
    %671 = arith.mulf %670, %669 : vector<1x8xf32>
    %672 = arith.addf %666, %671 : vector<1x8xf32>
    %c0_222 = arith.constant 0 : index
    %c4_223 = arith.constant 4 : index
    %673 = memref.load %arg4[%c0_222, %c4_223] : memref<8x24xf32, #tpu.memory_space<smem>>
    %674 = vector.extract_strided_slice %642 {offsets = [0, 1, 0], sizes = [1, 1, 8], strides = [1, 1, 1]} : vector<1x8x8xf32> to vector<1x1x8xf32>
    %675 = vector.shape_cast %674 : vector<1x1x8xf32> to vector<1x8xf32>
    %676 = vector.broadcast %673 : f32 to vector<1x8xf32>
    %677 = arith.mulf %676, %675 : vector<1x8xf32>
    %678 = arith.addf %672, %677 : vector<1x8xf32>
    %c0_224 = arith.constant 0 : index
    %c5_225 = arith.constant 5 : index
    %679 = memref.load %arg4[%c0_224, %c5_225] : memref<8x24xf32, #tpu.memory_space<smem>>
    %680 = vector.extract_strided_slice %647 {offsets = [0, 1, 0], sizes = [1, 1, 8], strides = [1, 1, 1]} : vector<1x8x8xf32> to vector<1x1x8xf32>
    %681 = vector.shape_cast %680 : vector<1x1x8xf32> to vector<1x8xf32>
    %682 = vector.broadcast %679 : f32 to vector<1x8xf32>
    %683 = arith.mulf %682, %681 : vector<1x8xf32>
    %684 = arith.addf %678, %683 : vector<1x8xf32>
    %c0_226 = arith.constant 0 : index
    %c6_227 = arith.constant 6 : index
    %685 = memref.load %arg4[%c0_226, %c6_227] : memref<8x24xf32, #tpu.memory_space<smem>>
    %686 = vector.extract_strided_slice %645 {offsets = [0, 2, 0], sizes = [1, 1, 8], strides = [1, 1, 1]} : vector<1x8x8xf32> to vector<1x1x8xf32>
    %687 = vector.shape_cast %686 : vector<1x1x8xf32> to vector<1x8xf32>
    %688 = vector.broadcast %685 : f32 to vector<1x8xf32>
    %689 = arith.mulf %688, %687 : vector<1x8xf32>
    %690 = arith.addf %684, %689 : vector<1x8xf32>
    %c0_228 = arith.constant 0 : index
    %c7_229 = arith.constant 7 : index
    %691 = memref.load %arg4[%c0_228, %c7_229] : memref<8x24xf32, #tpu.memory_space<smem>>
    %692 = vector.extract_strided_slice %642 {offsets = [0, 2, 0], sizes = [1, 1, 8], strides = [1, 1, 1]} : vector<1x8x8xf32> to vector<1x1x8xf32>
    %693 = vector.shape_cast %692 : vector<1x1x8xf32> to vector<1x8xf32>
    %694 = vector.broadcast %691 : f32 to vector<1x8xf32>
    %695 = arith.mulf %694, %693 : vector<1x8xf32>
    %696 = arith.addf %690, %695 : vector<1x8xf32>
    %c0_230 = arith.constant 0 : index
    %c8_231 = arith.constant 8 : index
    %697 = memref.load %arg4[%c0_230, %c8_231] : memref<8x24xf32, #tpu.memory_space<smem>>
    %698 = vector.extract_strided_slice %647 {offsets = [0, 2, 0], sizes = [1, 1, 8], strides = [1, 1, 1]} : vector<1x8x8xf32> to vector<1x1x8xf32>
    %699 = vector.shape_cast %698 : vector<1x1x8xf32> to vector<1x8xf32>
    %700 = vector.broadcast %697 : f32 to vector<1x8xf32>
    %701 = arith.mulf %700, %699 : vector<1x8xf32>
    %702 = arith.addf %696, %701 : vector<1x8xf32>
    %c0_232 = arith.constant 0 : index
    %c9_233 = arith.constant 9 : index
    %703 = memref.load %arg4[%c0_232, %c9_233] : memref<8x24xf32, #tpu.memory_space<smem>>
    %704 = vector.extract_strided_slice %645 {offsets = [0, 3, 0], sizes = [1, 1, 8], strides = [1, 1, 1]} : vector<1x8x8xf32> to vector<1x1x8xf32>
    %705 = vector.shape_cast %704 : vector<1x1x8xf32> to vector<1x8xf32>
    %706 = vector.broadcast %703 : f32 to vector<1x8xf32>
    %707 = arith.mulf %706, %705 : vector<1x8xf32>
    %708 = arith.addf %702, %707 : vector<1x8xf32>
    %c0_234 = arith.constant 0 : index
    %c10_235 = arith.constant 10 : index
    %709 = memref.load %arg4[%c0_234, %c10_235] : memref<8x24xf32, #tpu.memory_space<smem>>
    %710 = vector.extract_strided_slice %642 {offsets = [0, 3, 0], sizes = [1, 1, 8], strides = [1, 1, 1]} : vector<1x8x8xf32> to vector<1x1x8xf32>
    %711 = vector.shape_cast %710 : vector<1x1x8xf32> to vector<1x8xf32>
    %712 = vector.broadcast %709 : f32 to vector<1x8xf32>
    %713 = arith.mulf %712, %711 : vector<1x8xf32>
    %714 = arith.addf %708, %713 : vector<1x8xf32>
    %c0_236 = arith.constant 0 : index
    %c11_237 = arith.constant 11 : index
    %715 = memref.load %arg4[%c0_236, %c11_237] : memref<8x24xf32, #tpu.memory_space<smem>>
    %716 = vector.extract_strided_slice %647 {offsets = [0, 3, 0], sizes = [1, 1, 8], strides = [1, 1, 1]} : vector<1x8x8xf32> to vector<1x1x8xf32>
    %717 = vector.shape_cast %716 : vector<1x1x8xf32> to vector<1x8xf32>
    %718 = vector.broadcast %715 : f32 to vector<1x8xf32>
    %719 = arith.mulf %718, %717 : vector<1x8xf32>
    %720 = arith.addf %714, %719 : vector<1x8xf32>
    %c0_238 = arith.constant 0 : index
    %c12 = arith.constant 12 : index
    %721 = memref.load %arg4[%c0_238, %c12] : memref<8x24xf32, #tpu.memory_space<smem>>
    %722 = vector.extract_strided_slice %645 {offsets = [0, 4, 0], sizes = [1, 1, 8], strides = [1, 1, 1]} : vector<1x8x8xf32> to vector<1x1x8xf32>
    %723 = vector.shape_cast %722 : vector<1x1x8xf32> to vector<1x8xf32>
    %724 = vector.broadcast %721 : f32 to vector<1x8xf32>
    %725 = arith.mulf %724, %723 : vector<1x8xf32>
    %726 = arith.addf %720, %725 : vector<1x8xf32>
    %c0_239 = arith.constant 0 : index
    %c13 = arith.constant 13 : index
    %727 = memref.load %arg4[%c0_239, %c13] : memref<8x24xf32, #tpu.memory_space<smem>>
    %728 = vector.extract_strided_slice %642 {offsets = [0, 4, 0], sizes = [1, 1, 8], strides = [1, 1, 1]} : vector<1x8x8xf32> to vector<1x1x8xf32>
    %729 = vector.shape_cast %728 : vector<1x1x8xf32> to vector<1x8xf32>
    %730 = vector.broadcast %727 : f32 to vector<1x8xf32>
    %731 = arith.mulf %730, %729 : vector<1x8xf32>
    %732 = arith.addf %726, %731 : vector<1x8xf32>
    %c0_240 = arith.constant 0 : index
    %c14 = arith.constant 14 : index
    %733 = memref.load %arg4[%c0_240, %c14] : memref<8x24xf32, #tpu.memory_space<smem>>
    %734 = vector.extract_strided_slice %647 {offsets = [0, 4, 0], sizes = [1, 1, 8], strides = [1, 1, 1]} : vector<1x8x8xf32> to vector<1x1x8xf32>
    %735 = vector.shape_cast %734 : vector<1x1x8xf32> to vector<1x8xf32>
    %736 = vector.broadcast %733 : f32 to vector<1x8xf32>
    %737 = arith.mulf %736, %735 : vector<1x8xf32>
    %738 = arith.addf %732, %737 : vector<1x8xf32>
    %c0_241 = arith.constant 0 : index
    %c15 = arith.constant 15 : index
    %739 = memref.load %arg4[%c0_241, %c15] : memref<8x24xf32, #tpu.memory_space<smem>>
    %740 = vector.extract_strided_slice %645 {offsets = [0, 5, 0], sizes = [1, 1, 8], strides = [1, 1, 1]} : vector<1x8x8xf32> to vector<1x1x8xf32>
    %741 = vector.shape_cast %740 : vector<1x1x8xf32> to vector<1x8xf32>
    %742 = vector.broadcast %739 : f32 to vector<1x8xf32>
    %743 = arith.mulf %742, %741 : vector<1x8xf32>
    %744 = arith.addf %738, %743 : vector<1x8xf32>
    %c0_242 = arith.constant 0 : index
    %c16 = arith.constant 16 : index
    %745 = memref.load %arg4[%c0_242, %c16] : memref<8x24xf32, #tpu.memory_space<smem>>
    %746 = vector.extract_strided_slice %642 {offsets = [0, 5, 0], sizes = [1, 1, 8], strides = [1, 1, 1]} : vector<1x8x8xf32> to vector<1x1x8xf32>
    %747 = vector.shape_cast %746 : vector<1x1x8xf32> to vector<1x8xf32>
    %748 = vector.broadcast %745 : f32 to vector<1x8xf32>
    %749 = arith.mulf %748, %747 : vector<1x8xf32>
    %750 = arith.addf %744, %749 : vector<1x8xf32>
    %c0_243 = arith.constant 0 : index
    %c17 = arith.constant 17 : index
    %751 = memref.load %arg4[%c0_243, %c17] : memref<8x24xf32, #tpu.memory_space<smem>>
    %752 = vector.extract_strided_slice %647 {offsets = [0, 5, 0], sizes = [1, 1, 8], strides = [1, 1, 1]} : vector<1x8x8xf32> to vector<1x1x8xf32>
    %753 = vector.shape_cast %752 : vector<1x1x8xf32> to vector<1x8xf32>
    %754 = vector.broadcast %751 : f32 to vector<1x8xf32>
    %755 = arith.mulf %754, %753 : vector<1x8xf32>
    %756 = arith.addf %750, %755 : vector<1x8xf32>
    %c0_244 = arith.constant 0 : index
    %c18 = arith.constant 18 : index
    %757 = memref.load %arg4[%c0_244, %c18] : memref<8x24xf32, #tpu.memory_space<smem>>
    %758 = vector.extract_strided_slice %645 {offsets = [0, 6, 0], sizes = [1, 1, 8], strides = [1, 1, 1]} : vector<1x8x8xf32> to vector<1x1x8xf32>
    %759 = vector.shape_cast %758 : vector<1x1x8xf32> to vector<1x8xf32>
    %760 = vector.broadcast %757 : f32 to vector<1x8xf32>
    %761 = arith.mulf %760, %759 : vector<1x8xf32>
    %762 = arith.addf %756, %761 : vector<1x8xf32>
    %c0_245 = arith.constant 0 : index
    %c19 = arith.constant 19 : index
    %763 = memref.load %arg4[%c0_245, %c19] : memref<8x24xf32, #tpu.memory_space<smem>>
    %764 = vector.extract_strided_slice %642 {offsets = [0, 6, 0], sizes = [1, 1, 8], strides = [1, 1, 1]} : vector<1x8x8xf32> to vector<1x1x8xf32>
    %765 = vector.shape_cast %764 : vector<1x1x8xf32> to vector<1x8xf32>
    %766 = vector.broadcast %763 : f32 to vector<1x8xf32>
    %767 = arith.mulf %766, %765 : vector<1x8xf32>
    %768 = arith.addf %762, %767 : vector<1x8xf32>
    %c0_246 = arith.constant 0 : index
    %c20 = arith.constant 20 : index
    %769 = memref.load %arg4[%c0_246, %c20] : memref<8x24xf32, #tpu.memory_space<smem>>
    %770 = vector.extract_strided_slice %647 {offsets = [0, 6, 0], sizes = [1, 1, 8], strides = [1, 1, 1]} : vector<1x8x8xf32> to vector<1x1x8xf32>
    %771 = vector.shape_cast %770 : vector<1x1x8xf32> to vector<1x8xf32>
    %772 = vector.broadcast %769 : f32 to vector<1x8xf32>
    %773 = arith.mulf %772, %771 : vector<1x8xf32>
    %774 = arith.addf %768, %773 : vector<1x8xf32>
    %c0_247 = arith.constant 0 : index
    %c21 = arith.constant 21 : index
    %775 = memref.load %arg4[%c0_247, %c21] : memref<8x24xf32, #tpu.memory_space<smem>>
    %776 = vector.extract_strided_slice %645 {offsets = [0, 7, 0], sizes = [1, 1, 8], strides = [1, 1, 1]} : vector<1x8x8xf32> to vector<1x1x8xf32>
    %777 = vector.shape_cast %776 : vector<1x1x8xf32> to vector<1x8xf32>
    %778 = vector.broadcast %775 : f32 to vector<1x8xf32>
    %779 = arith.mulf %778, %777 : vector<1x8xf32>
    %780 = arith.addf %774, %779 : vector<1x8xf32>
    %c0_248 = arith.constant 0 : index
    %c22 = arith.constant 22 : index
    %781 = memref.load %arg4[%c0_248, %c22] : memref<8x24xf32, #tpu.memory_space<smem>>
    %782 = vector.extract_strided_slice %642 {offsets = [0, 7, 0], sizes = [1, 1, 8], strides = [1, 1, 1]} : vector<1x8x8xf32> to vector<1x1x8xf32>
    %783 = vector.shape_cast %782 : vector<1x1x8xf32> to vector<1x8xf32>
    %784 = vector.broadcast %781 : f32 to vector<1x8xf32>
    %785 = arith.mulf %784, %783 : vector<1x8xf32>
    %786 = arith.addf %780, %785 : vector<1x8xf32>
    %c0_249 = arith.constant 0 : index
    %c23 = arith.constant 23 : index
    %787 = memref.load %arg4[%c0_249, %c23] : memref<8x24xf32, #tpu.memory_space<smem>>
    %788 = vector.extract_strided_slice %647 {offsets = [0, 7, 0], sizes = [1, 1, 8], strides = [1, 1, 1]} : vector<1x8x8xf32> to vector<1x1x8xf32>
    %789 = vector.shape_cast %788 : vector<1x1x8xf32> to vector<1x8xf32>
    %790 = vector.broadcast %787 : f32 to vector<1x8xf32>
    %791 = arith.mulf %790, %789 : vector<1x8xf32>
    %792 = arith.addf %786, %791 : vector<1x8xf32>
    %c0_250 = arith.constant 0 : index
    %793 = memref.load %arg5[%c0_250] : memref<8xf32, #tpu.memory_space<smem>>
    %794 = vector.broadcast %793 : f32 to vector<1x8xf32>
    %795 = arith.addf %792, %794 : vector<1x8xf32>
    %cst_251 = arith.constant 0.000000e+00 : f32
    %796 = vector.broadcast %cst_251 : f32 to vector<1x8xf32>
    %797 = arith.maximumf %795, %796 : vector<1x8xf32>
    %798 = vector.shape_cast %797 : vector<1x8xf32> to vector<1x1x8xf32>
    %cst_252 = arith.constant 0.000000e+00 : f32
    %799 = vector.broadcast %cst_252 : f32 to vector<1x8xf32>
    %c1_253 = arith.constant 1 : index
    %c0_254 = arith.constant 0 : index
    %800 = memref.load %arg4[%c1_253, %c0_254] : memref<8x24xf32, #tpu.memory_space<smem>>
    %801 = vector.extract_strided_slice %645 {offsets = [0, 0, 0], sizes = [1, 1, 8], strides = [1, 1, 1]} : vector<1x8x8xf32> to vector<1x1x8xf32>
    %802 = vector.shape_cast %801 : vector<1x1x8xf32> to vector<1x8xf32>
    %803 = vector.broadcast %800 : f32 to vector<1x8xf32>
    %804 = arith.mulf %803, %802 : vector<1x8xf32>
    %805 = arith.addf %799, %804 : vector<1x8xf32>
    %c1_255 = arith.constant 1 : index
    %c1_256 = arith.constant 1 : index
    %806 = memref.load %arg4[%c1_255, %c1_256] : memref<8x24xf32, #tpu.memory_space<smem>>
    %807 = vector.extract_strided_slice %642 {offsets = [0, 0, 0], sizes = [1, 1, 8], strides = [1, 1, 1]} : vector<1x8x8xf32> to vector<1x1x8xf32>
    %808 = vector.shape_cast %807 : vector<1x1x8xf32> to vector<1x8xf32>
    %809 = vector.broadcast %806 : f32 to vector<1x8xf32>
    %810 = arith.mulf %809, %808 : vector<1x8xf32>
    %811 = arith.addf %805, %810 : vector<1x8xf32>
    %c1_257 = arith.constant 1 : index
    %c2_258 = arith.constant 2 : index
    %812 = memref.load %arg4[%c1_257, %c2_258] : memref<8x24xf32, #tpu.memory_space<smem>>
    %813 = vector.extract_strided_slice %647 {offsets = [0, 0, 0], sizes = [1, 1, 8], strides = [1, 1, 1]} : vector<1x8x8xf32> to vector<1x1x8xf32>
    %814 = vector.shape_cast %813 : vector<1x1x8xf32> to vector<1x8xf32>
    %815 = vector.broadcast %812 : f32 to vector<1x8xf32>
    %816 = arith.mulf %815, %814 : vector<1x8xf32>
    %817 = arith.addf %811, %816 : vector<1x8xf32>
    %c1_259 = arith.constant 1 : index
    %c3_260 = arith.constant 3 : index
    %818 = memref.load %arg4[%c1_259, %c3_260] : memref<8x24xf32, #tpu.memory_space<smem>>
    %819 = vector.extract_strided_slice %645 {offsets = [0, 1, 0], sizes = [1, 1, 8], strides = [1, 1, 1]} : vector<1x8x8xf32> to vector<1x1x8xf32>
    %820 = vector.shape_cast %819 : vector<1x1x8xf32> to vector<1x8xf32>
    %821 = vector.broadcast %818 : f32 to vector<1x8xf32>
    %822 = arith.mulf %821, %820 : vector<1x8xf32>
    %823 = arith.addf %817, %822 : vector<1x8xf32>
    %c1_261 = arith.constant 1 : index
    %c4_262 = arith.constant 4 : index
    %824 = memref.load %arg4[%c1_261, %c4_262] : memref<8x24xf32, #tpu.memory_space<smem>>
    %825 = vector.extract_strided_slice %642 {offsets = [0, 1, 0], sizes = [1, 1, 8], strides = [1, 1, 1]} : vector<1x8x8xf32> to vector<1x1x8xf32>
    %826 = vector.shape_cast %825 : vector<1x1x8xf32> to vector<1x8xf32>
    %827 = vector.broadcast %824 : f32 to vector<1x8xf32>
    %828 = arith.mulf %827, %826 : vector<1x8xf32>
    %829 = arith.addf %823, %828 : vector<1x8xf32>
    %c1_263 = arith.constant 1 : index
    %c5_264 = arith.constant 5 : index
    %830 = memref.load %arg4[%c1_263, %c5_264] : memref<8x24xf32, #tpu.memory_space<smem>>
    %831 = vector.extract_strided_slice %647 {offsets = [0, 1, 0], sizes = [1, 1, 8], strides = [1, 1, 1]} : vector<1x8x8xf32> to vector<1x1x8xf32>
    %832 = vector.shape_cast %831 : vector<1x1x8xf32> to vector<1x8xf32>
    %833 = vector.broadcast %830 : f32 to vector<1x8xf32>
    %834 = arith.mulf %833, %832 : vector<1x8xf32>
    %835 = arith.addf %829, %834 : vector<1x8xf32>
    %c1_265 = arith.constant 1 : index
    %c6_266 = arith.constant 6 : index
    %836 = memref.load %arg4[%c1_265, %c6_266] : memref<8x24xf32, #tpu.memory_space<smem>>
    %837 = vector.extract_strided_slice %645 {offsets = [0, 2, 0], sizes = [1, 1, 8], strides = [1, 1, 1]} : vector<1x8x8xf32> to vector<1x1x8xf32>
    %838 = vector.shape_cast %837 : vector<1x1x8xf32> to vector<1x8xf32>
    %839 = vector.broadcast %836 : f32 to vector<1x8xf32>
    %840 = arith.mulf %839, %838 : vector<1x8xf32>
    %841 = arith.addf %835, %840 : vector<1x8xf32>
    %c1_267 = arith.constant 1 : index
    %c7_268 = arith.constant 7 : index
    %842 = memref.load %arg4[%c1_267, %c7_268] : memref<8x24xf32, #tpu.memory_space<smem>>
    %843 = vector.extract_strided_slice %642 {offsets = [0, 2, 0], sizes = [1, 1, 8], strides = [1, 1, 1]} : vector<1x8x8xf32> to vector<1x1x8xf32>
    %844 = vector.shape_cast %843 : vector<1x1x8xf32> to vector<1x8xf32>
    %845 = vector.broadcast %842 : f32 to vector<1x8xf32>
    %846 = arith.mulf %845, %844 : vector<1x8xf32>
    %847 = arith.addf %841, %846 : vector<1x8xf32>
    %c1_269 = arith.constant 1 : index
    %c8_270 = arith.constant 8 : index
    %848 = memref.load %arg4[%c1_269, %c8_270] : memref<8x24xf32, #tpu.memory_space<smem>>
    %849 = vector.extract_strided_slice %647 {offsets = [0, 2, 0], sizes = [1, 1, 8], strides = [1, 1, 1]} : vector<1x8x8xf32> to vector<1x1x8xf32>
    %850 = vector.shape_cast %849 : vector<1x1x8xf32> to vector<1x8xf32>
    %851 = vector.broadcast %848 : f32 to vector<1x8xf32>
    %852 = arith.mulf %851, %850 : vector<1x8xf32>
    %853 = arith.addf %847, %852 : vector<1x8xf32>
    %c1_271 = arith.constant 1 : index
    %c9_272 = arith.constant 9 : index
    %854 = memref.load %arg4[%c1_271, %c9_272] : memref<8x24xf32, #tpu.memory_space<smem>>
    %855 = vector.extract_strided_slice %645 {offsets = [0, 3, 0], sizes = [1, 1, 8], strides = [1, 1, 1]} : vector<1x8x8xf32> to vector<1x1x8xf32>
    %856 = vector.shape_cast %855 : vector<1x1x8xf32> to vector<1x8xf32>
    %857 = vector.broadcast %854 : f32 to vector<1x8xf32>
    %858 = arith.mulf %857, %856 : vector<1x8xf32>
    %859 = arith.addf %853, %858 : vector<1x8xf32>
    %c1_273 = arith.constant 1 : index
    %c10_274 = arith.constant 10 : index
    %860 = memref.load %arg4[%c1_273, %c10_274] : memref<8x24xf32, #tpu.memory_space<smem>>
    %861 = vector.extract_strided_slice %642 {offsets = [0, 3, 0], sizes = [1, 1, 8], strides = [1, 1, 1]} : vector<1x8x8xf32> to vector<1x1x8xf32>
    %862 = vector.shape_cast %861 : vector<1x1x8xf32> to vector<1x8xf32>
    %863 = vector.broadcast %860 : f32 to vector<1x8xf32>
    %864 = arith.mulf %863, %862 : vector<1x8xf32>
    %865 = arith.addf %859, %864 : vector<1x8xf32>
    %c1_275 = arith.constant 1 : index
    %c11_276 = arith.constant 11 : index
    %866 = memref.load %arg4[%c1_275, %c11_276] : memref<8x24xf32, #tpu.memory_space<smem>>
    %867 = vector.extract_strided_slice %647 {offsets = [0, 3, 0], sizes = [1, 1, 8], strides = [1, 1, 1]} : vector<1x8x8xf32> to vector<1x1x8xf32>
    %868 = vector.shape_cast %867 : vector<1x1x8xf32> to vector<1x8xf32>
    %869 = vector.broadcast %866 : f32 to vector<1x8xf32>
    %870 = arith.mulf %869, %868 : vector<1x8xf32>
    %871 = arith.addf %865, %870 : vector<1x8xf32>
    %c1_277 = arith.constant 1 : index
    %c12_278 = arith.constant 12 : index
    %872 = memref.load %arg4[%c1_277, %c12_278] : memref<8x24xf32, #tpu.memory_space<smem>>
    %873 = vector.extract_strided_slice %645 {offsets = [0, 4, 0], sizes = [1, 1, 8], strides = [1, 1, 1]} : vector<1x8x8xf32> to vector<1x1x8xf32>
    %874 = vector.shape_cast %873 : vector<1x1x8xf32> to vector<1x8xf32>
    %875 = vector.broadcast %872 : f32 to vector<1x8xf32>
    %876 = arith.mulf %875, %874 : vector<1x8xf32>
    %877 = arith.addf %871, %876 : vector<1x8xf32>
    %c1_279 = arith.constant 1 : index
    %c13_280 = arith.constant 13 : index
    %878 = memref.load %arg4[%c1_279, %c13_280] : memref<8x24xf32, #tpu.memory_space<smem>>
    %879 = vector.extract_strided_slice %642 {offsets = [0, 4, 0], sizes = [1, 1, 8], strides = [1, 1, 1]} : vector<1x8x8xf32> to vector<1x1x8xf32>
    %880 = vector.shape_cast %879 : vector<1x1x8xf32> to vector<1x8xf32>
    %881 = vector.broadcast %878 : f32 to vector<1x8xf32>
    %882 = arith.mulf %881, %880 : vector<1x8xf32>
    %883 = arith.addf %877, %882 : vector<1x8xf32>
    %c1_281 = arith.constant 1 : index
    %c14_282 = arith.constant 14 : index
    %884 = memref.load %arg4[%c1_281, %c14_282] : memref<8x24xf32, #tpu.memory_space<smem>>
    %885 = vector.extract_strided_slice %647 {offsets = [0, 4, 0], sizes = [1, 1, 8], strides = [1, 1, 1]} : vector<1x8x8xf32> to vector<1x1x8xf32>
    %886 = vector.shape_cast %885 : vector<1x1x8xf32> to vector<1x8xf32>
    %887 = vector.broadcast %884 : f32 to vector<1x8xf32>
    %888 = arith.mulf %887, %886 : vector<1x8xf32>
    %889 = arith.addf %883, %888 : vector<1x8xf32>
    %c1_283 = arith.constant 1 : index
    %c15_284 = arith.constant 15 : index
    %890 = memref.load %arg4[%c1_283, %c15_284] : memref<8x24xf32, #tpu.memory_space<smem>>
    %891 = vector.extract_strided_slice %645 {offsets = [0, 5, 0], sizes = [1, 1, 8], strides = [1, 1, 1]} : vector<1x8x8xf32> to vector<1x1x8xf32>
    %892 = vector.shape_cast %891 : vector<1x1x8xf32> to vector<1x8xf32>
    %893 = vector.broadcast %890 : f32 to vector<1x8xf32>
    %894 = arith.mulf %893, %892 : vector<1x8xf32>
    %895 = arith.addf %889, %894 : vector<1x8xf32>
    %c1_285 = arith.constant 1 : index
    %c16_286 = arith.constant 16 : index
    %896 = memref.load %arg4[%c1_285, %c16_286] : memref<8x24xf32, #tpu.memory_space<smem>>
    %897 = vector.extract_strided_slice %642 {offsets = [0, 5, 0], sizes = [1, 1, 8], strides = [1, 1, 1]} : vector<1x8x8xf32> to vector<1x1x8xf32>
    %898 = vector.shape_cast %897 : vector<1x1x8xf32> to vector<1x8xf32>
    %899 = vector.broadcast %896 : f32 to vector<1x8xf32>
    %900 = arith.mulf %899, %898 : vector<1x8xf32>
    %901 = arith.addf %895, %900 : vector<1x8xf32>
    %c1_287 = arith.constant 1 : index
    %c17_288 = arith.constant 17 : index
    %902 = memref.load %arg4[%c1_287, %c17_288] : memref<8x24xf32, #tpu.memory_space<smem>>
    %903 = vector.extract_strided_slice %647 {offsets = [0, 5, 0], sizes = [1, 1, 8], strides = [1, 1, 1]} : vector<1x8x8xf32> to vector<1x1x8xf32>
    %904 = vector.shape_cast %903 : vector<1x1x8xf32> to vector<1x8xf32>
    %905 = vector.broadcast %902 : f32 to vector<1x8xf32>
    %906 = arith.mulf %905, %904 : vector<1x8xf32>
    %907 = arith.addf %901, %906 : vector<1x8xf32>
    %c1_289 = arith.constant 1 : index
    %c18_290 = arith.constant 18 : index
    %908 = memref.load %arg4[%c1_289, %c18_290] : memref<8x24xf32, #tpu.memory_space<smem>>
    %909 = vector.extract_strided_slice %645 {offsets = [0, 6, 0], sizes = [1, 1, 8], strides = [1, 1, 1]} : vector<1x8x8xf32> to vector<1x1x8xf32>
    %910 = vector.shape_cast %909 : vector<1x1x8xf32> to vector<1x8xf32>
    %911 = vector.broadcast %908 : f32 to vector<1x8xf32>
    %912 = arith.mulf %911, %910 : vector<1x8xf32>
    %913 = arith.addf %907, %912 : vector<1x8xf32>
    %c1_291 = arith.constant 1 : index
    %c19_292 = arith.constant 19 : index
    %914 = memref.load %arg4[%c1_291, %c19_292] : memref<8x24xf32, #tpu.memory_space<smem>>
    %915 = vector.extract_strided_slice %642 {offsets = [0, 6, 0], sizes = [1, 1, 8], strides = [1, 1, 1]} : vector<1x8x8xf32> to vector<1x1x8xf32>
    %916 = vector.shape_cast %915 : vector<1x1x8xf32> to vector<1x8xf32>
    %917 = vector.broadcast %914 : f32 to vector<1x8xf32>
    %918 = arith.mulf %917, %916 : vector<1x8xf32>
    %919 = arith.addf %913, %918 : vector<1x8xf32>
    %c1_293 = arith.constant 1 : index
    %c20_294 = arith.constant 20 : index
    %920 = memref.load %arg4[%c1_293, %c20_294] : memref<8x24xf32, #tpu.memory_space<smem>>
    %921 = vector.extract_strided_slice %647 {offsets = [0, 6, 0], sizes = [1, 1, 8], strides = [1, 1, 1]} : vector<1x8x8xf32> to vector<1x1x8xf32>
    %922 = vector.shape_cast %921 : vector<1x1x8xf32> to vector<1x8xf32>
    %923 = vector.broadcast %920 : f32 to vector<1x8xf32>
    %924 = arith.mulf %923, %922 : vector<1x8xf32>
    %925 = arith.addf %919, %924 : vector<1x8xf32>
    %c1_295 = arith.constant 1 : index
    %c21_296 = arith.constant 21 : index
    %926 = memref.load %arg4[%c1_295, %c21_296] : memref<8x24xf32, #tpu.memory_space<smem>>
    %927 = vector.extract_strided_slice %645 {offsets = [0, 7, 0], sizes = [1, 1, 8], strides = [1, 1, 1]} : vector<1x8x8xf32> to vector<1x1x8xf32>
    %928 = vector.shape_cast %927 : vector<1x1x8xf32> to vector<1x8xf32>
    %929 = vector.broadcast %926 : f32 to vector<1x8xf32>
    %930 = arith.mulf %929, %928 : vector<1x8xf32>
    %931 = arith.addf %925, %930 : vector<1x8xf32>
    %c1_297 = arith.constant 1 : index
    %c22_298 = arith.constant 22 : index
    %932 = memref.load %arg4[%c1_297, %c22_298] : memref<8x24xf32, #tpu.memory_space<smem>>
    %933 = vector.extract_strided_slice %642 {offsets = [0, 7, 0], sizes = [1, 1, 8], strides = [1, 1, 1]} : vector<1x8x8xf32> to vector<1x1x8xf32>
    %934 = vector.shape_cast %933 : vector<1x1x8xf32> to vector<1x8xf32>
    %935 = vector.broadcast %932 : f32 to vector<1x8xf32>
    %936 = arith.mulf %935, %934 : vector<1x8xf32>
    %937 = arith.addf %931, %936 : vector<1x8xf32>
    %c1_299 = arith.constant 1 : index
    %c23_300 = arith.constant 23 : index
    %938 = memref.load %arg4[%c1_299, %c23_300] : memref<8x24xf32, #tpu.memory_space<smem>>
    %939 = vector.extract_strided_slice %647 {offsets = [0, 7, 0], sizes = [1, 1, 8], strides = [1, 1, 1]} : vector<1x8x8xf32> to vector<1x1x8xf32>
    %940 = vector.shape_cast %939 : vector<1x1x8xf32> to vector<1x8xf32>
    %941 = vector.broadcast %938 : f32 to vector<1x8xf32>
    %942 = arith.mulf %941, %940 : vector<1x8xf32>
    %943 = arith.addf %937, %942 : vector<1x8xf32>
    %c1_301 = arith.constant 1 : index
    %944 = memref.load %arg5[%c1_301] : memref<8xf32, #tpu.memory_space<smem>>
    %945 = vector.broadcast %944 : f32 to vector<1x8xf32>
    %946 = arith.addf %943, %945 : vector<1x8xf32>
    %cst_302 = arith.constant 0.000000e+00 : f32
    %947 = vector.broadcast %cst_302 : f32 to vector<1x8xf32>
    %948 = arith.maximumf %946, %947 : vector<1x8xf32>
    %949 = vector.shape_cast %948 : vector<1x8xf32> to vector<1x1x8xf32>
    %cst_303 = arith.constant 0.000000e+00 : f32
    %950 = vector.broadcast %cst_303 : f32 to vector<1x8xf32>
    %c2_304 = arith.constant 2 : index
    %c0_305 = arith.constant 0 : index
    %951 = memref.load %arg4[%c2_304, %c0_305] : memref<8x24xf32, #tpu.memory_space<smem>>
    %952 = vector.extract_strided_slice %645 {offsets = [0, 0, 0], sizes = [1, 1, 8], strides = [1, 1, 1]} : vector<1x8x8xf32> to vector<1x1x8xf32>
    %953 = vector.shape_cast %952 : vector<1x1x8xf32> to vector<1x8xf32>
    %954 = vector.broadcast %951 : f32 to vector<1x8xf32>
    %955 = arith.mulf %954, %953 : vector<1x8xf32>
    %956 = arith.addf %950, %955 : vector<1x8xf32>
    %c2_306 = arith.constant 2 : index
    %c1_307 = arith.constant 1 : index
    %957 = memref.load %arg4[%c2_306, %c1_307] : memref<8x24xf32, #tpu.memory_space<smem>>
    %958 = vector.extract_strided_slice %642 {offsets = [0, 0, 0], sizes = [1, 1, 8], strides = [1, 1, 1]} : vector<1x8x8xf32> to vector<1x1x8xf32>
    %959 = vector.shape_cast %958 : vector<1x1x8xf32> to vector<1x8xf32>
    %960 = vector.broadcast %957 : f32 to vector<1x8xf32>
    %961 = arith.mulf %960, %959 : vector<1x8xf32>
    %962 = arith.addf %956, %961 : vector<1x8xf32>
    %c2_308 = arith.constant 2 : index
    %c2_309 = arith.constant 2 : index
    %963 = memref.load %arg4[%c2_308, %c2_309] : memref<8x24xf32, #tpu.memory_space<smem>>
    %964 = vector.extract_strided_slice %647 {offsets = [0, 0, 0], sizes = [1, 1, 8], strides = [1, 1, 1]} : vector<1x8x8xf32> to vector<1x1x8xf32>
    %965 = vector.shape_cast %964 : vector<1x1x8xf32> to vector<1x8xf32>
    %966 = vector.broadcast %963 : f32 to vector<1x8xf32>
    %967 = arith.mulf %966, %965 : vector<1x8xf32>
    %968 = arith.addf %962, %967 : vector<1x8xf32>
    %c2_310 = arith.constant 2 : index
    %c3_311 = arith.constant 3 : index
    %969 = memref.load %arg4[%c2_310, %c3_311] : memref<8x24xf32, #tpu.memory_space<smem>>
    %970 = vector.extract_strided_slice %645 {offsets = [0, 1, 0], sizes = [1, 1, 8], strides = [1, 1, 1]} : vector<1x8x8xf32> to vector<1x1x8xf32>
    %971 = vector.shape_cast %970 : vector<1x1x8xf32> to vector<1x8xf32>
    %972 = vector.broadcast %969 : f32 to vector<1x8xf32>
    %973 = arith.mulf %972, %971 : vector<1x8xf32>
    %974 = arith.addf %968, %973 : vector<1x8xf32>
    %c2_312 = arith.constant 2 : index
    %c4_313 = arith.constant 4 : index
    %975 = memref.load %arg4[%c2_312, %c4_313] : memref<8x24xf32, #tpu.memory_space<smem>>
    %976 = vector.extract_strided_slice %642 {offsets = [0, 1, 0], sizes = [1, 1, 8], strides = [1, 1, 1]} : vector<1x8x8xf32> to vector<1x1x8xf32>
    %977 = vector.shape_cast %976 : vector<1x1x8xf32> to vector<1x8xf32>
    %978 = vector.broadcast %975 : f32 to vector<1x8xf32>
    %979 = arith.mulf %978, %977 : vector<1x8xf32>
    %980 = arith.addf %974, %979 : vector<1x8xf32>
    %c2_314 = arith.constant 2 : index
    %c5_315 = arith.constant 5 : index
    %981 = memref.load %arg4[%c2_314, %c5_315] : memref<8x24xf32, #tpu.memory_space<smem>>
    %982 = vector.extract_strided_slice %647 {offsets = [0, 1, 0], sizes = [1, 1, 8], strides = [1, 1, 1]} : vector<1x8x8xf32> to vector<1x1x8xf32>
    %983 = vector.shape_cast %982 : vector<1x1x8xf32> to vector<1x8xf32>
    %984 = vector.broadcast %981 : f32 to vector<1x8xf32>
    %985 = arith.mulf %984, %983 : vector<1x8xf32>
    %986 = arith.addf %980, %985 : vector<1x8xf32>
    %c2_316 = arith.constant 2 : index
    %c6_317 = arith.constant 6 : index
    %987 = memref.load %arg4[%c2_316, %c6_317] : memref<8x24xf32, #tpu.memory_space<smem>>
    %988 = vector.extract_strided_slice %645 {offsets = [0, 2, 0], sizes = [1, 1, 8], strides = [1, 1, 1]} : vector<1x8x8xf32> to vector<1x1x8xf32>
    %989 = vector.shape_cast %988 : vector<1x1x8xf32> to vector<1x8xf32>
    %990 = vector.broadcast %987 : f32 to vector<1x8xf32>
    %991 = arith.mulf %990, %989 : vector<1x8xf32>
    %992 = arith.addf %986, %991 : vector<1x8xf32>
    %c2_318 = arith.constant 2 : index
    %c7_319 = arith.constant 7 : index
    %993 = memref.load %arg4[%c2_318, %c7_319] : memref<8x24xf32, #tpu.memory_space<smem>>
    %994 = vector.extract_strided_slice %642 {offsets = [0, 2, 0], sizes = [1, 1, 8], strides = [1, 1, 1]} : vector<1x8x8xf32> to vector<1x1x8xf32>
    %995 = vector.shape_cast %994 : vector<1x1x8xf32> to vector<1x8xf32>
    %996 = vector.broadcast %993 : f32 to vector<1x8xf32>
    %997 = arith.mulf %996, %995 : vector<1x8xf32>
    %998 = arith.addf %992, %997 : vector<1x8xf32>
    %c2_320 = arith.constant 2 : index
    %c8_321 = arith.constant 8 : index
    %999 = memref.load %arg4[%c2_320, %c8_321] : memref<8x24xf32, #tpu.memory_space<smem>>
    %1000 = vector.extract_strided_slice %647 {offsets = [0, 2, 0], sizes = [1, 1, 8], strides = [1, 1, 1]} : vector<1x8x8xf32> to vector<1x1x8xf32>
    %1001 = vector.shape_cast %1000 : vector<1x1x8xf32> to vector<1x8xf32>
    %1002 = vector.broadcast %999 : f32 to vector<1x8xf32>
    %1003 = arith.mulf %1002, %1001 : vector<1x8xf32>
    %1004 = arith.addf %998, %1003 : vector<1x8xf32>
    %c2_322 = arith.constant 2 : index
    %c9_323 = arith.constant 9 : index
    %1005 = memref.load %arg4[%c2_322, %c9_323] : memref<8x24xf32, #tpu.memory_space<smem>>
    %1006 = vector.extract_strided_slice %645 {offsets = [0, 3, 0], sizes = [1, 1, 8], strides = [1, 1, 1]} : vector<1x8x8xf32> to vector<1x1x8xf32>
    %1007 = vector.shape_cast %1006 : vector<1x1x8xf32> to vector<1x8xf32>
    %1008 = vector.broadcast %1005 : f32 to vector<1x8xf32>
    %1009 = arith.mulf %1008, %1007 : vector<1x8xf32>
    %1010 = arith.addf %1004, %1009 : vector<1x8xf32>
    %c2_324 = arith.constant 2 : index
    %c10_325 = arith.constant 10 : index
    %1011 = memref.load %arg4[%c2_324, %c10_325] : memref<8x24xf32, #tpu.memory_space<smem>>
    %1012 = vector.extract_strided_slice %642 {offsets = [0, 3, 0], sizes = [1, 1, 8], strides = [1, 1, 1]} : vector<1x8x8xf32> to vector<1x1x8xf32>
    %1013 = vector.shape_cast %1012 : vector<1x1x8xf32> to vector<1x8xf32>
    %1014 = vector.broadcast %1011 : f32 to vector<1x8xf32>
    %1015 = arith.mulf %1014, %1013 : vector<1x8xf32>
    %1016 = arith.addf %1010, %1015 : vector<1x8xf32>
    %c2_326 = arith.constant 2 : index
    %c11_327 = arith.constant 11 : index
    %1017 = memref.load %arg4[%c2_326, %c11_327] : memref<8x24xf32, #tpu.memory_space<smem>>
    %1018 = vector.extract_strided_slice %647 {offsets = [0, 3, 0], sizes = [1, 1, 8], strides = [1, 1, 1]} : vector<1x8x8xf32> to vector<1x1x8xf32>
    %1019 = vector.shape_cast %1018 : vector<1x1x8xf32> to vector<1x8xf32>
    %1020 = vector.broadcast %1017 : f32 to vector<1x8xf32>
    %1021 = arith.mulf %1020, %1019 : vector<1x8xf32>
    %1022 = arith.addf %1016, %1021 : vector<1x8xf32>
    %c2_328 = arith.constant 2 : index
    %c12_329 = arith.constant 12 : index
    %1023 = memref.load %arg4[%c2_328, %c12_329] : memref<8x24xf32, #tpu.memory_space<smem>>
    %1024 = vector.extract_strided_slice %645 {offsets = [0, 4, 0], sizes = [1, 1, 8], strides = [1, 1, 1]} : vector<1x8x8xf32> to vector<1x1x8xf32>
    %1025 = vector.shape_cast %1024 : vector<1x1x8xf32> to vector<1x8xf32>
    %1026 = vector.broadcast %1023 : f32 to vector<1x8xf32>
    %1027 = arith.mulf %1026, %1025 : vector<1x8xf32>
    %1028 = arith.addf %1022, %1027 : vector<1x8xf32>
    %c2_330 = arith.constant 2 : index
    %c13_331 = arith.constant 13 : index
    %1029 = memref.load %arg4[%c2_330, %c13_331] : memref<8x24xf32, #tpu.memory_space<smem>>
    %1030 = vector.extract_strided_slice %642 {offsets = [0, 4, 0], sizes = [1, 1, 8], strides = [1, 1, 1]} : vector<1x8x8xf32> to vector<1x1x8xf32>
    %1031 = vector.shape_cast %1030 : vector<1x1x8xf32> to vector<1x8xf32>
    %1032 = vector.broadcast %1029 : f32 to vector<1x8xf32>
    %1033 = arith.mulf %1032, %1031 : vector<1x8xf32>
    %1034 = arith.addf %1028, %1033 : vector<1x8xf32>
    %c2_332 = arith.constant 2 : index
    %c14_333 = arith.constant 14 : index
    %1035 = memref.load %arg4[%c2_332, %c14_333] : memref<8x24xf32, #tpu.memory_space<smem>>
    %1036 = vector.extract_strided_slice %647 {offsets = [0, 4, 0], sizes = [1, 1, 8], strides = [1, 1, 1]} : vector<1x8x8xf32> to vector<1x1x8xf32>
    %1037 = vector.shape_cast %1036 : vector<1x1x8xf32> to vector<1x8xf32>
    %1038 = vector.broadcast %1035 : f32 to vector<1x8xf32>
    %1039 = arith.mulf %1038, %1037 : vector<1x8xf32>
    %1040 = arith.addf %1034, %1039 : vector<1x8xf32>
    %c2_334 = arith.constant 2 : index
    %c15_335 = arith.constant 15 : index
    %1041 = memref.load %arg4[%c2_334, %c15_335] : memref<8x24xf32, #tpu.memory_space<smem>>
    %1042 = vector.extract_strided_slice %645 {offsets = [0, 5, 0], sizes = [1, 1, 8], strides = [1, 1, 1]} : vector<1x8x8xf32> to vector<1x1x8xf32>
    %1043 = vector.shape_cast %1042 : vector<1x1x8xf32> to vector<1x8xf32>
    %1044 = vector.broadcast %1041 : f32 to vector<1x8xf32>
    %1045 = arith.mulf %1044, %1043 : vector<1x8xf32>
    %1046 = arith.addf %1040, %1045 : vector<1x8xf32>
    %c2_336 = arith.constant 2 : index
    %c16_337 = arith.constant 16 : index
    %1047 = memref.load %arg4[%c2_336, %c16_337] : memref<8x24xf32, #tpu.memory_space<smem>>
    %1048 = vector.extract_strided_slice %642 {offsets = [0, 5, 0], sizes = [1, 1, 8], strides = [1, 1, 1]} : vector<1x8x8xf32> to vector<1x1x8xf32>
    %1049 = vector.shape_cast %1048 : vector<1x1x8xf32> to vector<1x8xf32>
    %1050 = vector.broadcast %1047 : f32 to vector<1x8xf32>
    %1051 = arith.mulf %1050, %1049 : vector<1x8xf32>
    %1052 = arith.addf %1046, %1051 : vector<1x8xf32>
    %c2_338 = arith.constant 2 : index
    %c17_339 = arith.constant 17 : index
    %1053 = memref.load %arg4[%c2_338, %c17_339] : memref<8x24xf32, #tpu.memory_space<smem>>
    %1054 = vector.extract_strided_slice %647 {offsets = [0, 5, 0], sizes = [1, 1, 8], strides = [1, 1, 1]} : vector<1x8x8xf32> to vector<1x1x8xf32>
    %1055 = vector.shape_cast %1054 : vector<1x1x8xf32> to vector<1x8xf32>
    %1056 = vector.broadcast %1053 : f32 to vector<1x8xf32>
    %1057 = arith.mulf %1056, %1055 : vector<1x8xf32>
    %1058 = arith.addf %1052, %1057 : vector<1x8xf32>
    %c2_340 = arith.constant 2 : index
    %c18_341 = arith.constant 18 : index
    %1059 = memref.load %arg4[%c2_340, %c18_341] : memref<8x24xf32, #tpu.memory_space<smem>>
    %1060 = vector.extract_strided_slice %645 {offsets = [0, 6, 0], sizes = [1, 1, 8], strides = [1, 1, 1]} : vector<1x8x8xf32> to vector<1x1x8xf32>
    %1061 = vector.shape_cast %1060 : vector<1x1x8xf32> to vector<1x8xf32>
    %1062 = vector.broadcast %1059 : f32 to vector<1x8xf32>
    %1063 = arith.mulf %1062, %1061 : vector<1x8xf32>
    %1064 = arith.addf %1058, %1063 : vector<1x8xf32>
    %c2_342 = arith.constant 2 : index
    %c19_343 = arith.constant 19 : index
    %1065 = memref.load %arg4[%c2_342, %c19_343] : memref<8x24xf32, #tpu.memory_space<smem>>
    %1066 = vector.extract_strided_slice %642 {offsets = [0, 6, 0], sizes = [1, 1, 8], strides = [1, 1, 1]} : vector<1x8x8xf32> to vector<1x1x8xf32>
    %1067 = vector.shape_cast %1066 : vector<1x1x8xf32> to vector<1x8xf32>
    %1068 = vector.broadcast %1065 : f32 to vector<1x8xf32>
    %1069 = arith.mulf %1068, %1067 : vector<1x8xf32>
    %1070 = arith.addf %1064, %1069 : vector<1x8xf32>
    %c2_344 = arith.constant 2 : index
    %c20_345 = arith.constant 20 : index
    %1071 = memref.load %arg4[%c2_344, %c20_345] : memref<8x24xf32, #tpu.memory_space<smem>>
    %1072 = vector.extract_strided_slice %647 {offsets = [0, 6, 0], sizes = [1, 1, 8], strides = [1, 1, 1]} : vector<1x8x8xf32> to vector<1x1x8xf32>
    %1073 = vector.shape_cast %1072 : vector<1x1x8xf32> to vector<1x8xf32>
    %1074 = vector.broadcast %1071 : f32 to vector<1x8xf32>
    %1075 = arith.mulf %1074, %1073 : vector<1x8xf32>
    %1076 = arith.addf %1070, %1075 : vector<1x8xf32>
    %c2_346 = arith.constant 2 : index
    %c21_347 = arith.constant 21 : index
    %1077 = memref.load %arg4[%c2_346, %c21_347] : memref<8x24xf32, #tpu.memory_space<smem>>
    %1078 = vector.extract_strided_slice %645 {offsets = [0, 7, 0], sizes = [1, 1, 8], strides = [1, 1, 1]} : vector<1x8x8xf32> to vector<1x1x8xf32>
    %1079 = vector.shape_cast %1078 : vector<1x1x8xf32> to vector<1x8xf32>
    %1080 = vector.broadcast %1077 : f32 to vector<1x8xf32>
    %1081 = arith.mulf %1080, %1079 : vector<1x8xf32>
    %1082 = arith.addf %1076, %1081 : vector<1x8xf32>
    %c2_348 = arith.constant 2 : index
    %c22_349 = arith.constant 22 : index
    %1083 = memref.load %arg4[%c2_348, %c22_349] : memref<8x24xf32, #tpu.memory_space<smem>>
    %1084 = vector.extract_strided_slice %642 {offsets = [0, 7, 0], sizes = [1, 1, 8], strides = [1, 1, 1]} : vector<1x8x8xf32> to vector<1x1x8xf32>
    %1085 = vector.shape_cast %1084 : vector<1x1x8xf32> to vector<1x8xf32>
    %1086 = vector.broadcast %1083 : f32 to vector<1x8xf32>
    %1087 = arith.mulf %1086, %1085 : vector<1x8xf32>
    %1088 = arith.addf %1082, %1087 : vector<1x8xf32>
    %c2_350 = arith.constant 2 : index
    %c23_351 = arith.constant 23 : index
    %1089 = memref.load %arg4[%c2_350, %c23_351] : memref<8x24xf32, #tpu.memory_space<smem>>
    %1090 = vector.extract_strided_slice %647 {offsets = [0, 7, 0], sizes = [1, 1, 8], strides = [1, 1, 1]} : vector<1x8x8xf32> to vector<1x1x8xf32>
    %1091 = vector.shape_cast %1090 : vector<1x1x8xf32> to vector<1x8xf32>
    %1092 = vector.broadcast %1089 : f32 to vector<1x8xf32>
    %1093 = arith.mulf %1092, %1091 : vector<1x8xf32>
    %1094 = arith.addf %1088, %1093 : vector<1x8xf32>
    %c2_352 = arith.constant 2 : index
    %1095 = memref.load %arg5[%c2_352] : memref<8xf32, #tpu.memory_space<smem>>
    %1096 = vector.broadcast %1095 : f32 to vector<1x8xf32>
    %1097 = arith.addf %1094, %1096 : vector<1x8xf32>
    %cst_353 = arith.constant 0.000000e+00 : f32
    %1098 = vector.broadcast %cst_353 : f32 to vector<1x8xf32>
    %1099 = arith.maximumf %1097, %1098 : vector<1x8xf32>
    %1100 = vector.shape_cast %1099 : vector<1x8xf32> to vector<1x1x8xf32>
    %cst_354 = arith.constant 0.000000e+00 : f32
    %1101 = vector.broadcast %cst_354 : f32 to vector<1x8xf32>
    %c3_355 = arith.constant 3 : index
    %c0_356 = arith.constant 0 : index
    %1102 = memref.load %arg4[%c3_355, %c0_356] : memref<8x24xf32, #tpu.memory_space<smem>>
    %1103 = vector.extract_strided_slice %645 {offsets = [0, 0, 0], sizes = [1, 1, 8], strides = [1, 1, 1]} : vector<1x8x8xf32> to vector<1x1x8xf32>
    %1104 = vector.shape_cast %1103 : vector<1x1x8xf32> to vector<1x8xf32>
    %1105 = vector.broadcast %1102 : f32 to vector<1x8xf32>
    %1106 = arith.mulf %1105, %1104 : vector<1x8xf32>
    %1107 = arith.addf %1101, %1106 : vector<1x8xf32>
    %c3_357 = arith.constant 3 : index
    %c1_358 = arith.constant 1 : index
    %1108 = memref.load %arg4[%c3_357, %c1_358] : memref<8x24xf32, #tpu.memory_space<smem>>
    %1109 = vector.extract_strided_slice %642 {offsets = [0, 0, 0], sizes = [1, 1, 8], strides = [1, 1, 1]} : vector<1x8x8xf32> to vector<1x1x8xf32>
    %1110 = vector.shape_cast %1109 : vector<1x1x8xf32> to vector<1x8xf32>
    %1111 = vector.broadcast %1108 : f32 to vector<1x8xf32>
    %1112 = arith.mulf %1111, %1110 : vector<1x8xf32>
    %1113 = arith.addf %1107, %1112 : vector<1x8xf32>
    %c3_359 = arith.constant 3 : index
    %c2_360 = arith.constant 2 : index
    %1114 = memref.load %arg4[%c3_359, %c2_360] : memref<8x24xf32, #tpu.memory_space<smem>>
    %1115 = vector.extract_strided_slice %647 {offsets = [0, 0, 0], sizes = [1, 1, 8], strides = [1, 1, 1]} : vector<1x8x8xf32> to vector<1x1x8xf32>
    %1116 = vector.shape_cast %1115 : vector<1x1x8xf32> to vector<1x8xf32>
    %1117 = vector.broadcast %1114 : f32 to vector<1x8xf32>
    %1118 = arith.mulf %1117, %1116 : vector<1x8xf32>
    %1119 = arith.addf %1113, %1118 : vector<1x8xf32>
    %c3_361 = arith.constant 3 : index
    %c3_362 = arith.constant 3 : index
    %1120 = memref.load %arg4[%c3_361, %c3_362] : memref<8x24xf32, #tpu.memory_space<smem>>
    %1121 = vector.extract_strided_slice %645 {offsets = [0, 1, 0], sizes = [1, 1, 8], strides = [1, 1, 1]} : vector<1x8x8xf32> to vector<1x1x8xf32>
    %1122 = vector.shape_cast %1121 : vector<1x1x8xf32> to vector<1x8xf32>
    %1123 = vector.broadcast %1120 : f32 to vector<1x8xf32>
    %1124 = arith.mulf %1123, %1122 : vector<1x8xf32>
    %1125 = arith.addf %1119, %1124 : vector<1x8xf32>
    %c3_363 = arith.constant 3 : index
    %c4_364 = arith.constant 4 : index
    %1126 = memref.load %arg4[%c3_363, %c4_364] : memref<8x24xf32, #tpu.memory_space<smem>>
    %1127 = vector.extract_strided_slice %642 {offsets = [0, 1, 0], sizes = [1, 1, 8], strides = [1, 1, 1]} : vector<1x8x8xf32> to vector<1x1x8xf32>
    %1128 = vector.shape_cast %1127 : vector<1x1x8xf32> to vector<1x8xf32>
    %1129 = vector.broadcast %1126 : f32 to vector<1x8xf32>
    %1130 = arith.mulf %1129, %1128 : vector<1x8xf32>
    %1131 = arith.addf %1125, %1130 : vector<1x8xf32>
    %c3_365 = arith.constant 3 : index
    %c5_366 = arith.constant 5 : index
    %1132 = memref.load %arg4[%c3_365, %c5_366] : memref<8x24xf32, #tpu.memory_space<smem>>
    %1133 = vector.extract_strided_slice %647 {offsets = [0, 1, 0], sizes = [1, 1, 8], strides = [1, 1, 1]} : vector<1x8x8xf32> to vector<1x1x8xf32>
    %1134 = vector.shape_cast %1133 : vector<1x1x8xf32> to vector<1x8xf32>
    %1135 = vector.broadcast %1132 : f32 to vector<1x8xf32>
    %1136 = arith.mulf %1135, %1134 : vector<1x8xf32>
    %1137 = arith.addf %1131, %1136 : vector<1x8xf32>
    %c3_367 = arith.constant 3 : index
    %c6_368 = arith.constant 6 : index
    %1138 = memref.load %arg4[%c3_367, %c6_368] : memref<8x24xf32, #tpu.memory_space<smem>>
    %1139 = vector.extract_strided_slice %645 {offsets = [0, 2, 0], sizes = [1, 1, 8], strides = [1, 1, 1]} : vector<1x8x8xf32> to vector<1x1x8xf32>
    %1140 = vector.shape_cast %1139 : vector<1x1x8xf32> to vector<1x8xf32>
    %1141 = vector.broadcast %1138 : f32 to vector<1x8xf32>
    %1142 = arith.mulf %1141, %1140 : vector<1x8xf32>
    %1143 = arith.addf %1137, %1142 : vector<1x8xf32>
    %c3_369 = arith.constant 3 : index
    %c7_370 = arith.constant 7 : index
    %1144 = memref.load %arg4[%c3_369, %c7_370] : memref<8x24xf32, #tpu.memory_space<smem>>
    %1145 = vector.extract_strided_slice %642 {offsets = [0, 2, 0], sizes = [1, 1, 8], strides = [1, 1, 1]} : vector<1x8x8xf32> to vector<1x1x8xf32>
    %1146 = vector.shape_cast %1145 : vector<1x1x8xf32> to vector<1x8xf32>
    %1147 = vector.broadcast %1144 : f32 to vector<1x8xf32>
    %1148 = arith.mulf %1147, %1146 : vector<1x8xf32>
    %1149 = arith.addf %1143, %1148 : vector<1x8xf32>
    %c3_371 = arith.constant 3 : index
    %c8_372 = arith.constant 8 : index
    %1150 = memref.load %arg4[%c3_371, %c8_372] : memref<8x24xf32, #tpu.memory_space<smem>>
    %1151 = vector.extract_strided_slice %647 {offsets = [0, 2, 0], sizes = [1, 1, 8], strides = [1, 1, 1]} : vector<1x8x8xf32> to vector<1x1x8xf32>
    %1152 = vector.shape_cast %1151 : vector<1x1x8xf32> to vector<1x8xf32>
    %1153 = vector.broadcast %1150 : f32 to vector<1x8xf32>
    %1154 = arith.mulf %1153, %1152 : vector<1x8xf32>
    %1155 = arith.addf %1149, %1154 : vector<1x8xf32>
    %c3_373 = arith.constant 3 : index
    %c9_374 = arith.constant 9 : index
    %1156 = memref.load %arg4[%c3_373, %c9_374] : memref<8x24xf32, #tpu.memory_space<smem>>
    %1157 = vector.extract_strided_slice %645 {offsets = [0, 3, 0], sizes = [1, 1, 8], strides = [1, 1, 1]} : vector<1x8x8xf32> to vector<1x1x8xf32>
    %1158 = vector.shape_cast %1157 : vector<1x1x8xf32> to vector<1x8xf32>
    %1159 = vector.broadcast %1156 : f32 to vector<1x8xf32>
    %1160 = arith.mulf %1159, %1158 : vector<1x8xf32>
    %1161 = arith.addf %1155, %1160 : vector<1x8xf32>
    %c3_375 = arith.constant 3 : index
    %c10_376 = arith.constant 10 : index
    %1162 = memref.load %arg4[%c3_375, %c10_376] : memref<8x24xf32, #tpu.memory_space<smem>>
    %1163 = vector.extract_strided_slice %642 {offsets = [0, 3, 0], sizes = [1, 1, 8], strides = [1, 1, 1]} : vector<1x8x8xf32> to vector<1x1x8xf32>
    %1164 = vector.shape_cast %1163 : vector<1x1x8xf32> to vector<1x8xf32>
    %1165 = vector.broadcast %1162 : f32 to vector<1x8xf32>
    %1166 = arith.mulf %1165, %1164 : vector<1x8xf32>
    %1167 = arith.addf %1161, %1166 : vector<1x8xf32>
    %c3_377 = arith.constant 3 : index
    %c11_378 = arith.constant 11 : index
    %1168 = memref.load %arg4[%c3_377, %c11_378] : memref<8x24xf32, #tpu.memory_space<smem>>
    %1169 = vector.extract_strided_slice %647 {offsets = [0, 3, 0], sizes = [1, 1, 8], strides = [1, 1, 1]} : vector<1x8x8xf32> to vector<1x1x8xf32>
    %1170 = vector.shape_cast %1169 : vector<1x1x8xf32> to vector<1x8xf32>
    %1171 = vector.broadcast %1168 : f32 to vector<1x8xf32>
    %1172 = arith.mulf %1171, %1170 : vector<1x8xf32>
    %1173 = arith.addf %1167, %1172 : vector<1x8xf32>
    %c3_379 = arith.constant 3 : index
    %c12_380 = arith.constant 12 : index
    %1174 = memref.load %arg4[%c3_379, %c12_380] : memref<8x24xf32, #tpu.memory_space<smem>>
    %1175 = vector.extract_strided_slice %645 {offsets = [0, 4, 0], sizes = [1, 1, 8], strides = [1, 1, 1]} : vector<1x8x8xf32> to vector<1x1x8xf32>
    %1176 = vector.shape_cast %1175 : vector<1x1x8xf32> to vector<1x8xf32>
    %1177 = vector.broadcast %1174 : f32 to vector<1x8xf32>
    %1178 = arith.mulf %1177, %1176 : vector<1x8xf32>
    %1179 = arith.addf %1173, %1178 : vector<1x8xf32>
    %c3_381 = arith.constant 3 : index
    %c13_382 = arith.constant 13 : index
    %1180 = memref.load %arg4[%c3_381, %c13_382] : memref<8x24xf32, #tpu.memory_space<smem>>
    %1181 = vector.extract_strided_slice %642 {offsets = [0, 4, 0], sizes = [1, 1, 8], strides = [1, 1, 1]} : vector<1x8x8xf32> to vector<1x1x8xf32>
    %1182 = vector.shape_cast %1181 : vector<1x1x8xf32> to vector<1x8xf32>
    %1183 = vector.broadcast %1180 : f32 to vector<1x8xf32>
    %1184 = arith.mulf %1183, %1182 : vector<1x8xf32>
    %1185 = arith.addf %1179, %1184 : vector<1x8xf32>
    %c3_383 = arith.constant 3 : index
    %c14_384 = arith.constant 14 : index
    %1186 = memref.load %arg4[%c3_383, %c14_384] : memref<8x24xf32, #tpu.memory_space<smem>>
    %1187 = vector.extract_strided_slice %647 {offsets = [0, 4, 0], sizes = [1, 1, 8], strides = [1, 1, 1]} : vector<1x8x8xf32> to vector<1x1x8xf32>
    %1188 = vector.shape_cast %1187 : vector<1x1x8xf32> to vector<1x8xf32>
    %1189 = vector.broadcast %1186 : f32 to vector<1x8xf32>
    %1190 = arith.mulf %1189, %1188 : vector<1x8xf32>
    %1191 = arith.addf %1185, %1190 : vector<1x8xf32>
    %c3_385 = arith.constant 3 : index
    %c15_386 = arith.constant 15 : index
    %1192 = memref.load %arg4[%c3_385, %c15_386] : memref<8x24xf32, #tpu.memory_space<smem>>
    %1193 = vector.extract_strided_slice %645 {offsets = [0, 5, 0], sizes = [1, 1, 8], strides = [1, 1, 1]} : vector<1x8x8xf32> to vector<1x1x8xf32>
    %1194 = vector.shape_cast %1193 : vector<1x1x8xf32> to vector<1x8xf32>
    %1195 = vector.broadcast %1192 : f32 to vector<1x8xf32>
    %1196 = arith.mulf %1195, %1194 : vector<1x8xf32>
    %1197 = arith.addf %1191, %1196 : vector<1x8xf32>
    %c3_387 = arith.constant 3 : index
    %c16_388 = arith.constant 16 : index
    %1198 = memref.load %arg4[%c3_387, %c16_388] : memref<8x24xf32, #tpu.memory_space<smem>>
    %1199 = vector.extract_strided_slice %642 {offsets = [0, 5, 0], sizes = [1, 1, 8], strides = [1, 1, 1]} : vector<1x8x8xf32> to vector<1x1x8xf32>
    %1200 = vector.shape_cast %1199 : vector<1x1x8xf32> to vector<1x8xf32>
    %1201 = vector.broadcast %1198 : f32 to vector<1x8xf32>
    %1202 = arith.mulf %1201, %1200 : vector<1x8xf32>
    %1203 = arith.addf %1197, %1202 : vector<1x8xf32>
    %c3_389 = arith.constant 3 : index
    %c17_390 = arith.constant 17 : index
    %1204 = memref.load %arg4[%c3_389, %c17_390] : memref<8x24xf32, #tpu.memory_space<smem>>
    %1205 = vector.extract_strided_slice %647 {offsets = [0, 5, 0], sizes = [1, 1, 8], strides = [1, 1, 1]} : vector<1x8x8xf32> to vector<1x1x8xf32>
    %1206 = vector.shape_cast %1205 : vector<1x1x8xf32> to vector<1x8xf32>
    %1207 = vector.broadcast %1204 : f32 to vector<1x8xf32>
    %1208 = arith.mulf %1207, %1206 : vector<1x8xf32>
    %1209 = arith.addf %1203, %1208 : vector<1x8xf32>
    %c3_391 = arith.constant 3 : index
    %c18_392 = arith.constant 18 : index
    %1210 = memref.load %arg4[%c3_391, %c18_392] : memref<8x24xf32, #tpu.memory_space<smem>>
    %1211 = vector.extract_strided_slice %645 {offsets = [0, 6, 0], sizes = [1, 1, 8], strides = [1, 1, 1]} : vector<1x8x8xf32> to vector<1x1x8xf32>
    %1212 = vector.shape_cast %1211 : vector<1x1x8xf32> to vector<1x8xf32>
    %1213 = vector.broadcast %1210 : f32 to vector<1x8xf32>
    %1214 = arith.mulf %1213, %1212 : vector<1x8xf32>
    %1215 = arith.addf %1209, %1214 : vector<1x8xf32>
    %c3_393 = arith.constant 3 : index
    %c19_394 = arith.constant 19 : index
    %1216 = memref.load %arg4[%c3_393, %c19_394] : memref<8x24xf32, #tpu.memory_space<smem>>
    %1217 = vector.extract_strided_slice %642 {offsets = [0, 6, 0], sizes = [1, 1, 8], strides = [1, 1, 1]} : vector<1x8x8xf32> to vector<1x1x8xf32>
    %1218 = vector.shape_cast %1217 : vector<1x1x8xf32> to vector<1x8xf32>
    %1219 = vector.broadcast %1216 : f32 to vector<1x8xf32>
    %1220 = arith.mulf %1219, %1218 : vector<1x8xf32>
    %1221 = arith.addf %1215, %1220 : vector<1x8xf32>
    %c3_395 = arith.constant 3 : index
    %c20_396 = arith.constant 20 : index
    %1222 = memref.load %arg4[%c3_395, %c20_396] : memref<8x24xf32, #tpu.memory_space<smem>>
    %1223 = vector.extract_strided_slice %647 {offsets = [0, 6, 0], sizes = [1, 1, 8], strides = [1, 1, 1]} : vector<1x8x8xf32> to vector<1x1x8xf32>
    %1224 = vector.shape_cast %1223 : vector<1x1x8xf32> to vector<1x8xf32>
    %1225 = vector.broadcast %1222 : f32 to vector<1x8xf32>
    %1226 = arith.mulf %1225, %1224 : vector<1x8xf32>
    %1227 = arith.addf %1221, %1226 : vector<1x8xf32>
    %c3_397 = arith.constant 3 : index
    %c21_398 = arith.constant 21 : index
    %1228 = memref.load %arg4[%c3_397, %c21_398] : memref<8x24xf32, #tpu.memory_space<smem>>
    %1229 = vector.extract_strided_slice %645 {offsets = [0, 7, 0], sizes = [1, 1, 8], strides = [1, 1, 1]} : vector<1x8x8xf32> to vector<1x1x8xf32>
    %1230 = vector.shape_cast %1229 : vector<1x1x8xf32> to vector<1x8xf32>
    %1231 = vector.broadcast %1228 : f32 to vector<1x8xf32>
    %1232 = arith.mulf %1231, %1230 : vector<1x8xf32>
    %1233 = arith.addf %1227, %1232 : vector<1x8xf32>
    %c3_399 = arith.constant 3 : index
    %c22_400 = arith.constant 22 : index
    %1234 = memref.load %arg4[%c3_399, %c22_400] : memref<8x24xf32, #tpu.memory_space<smem>>
    %1235 = vector.extract_strided_slice %642 {offsets = [0, 7, 0], sizes = [1, 1, 8], strides = [1, 1, 1]} : vector<1x8x8xf32> to vector<1x1x8xf32>
    %1236 = vector.shape_cast %1235 : vector<1x1x8xf32> to vector<1x8xf32>
    %1237 = vector.broadcast %1234 : f32 to vector<1x8xf32>
    %1238 = arith.mulf %1237, %1236 : vector<1x8xf32>
    %1239 = arith.addf %1233, %1238 : vector<1x8xf32>
    %c3_401 = arith.constant 3 : index
    %c23_402 = arith.constant 23 : index
    %1240 = memref.load %arg4[%c3_401, %c23_402] : memref<8x24xf32, #tpu.memory_space<smem>>
    %1241 = vector.extract_strided_slice %647 {offsets = [0, 7, 0], sizes = [1, 1, 8], strides = [1, 1, 1]} : vector<1x8x8xf32> to vector<1x1x8xf32>
    %1242 = vector.shape_cast %1241 : vector<1x1x8xf32> to vector<1x8xf32>
    %1243 = vector.broadcast %1240 : f32 to vector<1x8xf32>
    %1244 = arith.mulf %1243, %1242 : vector<1x8xf32>
    %1245 = arith.addf %1239, %1244 : vector<1x8xf32>
    %c3_403 = arith.constant 3 : index
    %1246 = memref.load %arg5[%c3_403] : memref<8xf32, #tpu.memory_space<smem>>
    %1247 = vector.broadcast %1246 : f32 to vector<1x8xf32>
    %1248 = arith.addf %1245, %1247 : vector<1x8xf32>
    %cst_404 = arith.constant 0.000000e+00 : f32
    %1249 = vector.broadcast %cst_404 : f32 to vector<1x8xf32>
    %1250 = arith.maximumf %1248, %1249 : vector<1x8xf32>
    %1251 = vector.shape_cast %1250 : vector<1x8xf32> to vector<1x1x8xf32>
    %cst_405 = arith.constant 0.000000e+00 : f32
    %1252 = vector.broadcast %cst_405 : f32 to vector<1x8xf32>
    %c4_406 = arith.constant 4 : index
    %c0_407 = arith.constant 0 : index
    %1253 = memref.load %arg4[%c4_406, %c0_407] : memref<8x24xf32, #tpu.memory_space<smem>>
    %1254 = vector.extract_strided_slice %645 {offsets = [0, 0, 0], sizes = [1, 1, 8], strides = [1, 1, 1]} : vector<1x8x8xf32> to vector<1x1x8xf32>
    %1255 = vector.shape_cast %1254 : vector<1x1x8xf32> to vector<1x8xf32>
    %1256 = vector.broadcast %1253 : f32 to vector<1x8xf32>
    %1257 = arith.mulf %1256, %1255 : vector<1x8xf32>
    %1258 = arith.addf %1252, %1257 : vector<1x8xf32>
    %c4_408 = arith.constant 4 : index
    %c1_409 = arith.constant 1 : index
    %1259 = memref.load %arg4[%c4_408, %c1_409] : memref<8x24xf32, #tpu.memory_space<smem>>
    %1260 = vector.extract_strided_slice %642 {offsets = [0, 0, 0], sizes = [1, 1, 8], strides = [1, 1, 1]} : vector<1x8x8xf32> to vector<1x1x8xf32>
    %1261 = vector.shape_cast %1260 : vector<1x1x8xf32> to vector<1x8xf32>
    %1262 = vector.broadcast %1259 : f32 to vector<1x8xf32>
    %1263 = arith.mulf %1262, %1261 : vector<1x8xf32>
    %1264 = arith.addf %1258, %1263 : vector<1x8xf32>
    %c4_410 = arith.constant 4 : index
    %c2_411 = arith.constant 2 : index
    %1265 = memref.load %arg4[%c4_410, %c2_411] : memref<8x24xf32, #tpu.memory_space<smem>>
    %1266 = vector.extract_strided_slice %647 {offsets = [0, 0, 0], sizes = [1, 1, 8], strides = [1, 1, 1]} : vector<1x8x8xf32> to vector<1x1x8xf32>
    %1267 = vector.shape_cast %1266 : vector<1x1x8xf32> to vector<1x8xf32>
    %1268 = vector.broadcast %1265 : f32 to vector<1x8xf32>
    %1269 = arith.mulf %1268, %1267 : vector<1x8xf32>
    %1270 = arith.addf %1264, %1269 : vector<1x8xf32>
    %c4_412 = arith.constant 4 : index
    %c3_413 = arith.constant 3 : index
    %1271 = memref.load %arg4[%c4_412, %c3_413] : memref<8x24xf32, #tpu.memory_space<smem>>
    %1272 = vector.extract_strided_slice %645 {offsets = [0, 1, 0], sizes = [1, 1, 8], strides = [1, 1, 1]} : vector<1x8x8xf32> to vector<1x1x8xf32>
    %1273 = vector.shape_cast %1272 : vector<1x1x8xf32> to vector<1x8xf32>
    %1274 = vector.broadcast %1271 : f32 to vector<1x8xf32>
    %1275 = arith.mulf %1274, %1273 : vector<1x8xf32>
    %1276 = arith.addf %1270, %1275 : vector<1x8xf32>
    %c4_414 = arith.constant 4 : index
    %c4_415 = arith.constant 4 : index
    %1277 = memref.load %arg4[%c4_414, %c4_415] : memref<8x24xf32, #tpu.memory_space<smem>>
    %1278 = vector.extract_strided_slice %642 {offsets = [0, 1, 0], sizes = [1, 1, 8], strides = [1, 1, 1]} : vector<1x8x8xf32> to vector<1x1x8xf32>
    %1279 = vector.shape_cast %1278 : vector<1x1x8xf32> to vector<1x8xf32>
    %1280 = vector.broadcast %1277 : f32 to vector<1x8xf32>
    %1281 = arith.mulf %1280, %1279 : vector<1x8xf32>
    %1282 = arith.addf %1276, %1281 : vector<1x8xf32>
    %c4_416 = arith.constant 4 : index
    %c5_417 = arith.constant 5 : index
    %1283 = memref.load %arg4[%c4_416, %c5_417] : memref<8x24xf32, #tpu.memory_space<smem>>
    %1284 = vector.extract_strided_slice %647 {offsets = [0, 1, 0], sizes = [1, 1, 8], strides = [1, 1, 1]} : vector<1x8x8xf32> to vector<1x1x8xf32>
    %1285 = vector.shape_cast %1284 : vector<1x1x8xf32> to vector<1x8xf32>
    %1286 = vector.broadcast %1283 : f32 to vector<1x8xf32>
    %1287 = arith.mulf %1286, %1285 : vector<1x8xf32>
    %1288 = arith.addf %1282, %1287 : vector<1x8xf32>
    %c4_418 = arith.constant 4 : index
    %c6_419 = arith.constant 6 : index
    %1289 = memref.load %arg4[%c4_418, %c6_419] : memref<8x24xf32, #tpu.memory_space<smem>>
    %1290 = vector.extract_strided_slice %645 {offsets = [0, 2, 0], sizes = [1, 1, 8], strides = [1, 1, 1]} : vector<1x8x8xf32> to vector<1x1x8xf32>
    %1291 = vector.shape_cast %1290 : vector<1x1x8xf32> to vector<1x8xf32>
    %1292 = vector.broadcast %1289 : f32 to vector<1x8xf32>
    %1293 = arith.mulf %1292, %1291 : vector<1x8xf32>
    %1294 = arith.addf %1288, %1293 : vector<1x8xf32>
    %c4_420 = arith.constant 4 : index
    %c7_421 = arith.constant 7 : index
    %1295 = memref.load %arg4[%c4_420, %c7_421] : memref<8x24xf32, #tpu.memory_space<smem>>
    %1296 = vector.extract_strided_slice %642 {offsets = [0, 2, 0], sizes = [1, 1, 8], strides = [1, 1, 1]} : vector<1x8x8xf32> to vector<1x1x8xf32>
    %1297 = vector.shape_cast %1296 : vector<1x1x8xf32> to vector<1x8xf32>
    %1298 = vector.broadcast %1295 : f32 to vector<1x8xf32>
    %1299 = arith.mulf %1298, %1297 : vector<1x8xf32>
    %1300 = arith.addf %1294, %1299 : vector<1x8xf32>
    %c4_422 = arith.constant 4 : index
    %c8_423 = arith.constant 8 : index
    %1301 = memref.load %arg4[%c4_422, %c8_423] : memref<8x24xf32, #tpu.memory_space<smem>>
    %1302 = vector.extract_strided_slice %647 {offsets = [0, 2, 0], sizes = [1, 1, 8], strides = [1, 1, 1]} : vector<1x8x8xf32> to vector<1x1x8xf32>
    %1303 = vector.shape_cast %1302 : vector<1x1x8xf32> to vector<1x8xf32>
    %1304 = vector.broadcast %1301 : f32 to vector<1x8xf32>
    %1305 = arith.mulf %1304, %1303 : vector<1x8xf32>
    %1306 = arith.addf %1300, %1305 : vector<1x8xf32>
    %c4_424 = arith.constant 4 : index
    %c9_425 = arith.constant 9 : index
    %1307 = memref.load %arg4[%c4_424, %c9_425] : memref<8x24xf32, #tpu.memory_space<smem>>
    %1308 = vector.extract_strided_slice %645 {offsets = [0, 3, 0], sizes = [1, 1, 8], strides = [1, 1, 1]} : vector<1x8x8xf32> to vector<1x1x8xf32>
    %1309 = vector.shape_cast %1308 : vector<1x1x8xf32> to vector<1x8xf32>
    %1310 = vector.broadcast %1307 : f32 to vector<1x8xf32>
    %1311 = arith.mulf %1310, %1309 : vector<1x8xf32>
    %1312 = arith.addf %1306, %1311 : vector<1x8xf32>
    %c4_426 = arith.constant 4 : index
    %c10_427 = arith.constant 10 : index
    %1313 = memref.load %arg4[%c4_426, %c10_427] : memref<8x24xf32, #tpu.memory_space<smem>>
    %1314 = vector.extract_strided_slice %642 {offsets = [0, 3, 0], sizes = [1, 1, 8], strides = [1, 1, 1]} : vector<1x8x8xf32> to vector<1x1x8xf32>
    %1315 = vector.shape_cast %1314 : vector<1x1x8xf32> to vector<1x8xf32>
    %1316 = vector.broadcast %1313 : f32 to vector<1x8xf32>
    %1317 = arith.mulf %1316, %1315 : vector<1x8xf32>
    %1318 = arith.addf %1312, %1317 : vector<1x8xf32>
    %c4_428 = arith.constant 4 : index
    %c11_429 = arith.constant 11 : index
    %1319 = memref.load %arg4[%c4_428, %c11_429] : memref<8x24xf32, #tpu.memory_space<smem>>
    %1320 = vector.extract_strided_slice %647 {offsets = [0, 3, 0], sizes = [1, 1, 8], strides = [1, 1, 1]} : vector<1x8x8xf32> to vector<1x1x8xf32>
    %1321 = vector.shape_cast %1320 : vector<1x1x8xf32> to vector<1x8xf32>
    %1322 = vector.broadcast %1319 : f32 to vector<1x8xf32>
    %1323 = arith.mulf %1322, %1321 : vector<1x8xf32>
    %1324 = arith.addf %1318, %1323 : vector<1x8xf32>
    %c4_430 = arith.constant 4 : index
    %c12_431 = arith.constant 12 : index
    %1325 = memref.load %arg4[%c4_430, %c12_431] : memref<8x24xf32, #tpu.memory_space<smem>>
    %1326 = vector.extract_strided_slice %645 {offsets = [0, 4, 0], sizes = [1, 1, 8], strides = [1, 1, 1]} : vector<1x8x8xf32> to vector<1x1x8xf32>
    %1327 = vector.shape_cast %1326 : vector<1x1x8xf32> to vector<1x8xf32>
    %1328 = vector.broadcast %1325 : f32 to vector<1x8xf32>
    %1329 = arith.mulf %1328, %1327 : vector<1x8xf32>
    %1330 = arith.addf %1324, %1329 : vector<1x8xf32>
    %c4_432 = arith.constant 4 : index
    %c13_433 = arith.constant 13 : index
    %1331 = memref.load %arg4[%c4_432, %c13_433] : memref<8x24xf32, #tpu.memory_space<smem>>
    %1332 = vector.extract_strided_slice %642 {offsets = [0, 4, 0], sizes = [1, 1, 8], strides = [1, 1, 1]} : vector<1x8x8xf32> to vector<1x1x8xf32>
    %1333 = vector.shape_cast %1332 : vector<1x1x8xf32> to vector<1x8xf32>
    %1334 = vector.broadcast %1331 : f32 to vector<1x8xf32>
    %1335 = arith.mulf %1334, %1333 : vector<1x8xf32>
    %1336 = arith.addf %1330, %1335 : vector<1x8xf32>
    %c4_434 = arith.constant 4 : index
    %c14_435 = arith.constant 14 : index
    %1337 = memref.load %arg4[%c4_434, %c14_435] : memref<8x24xf32, #tpu.memory_space<smem>>
    %1338 = vector.extract_strided_slice %647 {offsets = [0, 4, 0], sizes = [1, 1, 8], strides = [1, 1, 1]} : vector<1x8x8xf32> to vector<1x1x8xf32>
    %1339 = vector.shape_cast %1338 : vector<1x1x8xf32> to vector<1x8xf32>
    %1340 = vector.broadcast %1337 : f32 to vector<1x8xf32>
    %1341 = arith.mulf %1340, %1339 : vector<1x8xf32>
    %1342 = arith.addf %1336, %1341 : vector<1x8xf32>
    %c4_436 = arith.constant 4 : index
    %c15_437 = arith.constant 15 : index
    %1343 = memref.load %arg4[%c4_436, %c15_437] : memref<8x24xf32, #tpu.memory_space<smem>>
    %1344 = vector.extract_strided_slice %645 {offsets = [0, 5, 0], sizes = [1, 1, 8], strides = [1, 1, 1]} : vector<1x8x8xf32> to vector<1x1x8xf32>
    %1345 = vector.shape_cast %1344 : vector<1x1x8xf32> to vector<1x8xf32>
    %1346 = vector.broadcast %1343 : f32 to vector<1x8xf32>
    %1347 = arith.mulf %1346, %1345 : vector<1x8xf32>
    %1348 = arith.addf %1342, %1347 : vector<1x8xf32>
    %c4_438 = arith.constant 4 : index
    %c16_439 = arith.constant 16 : index
    %1349 = memref.load %arg4[%c4_438, %c16_439] : memref<8x24xf32, #tpu.memory_space<smem>>
    %1350 = vector.extract_strided_slice %642 {offsets = [0, 5, 0], sizes = [1, 1, 8], strides = [1, 1, 1]} : vector<1x8x8xf32> to vector<1x1x8xf32>
    %1351 = vector.shape_cast %1350 : vector<1x1x8xf32> to vector<1x8xf32>
    %1352 = vector.broadcast %1349 : f32 to vector<1x8xf32>
    %1353 = arith.mulf %1352, %1351 : vector<1x8xf32>
    %1354 = arith.addf %1348, %1353 : vector<1x8xf32>
    %c4_440 = arith.constant 4 : index
    %c17_441 = arith.constant 17 : index
    %1355 = memref.load %arg4[%c4_440, %c17_441] : memref<8x24xf32, #tpu.memory_space<smem>>
    %1356 = vector.extract_strided_slice %647 {offsets = [0, 5, 0], sizes = [1, 1, 8], strides = [1, 1, 1]} : vector<1x8x8xf32> to vector<1x1x8xf32>
    %1357 = vector.shape_cast %1356 : vector<1x1x8xf32> to vector<1x8xf32>
    %1358 = vector.broadcast %1355 : f32 to vector<1x8xf32>
    %1359 = arith.mulf %1358, %1357 : vector<1x8xf32>
    %1360 = arith.addf %1354, %1359 : vector<1x8xf32>
    %c4_442 = arith.constant 4 : index
    %c18_443 = arith.constant 18 : index
    %1361 = memref.load %arg4[%c4_442, %c18_443] : memref<8x24xf32, #tpu.memory_space<smem>>
    %1362 = vector.extract_strided_slice %645 {offsets = [0, 6, 0], sizes = [1, 1, 8], strides = [1, 1, 1]} : vector<1x8x8xf32> to vector<1x1x8xf32>
    %1363 = vector.shape_cast %1362 : vector<1x1x8xf32> to vector<1x8xf32>
    %1364 = vector.broadcast %1361 : f32 to vector<1x8xf32>
    %1365 = arith.mulf %1364, %1363 : vector<1x8xf32>
    %1366 = arith.addf %1360, %1365 : vector<1x8xf32>
    %c4_444 = arith.constant 4 : index
    %c19_445 = arith.constant 19 : index
    %1367 = memref.load %arg4[%c4_444, %c19_445] : memref<8x24xf32, #tpu.memory_space<smem>>
    %1368 = vector.extract_strided_slice %642 {offsets = [0, 6, 0], sizes = [1, 1, 8], strides = [1, 1, 1]} : vector<1x8x8xf32> to vector<1x1x8xf32>
    %1369 = vector.shape_cast %1368 : vector<1x1x8xf32> to vector<1x8xf32>
    %1370 = vector.broadcast %1367 : f32 to vector<1x8xf32>
    %1371 = arith.mulf %1370, %1369 : vector<1x8xf32>
    %1372 = arith.addf %1366, %1371 : vector<1x8xf32>
    %c4_446 = arith.constant 4 : index
    %c20_447 = arith.constant 20 : index
    %1373 = memref.load %arg4[%c4_446, %c20_447] : memref<8x24xf32, #tpu.memory_space<smem>>
    %1374 = vector.extract_strided_slice %647 {offsets = [0, 6, 0], sizes = [1, 1, 8], strides = [1, 1, 1]} : vector<1x8x8xf32> to vector<1x1x8xf32>
    %1375 = vector.shape_cast %1374 : vector<1x1x8xf32> to vector<1x8xf32>
    %1376 = vector.broadcast %1373 : f32 to vector<1x8xf32>
    %1377 = arith.mulf %1376, %1375 : vector<1x8xf32>
    %1378 = arith.addf %1372, %1377 : vector<1x8xf32>
    %c4_448 = arith.constant 4 : index
    %c21_449 = arith.constant 21 : index
    %1379 = memref.load %arg4[%c4_448, %c21_449] : memref<8x24xf32, #tpu.memory_space<smem>>
    %1380 = vector.extract_strided_slice %645 {offsets = [0, 7, 0], sizes = [1, 1, 8], strides = [1, 1, 1]} : vector<1x8x8xf32> to vector<1x1x8xf32>
    %1381 = vector.shape_cast %1380 : vector<1x1x8xf32> to vector<1x8xf32>
    %1382 = vector.broadcast %1379 : f32 to vector<1x8xf32>
    %1383 = arith.mulf %1382, %1381 : vector<1x8xf32>
    %1384 = arith.addf %1378, %1383 : vector<1x8xf32>
    %c4_450 = arith.constant 4 : index
    %c22_451 = arith.constant 22 : index
    %1385 = memref.load %arg4[%c4_450, %c22_451] : memref<8x24xf32, #tpu.memory_space<smem>>
    %1386 = vector.extract_strided_slice %642 {offsets = [0, 7, 0], sizes = [1, 1, 8], strides = [1, 1, 1]} : vector<1x8x8xf32> to vector<1x1x8xf32>
    %1387 = vector.shape_cast %1386 : vector<1x1x8xf32> to vector<1x8xf32>
    %1388 = vector.broadcast %1385 : f32 to vector<1x8xf32>
    %1389 = arith.mulf %1388, %1387 : vector<1x8xf32>
    %1390 = arith.addf %1384, %1389 : vector<1x8xf32>
    %c4_452 = arith.constant 4 : index
    %c23_453 = arith.constant 23 : index
    %1391 = memref.load %arg4[%c4_452, %c23_453] : memref<8x24xf32, #tpu.memory_space<smem>>
    %1392 = vector.extract_strided_slice %647 {offsets = [0, 7, 0], sizes = [1, 1, 8], strides = [1, 1, 1]} : vector<1x8x8xf32> to vector<1x1x8xf32>
    %1393 = vector.shape_cast %1392 : vector<1x1x8xf32> to vector<1x8xf32>
    %1394 = vector.broadcast %1391 : f32 to vector<1x8xf32>
    %1395 = arith.mulf %1394, %1393 : vector<1x8xf32>
    %1396 = arith.addf %1390, %1395 : vector<1x8xf32>
    %c4_454 = arith.constant 4 : index
    %1397 = memref.load %arg5[%c4_454] : memref<8xf32, #tpu.memory_space<smem>>
    %1398 = vector.broadcast %1397 : f32 to vector<1x8xf32>
    %1399 = arith.addf %1396, %1398 : vector<1x8xf32>
    %cst_455 = arith.constant 0.000000e+00 : f32
    %1400 = vector.broadcast %cst_455 : f32 to vector<1x8xf32>
    %1401 = arith.maximumf %1399, %1400 : vector<1x8xf32>
    %1402 = vector.shape_cast %1401 : vector<1x8xf32> to vector<1x1x8xf32>
    %cst_456 = arith.constant 0.000000e+00 : f32
    %1403 = vector.broadcast %cst_456 : f32 to vector<1x8xf32>
    %c5_457 = arith.constant 5 : index
    %c0_458 = arith.constant 0 : index
    %1404 = memref.load %arg4[%c5_457, %c0_458] : memref<8x24xf32, #tpu.memory_space<smem>>
    %1405 = vector.extract_strided_slice %645 {offsets = [0, 0, 0], sizes = [1, 1, 8], strides = [1, 1, 1]} : vector<1x8x8xf32> to vector<1x1x8xf32>
    %1406 = vector.shape_cast %1405 : vector<1x1x8xf32> to vector<1x8xf32>
    %1407 = vector.broadcast %1404 : f32 to vector<1x8xf32>
    %1408 = arith.mulf %1407, %1406 : vector<1x8xf32>
    %1409 = arith.addf %1403, %1408 : vector<1x8xf32>
    %c5_459 = arith.constant 5 : index
    %c1_460 = arith.constant 1 : index
    %1410 = memref.load %arg4[%c5_459, %c1_460] : memref<8x24xf32, #tpu.memory_space<smem>>
    %1411 = vector.extract_strided_slice %642 {offsets = [0, 0, 0], sizes = [1, 1, 8], strides = [1, 1, 1]} : vector<1x8x8xf32> to vector<1x1x8xf32>
    %1412 = vector.shape_cast %1411 : vector<1x1x8xf32> to vector<1x8xf32>
    %1413 = vector.broadcast %1410 : f32 to vector<1x8xf32>
    %1414 = arith.mulf %1413, %1412 : vector<1x8xf32>
    %1415 = arith.addf %1409, %1414 : vector<1x8xf32>
    %c5_461 = arith.constant 5 : index
    %c2_462 = arith.constant 2 : index
    %1416 = memref.load %arg4[%c5_461, %c2_462] : memref<8x24xf32, #tpu.memory_space<smem>>
    %1417 = vector.extract_strided_slice %647 {offsets = [0, 0, 0], sizes = [1, 1, 8], strides = [1, 1, 1]} : vector<1x8x8xf32> to vector<1x1x8xf32>
    %1418 = vector.shape_cast %1417 : vector<1x1x8xf32> to vector<1x8xf32>
    %1419 = vector.broadcast %1416 : f32 to vector<1x8xf32>
    %1420 = arith.mulf %1419, %1418 : vector<1x8xf32>
    %1421 = arith.addf %1415, %1420 : vector<1x8xf32>
    %c5_463 = arith.constant 5 : index
    %c3_464 = arith.constant 3 : index
    %1422 = memref.load %arg4[%c5_463, %c3_464] : memref<8x24xf32, #tpu.memory_space<smem>>
    %1423 = vector.extract_strided_slice %645 {offsets = [0, 1, 0], sizes = [1, 1, 8], strides = [1, 1, 1]} : vector<1x8x8xf32> to vector<1x1x8xf32>
    %1424 = vector.shape_cast %1423 : vector<1x1x8xf32> to vector<1x8xf32>
    %1425 = vector.broadcast %1422 : f32 to vector<1x8xf32>
    %1426 = arith.mulf %1425, %1424 : vector<1x8xf32>
    %1427 = arith.addf %1421, %1426 : vector<1x8xf32>
    %c5_465 = arith.constant 5 : index
    %c4_466 = arith.constant 4 : index
    %1428 = memref.load %arg4[%c5_465, %c4_466] : memref<8x24xf32, #tpu.memory_space<smem>>
    %1429 = vector.extract_strided_slice %642 {offsets = [0, 1, 0], sizes = [1, 1, 8], strides = [1, 1, 1]} : vector<1x8x8xf32> to vector<1x1x8xf32>
    %1430 = vector.shape_cast %1429 : vector<1x1x8xf32> to vector<1x8xf32>
    %1431 = vector.broadcast %1428 : f32 to vector<1x8xf32>
    %1432 = arith.mulf %1431, %1430 : vector<1x8xf32>
    %1433 = arith.addf %1427, %1432 : vector<1x8xf32>
    %c5_467 = arith.constant 5 : index
    %c5_468 = arith.constant 5 : index
    %1434 = memref.load %arg4[%c5_467, %c5_468] : memref<8x24xf32, #tpu.memory_space<smem>>
    %1435 = vector.extract_strided_slice %647 {offsets = [0, 1, 0], sizes = [1, 1, 8], strides = [1, 1, 1]} : vector<1x8x8xf32> to vector<1x1x8xf32>
    %1436 = vector.shape_cast %1435 : vector<1x1x8xf32> to vector<1x8xf32>
    %1437 = vector.broadcast %1434 : f32 to vector<1x8xf32>
    %1438 = arith.mulf %1437, %1436 : vector<1x8xf32>
    %1439 = arith.addf %1433, %1438 : vector<1x8xf32>
    %c5_469 = arith.constant 5 : index
    %c6_470 = arith.constant 6 : index
    %1440 = memref.load %arg4[%c5_469, %c6_470] : memref<8x24xf32, #tpu.memory_space<smem>>
    %1441 = vector.extract_strided_slice %645 {offsets = [0, 2, 0], sizes = [1, 1, 8], strides = [1, 1, 1]} : vector<1x8x8xf32> to vector<1x1x8xf32>
    %1442 = vector.shape_cast %1441 : vector<1x1x8xf32> to vector<1x8xf32>
    %1443 = vector.broadcast %1440 : f32 to vector<1x8xf32>
    %1444 = arith.mulf %1443, %1442 : vector<1x8xf32>
    %1445 = arith.addf %1439, %1444 : vector<1x8xf32>
    %c5_471 = arith.constant 5 : index
    %c7_472 = arith.constant 7 : index
    %1446 = memref.load %arg4[%c5_471, %c7_472] : memref<8x24xf32, #tpu.memory_space<smem>>
    %1447 = vector.extract_strided_slice %642 {offsets = [0, 2, 0], sizes = [1, 1, 8], strides = [1, 1, 1]} : vector<1x8x8xf32> to vector<1x1x8xf32>
    %1448 = vector.shape_cast %1447 : vector<1x1x8xf32> to vector<1x8xf32>
    %1449 = vector.broadcast %1446 : f32 to vector<1x8xf32>
    %1450 = arith.mulf %1449, %1448 : vector<1x8xf32>
    %1451 = arith.addf %1445, %1450 : vector<1x8xf32>
    %c5_473 = arith.constant 5 : index
    %c8_474 = arith.constant 8 : index
    %1452 = memref.load %arg4[%c5_473, %c8_474] : memref<8x24xf32, #tpu.memory_space<smem>>
    %1453 = vector.extract_strided_slice %647 {offsets = [0, 2, 0], sizes = [1, 1, 8], strides = [1, 1, 1]} : vector<1x8x8xf32> to vector<1x1x8xf32>
    %1454 = vector.shape_cast %1453 : vector<1x1x8xf32> to vector<1x8xf32>
    %1455 = vector.broadcast %1452 : f32 to vector<1x8xf32>
    %1456 = arith.mulf %1455, %1454 : vector<1x8xf32>
    %1457 = arith.addf %1451, %1456 : vector<1x8xf32>
    %c5_475 = arith.constant 5 : index
    %c9_476 = arith.constant 9 : index
    %1458 = memref.load %arg4[%c5_475, %c9_476] : memref<8x24xf32, #tpu.memory_space<smem>>
    %1459 = vector.extract_strided_slice %645 {offsets = [0, 3, 0], sizes = [1, 1, 8], strides = [1, 1, 1]} : vector<1x8x8xf32> to vector<1x1x8xf32>
    %1460 = vector.shape_cast %1459 : vector<1x1x8xf32> to vector<1x8xf32>
    %1461 = vector.broadcast %1458 : f32 to vector<1x8xf32>
    %1462 = arith.mulf %1461, %1460 : vector<1x8xf32>
    %1463 = arith.addf %1457, %1462 : vector<1x8xf32>
    %c5_477 = arith.constant 5 : index
    %c10_478 = arith.constant 10 : index
    %1464 = memref.load %arg4[%c5_477, %c10_478] : memref<8x24xf32, #tpu.memory_space<smem>>
    %1465 = vector.extract_strided_slice %642 {offsets = [0, 3, 0], sizes = [1, 1, 8], strides = [1, 1, 1]} : vector<1x8x8xf32> to vector<1x1x8xf32>
    %1466 = vector.shape_cast %1465 : vector<1x1x8xf32> to vector<1x8xf32>
    %1467 = vector.broadcast %1464 : f32 to vector<1x8xf32>
    %1468 = arith.mulf %1467, %1466 : vector<1x8xf32>
    %1469 = arith.addf %1463, %1468 : vector<1x8xf32>
    %c5_479 = arith.constant 5 : index
    %c11_480 = arith.constant 11 : index
    %1470 = memref.load %arg4[%c5_479, %c11_480] : memref<8x24xf32, #tpu.memory_space<smem>>
    %1471 = vector.extract_strided_slice %647 {offsets = [0, 3, 0], sizes = [1, 1, 8], strides = [1, 1, 1]} : vector<1x8x8xf32> to vector<1x1x8xf32>
    %1472 = vector.shape_cast %1471 : vector<1x1x8xf32> to vector<1x8xf32>
    %1473 = vector.broadcast %1470 : f32 to vector<1x8xf32>
    %1474 = arith.mulf %1473, %1472 : vector<1x8xf32>
    %1475 = arith.addf %1469, %1474 : vector<1x8xf32>
    %c5_481 = arith.constant 5 : index
    %c12_482 = arith.constant 12 : index
    %1476 = memref.load %arg4[%c5_481, %c12_482] : memref<8x24xf32, #tpu.memory_space<smem>>
    %1477 = vector.extract_strided_slice %645 {offsets = [0, 4, 0], sizes = [1, 1, 8], strides = [1, 1, 1]} : vector<1x8x8xf32> to vector<1x1x8xf32>
    %1478 = vector.shape_cast %1477 : vector<1x1x8xf32> to vector<1x8xf32>
    %1479 = vector.broadcast %1476 : f32 to vector<1x8xf32>
    %1480 = arith.mulf %1479, %1478 : vector<1x8xf32>
    %1481 = arith.addf %1475, %1480 : vector<1x8xf32>
    %c5_483 = arith.constant 5 : index
    %c13_484 = arith.constant 13 : index
    %1482 = memref.load %arg4[%c5_483, %c13_484] : memref<8x24xf32, #tpu.memory_space<smem>>
    %1483 = vector.extract_strided_slice %642 {offsets = [0, 4, 0], sizes = [1, 1, 8], strides = [1, 1, 1]} : vector<1x8x8xf32> to vector<1x1x8xf32>
    %1484 = vector.shape_cast %1483 : vector<1x1x8xf32> to vector<1x8xf32>
    %1485 = vector.broadcast %1482 : f32 to vector<1x8xf32>
    %1486 = arith.mulf %1485, %1484 : vector<1x8xf32>
    %1487 = arith.addf %1481, %1486 : vector<1x8xf32>
    %c5_485 = arith.constant 5 : index
    %c14_486 = arith.constant 14 : index
    %1488 = memref.load %arg4[%c5_485, %c14_486] : memref<8x24xf32, #tpu.memory_space<smem>>
    %1489 = vector.extract_strided_slice %647 {offsets = [0, 4, 0], sizes = [1, 1, 8], strides = [1, 1, 1]} : vector<1x8x8xf32> to vector<1x1x8xf32>
    %1490 = vector.shape_cast %1489 : vector<1x1x8xf32> to vector<1x8xf32>
    %1491 = vector.broadcast %1488 : f32 to vector<1x8xf32>
    %1492 = arith.mulf %1491, %1490 : vector<1x8xf32>
    %1493 = arith.addf %1487, %1492 : vector<1x8xf32>
    %c5_487 = arith.constant 5 : index
    %c15_488 = arith.constant 15 : index
    %1494 = memref.load %arg4[%c5_487, %c15_488] : memref<8x24xf32, #tpu.memory_space<smem>>
    %1495 = vector.extract_strided_slice %645 {offsets = [0, 5, 0], sizes = [1, 1, 8], strides = [1, 1, 1]} : vector<1x8x8xf32> to vector<1x1x8xf32>
    %1496 = vector.shape_cast %1495 : vector<1x1x8xf32> to vector<1x8xf32>
    %1497 = vector.broadcast %1494 : f32 to vector<1x8xf32>
    %1498 = arith.mulf %1497, %1496 : vector<1x8xf32>
    %1499 = arith.addf %1493, %1498 : vector<1x8xf32>
    %c5_489 = arith.constant 5 : index
    %c16_490 = arith.constant 16 : index
    %1500 = memref.load %arg4[%c5_489, %c16_490] : memref<8x24xf32, #tpu.memory_space<smem>>
    %1501 = vector.extract_strided_slice %642 {offsets = [0, 5, 0], sizes = [1, 1, 8], strides = [1, 1, 1]} : vector<1x8x8xf32> to vector<1x1x8xf32>
    %1502 = vector.shape_cast %1501 : vector<1x1x8xf32> to vector<1x8xf32>
    %1503 = vector.broadcast %1500 : f32 to vector<1x8xf32>
    %1504 = arith.mulf %1503, %1502 : vector<1x8xf32>
    %1505 = arith.addf %1499, %1504 : vector<1x8xf32>
    %c5_491 = arith.constant 5 : index
    %c17_492 = arith.constant 17 : index
    %1506 = memref.load %arg4[%c5_491, %c17_492] : memref<8x24xf32, #tpu.memory_space<smem>>
    %1507 = vector.extract_strided_slice %647 {offsets = [0, 5, 0], sizes = [1, 1, 8], strides = [1, 1, 1]} : vector<1x8x8xf32> to vector<1x1x8xf32>
    %1508 = vector.shape_cast %1507 : vector<1x1x8xf32> to vector<1x8xf32>
    %1509 = vector.broadcast %1506 : f32 to vector<1x8xf32>
    %1510 = arith.mulf %1509, %1508 : vector<1x8xf32>
    %1511 = arith.addf %1505, %1510 : vector<1x8xf32>
    %c5_493 = arith.constant 5 : index
    %c18_494 = arith.constant 18 : index
    %1512 = memref.load %arg4[%c5_493, %c18_494] : memref<8x24xf32, #tpu.memory_space<smem>>
    %1513 = vector.extract_strided_slice %645 {offsets = [0, 6, 0], sizes = [1, 1, 8], strides = [1, 1, 1]} : vector<1x8x8xf32> to vector<1x1x8xf32>
    %1514 = vector.shape_cast %1513 : vector<1x1x8xf32> to vector<1x8xf32>
    %1515 = vector.broadcast %1512 : f32 to vector<1x8xf32>
    %1516 = arith.mulf %1515, %1514 : vector<1x8xf32>
    %1517 = arith.addf %1511, %1516 : vector<1x8xf32>
    %c5_495 = arith.constant 5 : index
    %c19_496 = arith.constant 19 : index
    %1518 = memref.load %arg4[%c5_495, %c19_496] : memref<8x24xf32, #tpu.memory_space<smem>>
    %1519 = vector.extract_strided_slice %642 {offsets = [0, 6, 0], sizes = [1, 1, 8], strides = [1, 1, 1]} : vector<1x8x8xf32> to vector<1x1x8xf32>
    %1520 = vector.shape_cast %1519 : vector<1x1x8xf32> to vector<1x8xf32>
    %1521 = vector.broadcast %1518 : f32 to vector<1x8xf32>
    %1522 = arith.mulf %1521, %1520 : vector<1x8xf32>
    %1523 = arith.addf %1517, %1522 : vector<1x8xf32>
    %c5_497 = arith.constant 5 : index
    %c20_498 = arith.constant 20 : index
    %1524 = memref.load %arg4[%c5_497, %c20_498] : memref<8x24xf32, #tpu.memory_space<smem>>
    %1525 = vector.extract_strided_slice %647 {offsets = [0, 6, 0], sizes = [1, 1, 8], strides = [1, 1, 1]} : vector<1x8x8xf32> to vector<1x1x8xf32>
    %1526 = vector.shape_cast %1525 : vector<1x1x8xf32> to vector<1x8xf32>
    %1527 = vector.broadcast %1524 : f32 to vector<1x8xf32>
    %1528 = arith.mulf %1527, %1526 : vector<1x8xf32>
    %1529 = arith.addf %1523, %1528 : vector<1x8xf32>
    %c5_499 = arith.constant 5 : index
    %c21_500 = arith.constant 21 : index
    %1530 = memref.load %arg4[%c5_499, %c21_500] : memref<8x24xf32, #tpu.memory_space<smem>>
    %1531 = vector.extract_strided_slice %645 {offsets = [0, 7, 0], sizes = [1, 1, 8], strides = [1, 1, 1]} : vector<1x8x8xf32> to vector<1x1x8xf32>
    %1532 = vector.shape_cast %1531 : vector<1x1x8xf32> to vector<1x8xf32>
    %1533 = vector.broadcast %1530 : f32 to vector<1x8xf32>
    %1534 = arith.mulf %1533, %1532 : vector<1x8xf32>
    %1535 = arith.addf %1529, %1534 : vector<1x8xf32>
    %c5_501 = arith.constant 5 : index
    %c22_502 = arith.constant 22 : index
    %1536 = memref.load %arg4[%c5_501, %c22_502] : memref<8x24xf32, #tpu.memory_space<smem>>
    %1537 = vector.extract_strided_slice %642 {offsets = [0, 7, 0], sizes = [1, 1, 8], strides = [1, 1, 1]} : vector<1x8x8xf32> to vector<1x1x8xf32>
    %1538 = vector.shape_cast %1537 : vector<1x1x8xf32> to vector<1x8xf32>
    %1539 = vector.broadcast %1536 : f32 to vector<1x8xf32>
    %1540 = arith.mulf %1539, %1538 : vector<1x8xf32>
    %1541 = arith.addf %1535, %1540 : vector<1x8xf32>
    %c5_503 = arith.constant 5 : index
    %c23_504 = arith.constant 23 : index
    %1542 = memref.load %arg4[%c5_503, %c23_504] : memref<8x24xf32, #tpu.memory_space<smem>>
    %1543 = vector.extract_strided_slice %647 {offsets = [0, 7, 0], sizes = [1, 1, 8], strides = [1, 1, 1]} : vector<1x8x8xf32> to vector<1x1x8xf32>
    %1544 = vector.shape_cast %1543 : vector<1x1x8xf32> to vector<1x8xf32>
    %1545 = vector.broadcast %1542 : f32 to vector<1x8xf32>
    %1546 = arith.mulf %1545, %1544 : vector<1x8xf32>
    %1547 = arith.addf %1541, %1546 : vector<1x8xf32>
    %c5_505 = arith.constant 5 : index
    %1548 = memref.load %arg5[%c5_505] : memref<8xf32, #tpu.memory_space<smem>>
    %1549 = vector.broadcast %1548 : f32 to vector<1x8xf32>
    %1550 = arith.addf %1547, %1549 : vector<1x8xf32>
    %cst_506 = arith.constant 0.000000e+00 : f32
    %1551 = vector.broadcast %cst_506 : f32 to vector<1x8xf32>
    %1552 = arith.maximumf %1550, %1551 : vector<1x8xf32>
    %1553 = vector.shape_cast %1552 : vector<1x8xf32> to vector<1x1x8xf32>
    %cst_507 = arith.constant 0.000000e+00 : f32
    %1554 = vector.broadcast %cst_507 : f32 to vector<1x8xf32>
    %c6_508 = arith.constant 6 : index
    %c0_509 = arith.constant 0 : index
    %1555 = memref.load %arg4[%c6_508, %c0_509] : memref<8x24xf32, #tpu.memory_space<smem>>
    %1556 = vector.extract_strided_slice %645 {offsets = [0, 0, 0], sizes = [1, 1, 8], strides = [1, 1, 1]} : vector<1x8x8xf32> to vector<1x1x8xf32>
    %1557 = vector.shape_cast %1556 : vector<1x1x8xf32> to vector<1x8xf32>
    %1558 = vector.broadcast %1555 : f32 to vector<1x8xf32>
    %1559 = arith.mulf %1558, %1557 : vector<1x8xf32>
    %1560 = arith.addf %1554, %1559 : vector<1x8xf32>
    %c6_510 = arith.constant 6 : index
    %c1_511 = arith.constant 1 : index
    %1561 = memref.load %arg4[%c6_510, %c1_511] : memref<8x24xf32, #tpu.memory_space<smem>>
    %1562 = vector.extract_strided_slice %642 {offsets = [0, 0, 0], sizes = [1, 1, 8], strides = [1, 1, 1]} : vector<1x8x8xf32> to vector<1x1x8xf32>
    %1563 = vector.shape_cast %1562 : vector<1x1x8xf32> to vector<1x8xf32>
    %1564 = vector.broadcast %1561 : f32 to vector<1x8xf32>
    %1565 = arith.mulf %1564, %1563 : vector<1x8xf32>
    %1566 = arith.addf %1560, %1565 : vector<1x8xf32>
    %c6_512 = arith.constant 6 : index
    %c2_513 = arith.constant 2 : index
    %1567 = memref.load %arg4[%c6_512, %c2_513] : memref<8x24xf32, #tpu.memory_space<smem>>
    %1568 = vector.extract_strided_slice %647 {offsets = [0, 0, 0], sizes = [1, 1, 8], strides = [1, 1, 1]} : vector<1x8x8xf32> to vector<1x1x8xf32>
    %1569 = vector.shape_cast %1568 : vector<1x1x8xf32> to vector<1x8xf32>
    %1570 = vector.broadcast %1567 : f32 to vector<1x8xf32>
    %1571 = arith.mulf %1570, %1569 : vector<1x8xf32>
    %1572 = arith.addf %1566, %1571 : vector<1x8xf32>
    %c6_514 = arith.constant 6 : index
    %c3_515 = arith.constant 3 : index
    %1573 = memref.load %arg4[%c6_514, %c3_515] : memref<8x24xf32, #tpu.memory_space<smem>>
    %1574 = vector.extract_strided_slice %645 {offsets = [0, 1, 0], sizes = [1, 1, 8], strides = [1, 1, 1]} : vector<1x8x8xf32> to vector<1x1x8xf32>
    %1575 = vector.shape_cast %1574 : vector<1x1x8xf32> to vector<1x8xf32>
    %1576 = vector.broadcast %1573 : f32 to vector<1x8xf32>
    %1577 = arith.mulf %1576, %1575 : vector<1x8xf32>
    %1578 = arith.addf %1572, %1577 : vector<1x8xf32>
    %c6_516 = arith.constant 6 : index
    %c4_517 = arith.constant 4 : index
    %1579 = memref.load %arg4[%c6_516, %c4_517] : memref<8x24xf32, #tpu.memory_space<smem>>
    %1580 = vector.extract_strided_slice %642 {offsets = [0, 1, 0], sizes = [1, 1, 8], strides = [1, 1, 1]} : vector<1x8x8xf32> to vector<1x1x8xf32>
    %1581 = vector.shape_cast %1580 : vector<1x1x8xf32> to vector<1x8xf32>
    %1582 = vector.broadcast %1579 : f32 to vector<1x8xf32>
    %1583 = arith.mulf %1582, %1581 : vector<1x8xf32>
    %1584 = arith.addf %1578, %1583 : vector<1x8xf32>
    %c6_518 = arith.constant 6 : index
    %c5_519 = arith.constant 5 : index
    %1585 = memref.load %arg4[%c6_518, %c5_519] : memref<8x24xf32, #tpu.memory_space<smem>>
    %1586 = vector.extract_strided_slice %647 {offsets = [0, 1, 0], sizes = [1, 1, 8], strides = [1, 1, 1]} : vector<1x8x8xf32> to vector<1x1x8xf32>
    %1587 = vector.shape_cast %1586 : vector<1x1x8xf32> to vector<1x8xf32>
    %1588 = vector.broadcast %1585 : f32 to vector<1x8xf32>
    %1589 = arith.mulf %1588, %1587 : vector<1x8xf32>
    %1590 = arith.addf %1584, %1589 : vector<1x8xf32>
    %c6_520 = arith.constant 6 : index
    %c6_521 = arith.constant 6 : index
    %1591 = memref.load %arg4[%c6_520, %c6_521] : memref<8x24xf32, #tpu.memory_space<smem>>
    %1592 = vector.extract_strided_slice %645 {offsets = [0, 2, 0], sizes = [1, 1, 8], strides = [1, 1, 1]} : vector<1x8x8xf32> to vector<1x1x8xf32>
    %1593 = vector.shape_cast %1592 : vector<1x1x8xf32> to vector<1x8xf32>
    %1594 = vector.broadcast %1591 : f32 to vector<1x8xf32>
    %1595 = arith.mulf %1594, %1593 : vector<1x8xf32>
    %1596 = arith.addf %1590, %1595 : vector<1x8xf32>
    %c6_522 = arith.constant 6 : index
    %c7_523 = arith.constant 7 : index
    %1597 = memref.load %arg4[%c6_522, %c7_523] : memref<8x24xf32, #tpu.memory_space<smem>>
    %1598 = vector.extract_strided_slice %642 {offsets = [0, 2, 0], sizes = [1, 1, 8], strides = [1, 1, 1]} : vector<1x8x8xf32> to vector<1x1x8xf32>
    %1599 = vector.shape_cast %1598 : vector<1x1x8xf32> to vector<1x8xf32>
    %1600 = vector.broadcast %1597 : f32 to vector<1x8xf32>
    %1601 = arith.mulf %1600, %1599 : vector<1x8xf32>
    %1602 = arith.addf %1596, %1601 : vector<1x8xf32>
    %c6_524 = arith.constant 6 : index
    %c8_525 = arith.constant 8 : index
    %1603 = memref.load %arg4[%c6_524, %c8_525] : memref<8x24xf32, #tpu.memory_space<smem>>
    %1604 = vector.extract_strided_slice %647 {offsets = [0, 2, 0], sizes = [1, 1, 8], strides = [1, 1, 1]} : vector<1x8x8xf32> to vector<1x1x8xf32>
    %1605 = vector.shape_cast %1604 : vector<1x1x8xf32> to vector<1x8xf32>
    %1606 = vector.broadcast %1603 : f32 to vector<1x8xf32>
    %1607 = arith.mulf %1606, %1605 : vector<1x8xf32>
    %1608 = arith.addf %1602, %1607 : vector<1x8xf32>
    %c6_526 = arith.constant 6 : index
    %c9_527 = arith.constant 9 : index
    %1609 = memref.load %arg4[%c6_526, %c9_527] : memref<8x24xf32, #tpu.memory_space<smem>>
    %1610 = vector.extract_strided_slice %645 {offsets = [0, 3, 0], sizes = [1, 1, 8], strides = [1, 1, 1]} : vector<1x8x8xf32> to vector<1x1x8xf32>
    %1611 = vector.shape_cast %1610 : vector<1x1x8xf32> to vector<1x8xf32>
    %1612 = vector.broadcast %1609 : f32 to vector<1x8xf32>
    %1613 = arith.mulf %1612, %1611 : vector<1x8xf32>
    %1614 = arith.addf %1608, %1613 : vector<1x8xf32>
    %c6_528 = arith.constant 6 : index
    %c10_529 = arith.constant 10 : index
    %1615 = memref.load %arg4[%c6_528, %c10_529] : memref<8x24xf32, #tpu.memory_space<smem>>
    %1616 = vector.extract_strided_slice %642 {offsets = [0, 3, 0], sizes = [1, 1, 8], strides = [1, 1, 1]} : vector<1x8x8xf32> to vector<1x1x8xf32>
    %1617 = vector.shape_cast %1616 : vector<1x1x8xf32> to vector<1x8xf32>
    %1618 = vector.broadcast %1615 : f32 to vector<1x8xf32>
    %1619 = arith.mulf %1618, %1617 : vector<1x8xf32>
    %1620 = arith.addf %1614, %1619 : vector<1x8xf32>
    %c6_530 = arith.constant 6 : index
    %c11_531 = arith.constant 11 : index
    %1621 = memref.load %arg4[%c6_530, %c11_531] : memref<8x24xf32, #tpu.memory_space<smem>>
    %1622 = vector.extract_strided_slice %647 {offsets = [0, 3, 0], sizes = [1, 1, 8], strides = [1, 1, 1]} : vector<1x8x8xf32> to vector<1x1x8xf32>
    %1623 = vector.shape_cast %1622 : vector<1x1x8xf32> to vector<1x8xf32>
    %1624 = vector.broadcast %1621 : f32 to vector<1x8xf32>
    %1625 = arith.mulf %1624, %1623 : vector<1x8xf32>
    %1626 = arith.addf %1620, %1625 : vector<1x8xf32>
    %c6_532 = arith.constant 6 : index
    %c12_533 = arith.constant 12 : index
    %1627 = memref.load %arg4[%c6_532, %c12_533] : memref<8x24xf32, #tpu.memory_space<smem>>
    %1628 = vector.extract_strided_slice %645 {offsets = [0, 4, 0], sizes = [1, 1, 8], strides = [1, 1, 1]} : vector<1x8x8xf32> to vector<1x1x8xf32>
    %1629 = vector.shape_cast %1628 : vector<1x1x8xf32> to vector<1x8xf32>
    %1630 = vector.broadcast %1627 : f32 to vector<1x8xf32>
    %1631 = arith.mulf %1630, %1629 : vector<1x8xf32>
    %1632 = arith.addf %1626, %1631 : vector<1x8xf32>
    %c6_534 = arith.constant 6 : index
    %c13_535 = arith.constant 13 : index
    %1633 = memref.load %arg4[%c6_534, %c13_535] : memref<8x24xf32, #tpu.memory_space<smem>>
    %1634 = vector.extract_strided_slice %642 {offsets = [0, 4, 0], sizes = [1, 1, 8], strides = [1, 1, 1]} : vector<1x8x8xf32> to vector<1x1x8xf32>
    %1635 = vector.shape_cast %1634 : vector<1x1x8xf32> to vector<1x8xf32>
    %1636 = vector.broadcast %1633 : f32 to vector<1x8xf32>
    %1637 = arith.mulf %1636, %1635 : vector<1x8xf32>
    %1638 = arith.addf %1632, %1637 : vector<1x8xf32>
    %c6_536 = arith.constant 6 : index
    %c14_537 = arith.constant 14 : index
    %1639 = memref.load %arg4[%c6_536, %c14_537] : memref<8x24xf32, #tpu.memory_space<smem>>
    %1640 = vector.extract_strided_slice %647 {offsets = [0, 4, 0], sizes = [1, 1, 8], strides = [1, 1, 1]} : vector<1x8x8xf32> to vector<1x1x8xf32>
    %1641 = vector.shape_cast %1640 : vector<1x1x8xf32> to vector<1x8xf32>
    %1642 = vector.broadcast %1639 : f32 to vector<1x8xf32>
    %1643 = arith.mulf %1642, %1641 : vector<1x8xf32>
    %1644 = arith.addf %1638, %1643 : vector<1x8xf32>
    %c6_538 = arith.constant 6 : index
    %c15_539 = arith.constant 15 : index
    %1645 = memref.load %arg4[%c6_538, %c15_539] : memref<8x24xf32, #tpu.memory_space<smem>>
    %1646 = vector.extract_strided_slice %645 {offsets = [0, 5, 0], sizes = [1, 1, 8], strides = [1, 1, 1]} : vector<1x8x8xf32> to vector<1x1x8xf32>
    %1647 = vector.shape_cast %1646 : vector<1x1x8xf32> to vector<1x8xf32>
    %1648 = vector.broadcast %1645 : f32 to vector<1x8xf32>
    %1649 = arith.mulf %1648, %1647 : vector<1x8xf32>
    %1650 = arith.addf %1644, %1649 : vector<1x8xf32>
    %c6_540 = arith.constant 6 : index
    %c16_541 = arith.constant 16 : index
    %1651 = memref.load %arg4[%c6_540, %c16_541] : memref<8x24xf32, #tpu.memory_space<smem>>
    %1652 = vector.extract_strided_slice %642 {offsets = [0, 5, 0], sizes = [1, 1, 8], strides = [1, 1, 1]} : vector<1x8x8xf32> to vector<1x1x8xf32>
    %1653 = vector.shape_cast %1652 : vector<1x1x8xf32> to vector<1x8xf32>
    %1654 = vector.broadcast %1651 : f32 to vector<1x8xf32>
    %1655 = arith.mulf %1654, %1653 : vector<1x8xf32>
    %1656 = arith.addf %1650, %1655 : vector<1x8xf32>
    %c6_542 = arith.constant 6 : index
    %c17_543 = arith.constant 17 : index
    %1657 = memref.load %arg4[%c6_542, %c17_543] : memref<8x24xf32, #tpu.memory_space<smem>>
    %1658 = vector.extract_strided_slice %647 {offsets = [0, 5, 0], sizes = [1, 1, 8], strides = [1, 1, 1]} : vector<1x8x8xf32> to vector<1x1x8xf32>
    %1659 = vector.shape_cast %1658 : vector<1x1x8xf32> to vector<1x8xf32>
    %1660 = vector.broadcast %1657 : f32 to vector<1x8xf32>
    %1661 = arith.mulf %1660, %1659 : vector<1x8xf32>
    %1662 = arith.addf %1656, %1661 : vector<1x8xf32>
    %c6_544 = arith.constant 6 : index
    %c18_545 = arith.constant 18 : index
    %1663 = memref.load %arg4[%c6_544, %c18_545] : memref<8x24xf32, #tpu.memory_space<smem>>
    %1664 = vector.extract_strided_slice %645 {offsets = [0, 6, 0], sizes = [1, 1, 8], strides = [1, 1, 1]} : vector<1x8x8xf32> to vector<1x1x8xf32>
    %1665 = vector.shape_cast %1664 : vector<1x1x8xf32> to vector<1x8xf32>
    %1666 = vector.broadcast %1663 : f32 to vector<1x8xf32>
    %1667 = arith.mulf %1666, %1665 : vector<1x8xf32>
    %1668 = arith.addf %1662, %1667 : vector<1x8xf32>
    %c6_546 = arith.constant 6 : index
    %c19_547 = arith.constant 19 : index
    %1669 = memref.load %arg4[%c6_546, %c19_547] : memref<8x24xf32, #tpu.memory_space<smem>>
    %1670 = vector.extract_strided_slice %642 {offsets = [0, 6, 0], sizes = [1, 1, 8], strides = [1, 1, 1]} : vector<1x8x8xf32> to vector<1x1x8xf32>
    %1671 = vector.shape_cast %1670 : vector<1x1x8xf32> to vector<1x8xf32>
    %1672 = vector.broadcast %1669 : f32 to vector<1x8xf32>
    %1673 = arith.mulf %1672, %1671 : vector<1x8xf32>
    %1674 = arith.addf %1668, %1673 : vector<1x8xf32>
    %c6_548 = arith.constant 6 : index
    %c20_549 = arith.constant 20 : index
    %1675 = memref.load %arg4[%c6_548, %c20_549] : memref<8x24xf32, #tpu.memory_space<smem>>
    %1676 = vector.extract_strided_slice %647 {offsets = [0, 6, 0], sizes = [1, 1, 8], strides = [1, 1, 1]} : vector<1x8x8xf32> to vector<1x1x8xf32>
    %1677 = vector.shape_cast %1676 : vector<1x1x8xf32> to vector<1x8xf32>
    %1678 = vector.broadcast %1675 : f32 to vector<1x8xf32>
    %1679 = arith.mulf %1678, %1677 : vector<1x8xf32>
    %1680 = arith.addf %1674, %1679 : vector<1x8xf32>
    %c6_550 = arith.constant 6 : index
    %c21_551 = arith.constant 21 : index
    %1681 = memref.load %arg4[%c6_550, %c21_551] : memref<8x24xf32, #tpu.memory_space<smem>>
    %1682 = vector.extract_strided_slice %645 {offsets = [0, 7, 0], sizes = [1, 1, 8], strides = [1, 1, 1]} : vector<1x8x8xf32> to vector<1x1x8xf32>
    %1683 = vector.shape_cast %1682 : vector<1x1x8xf32> to vector<1x8xf32>
    %1684 = vector.broadcast %1681 : f32 to vector<1x8xf32>
    %1685 = arith.mulf %1684, %1683 : vector<1x8xf32>
    %1686 = arith.addf %1680, %1685 : vector<1x8xf32>
    %c6_552 = arith.constant 6 : index
    %c22_553 = arith.constant 22 : index
    %1687 = memref.load %arg4[%c6_552, %c22_553] : memref<8x24xf32, #tpu.memory_space<smem>>
    %1688 = vector.extract_strided_slice %642 {offsets = [0, 7, 0], sizes = [1, 1, 8], strides = [1, 1, 1]} : vector<1x8x8xf32> to vector<1x1x8xf32>
    %1689 = vector.shape_cast %1688 : vector<1x1x8xf32> to vector<1x8xf32>
    %1690 = vector.broadcast %1687 : f32 to vector<1x8xf32>
    %1691 = arith.mulf %1690, %1689 : vector<1x8xf32>
    %1692 = arith.addf %1686, %1691 : vector<1x8xf32>
    %c6_554 = arith.constant 6 : index
    %c23_555 = arith.constant 23 : index
    %1693 = memref.load %arg4[%c6_554, %c23_555] : memref<8x24xf32, #tpu.memory_space<smem>>
    %1694 = vector.extract_strided_slice %647 {offsets = [0, 7, 0], sizes = [1, 1, 8], strides = [1, 1, 1]} : vector<1x8x8xf32> to vector<1x1x8xf32>
    %1695 = vector.shape_cast %1694 : vector<1x1x8xf32> to vector<1x8xf32>
    %1696 = vector.broadcast %1693 : f32 to vector<1x8xf32>
    %1697 = arith.mulf %1696, %1695 : vector<1x8xf32>
    %1698 = arith.addf %1692, %1697 : vector<1x8xf32>
    %c6_556 = arith.constant 6 : index
    %1699 = memref.load %arg5[%c6_556] : memref<8xf32, #tpu.memory_space<smem>>
    %1700 = vector.broadcast %1699 : f32 to vector<1x8xf32>
    %1701 = arith.addf %1698, %1700 : vector<1x8xf32>
    %cst_557 = arith.constant 0.000000e+00 : f32
    %1702 = vector.broadcast %cst_557 : f32 to vector<1x8xf32>
    %1703 = arith.maximumf %1701, %1702 : vector<1x8xf32>
    %1704 = vector.shape_cast %1703 : vector<1x8xf32> to vector<1x1x8xf32>
    %cst_558 = arith.constant 0.000000e+00 : f32
    %1705 = vector.broadcast %cst_558 : f32 to vector<1x8xf32>
    %c7_559 = arith.constant 7 : index
    %c0_560 = arith.constant 0 : index
    %1706 = memref.load %arg4[%c7_559, %c0_560] : memref<8x24xf32, #tpu.memory_space<smem>>
    %1707 = vector.extract_strided_slice %645 {offsets = [0, 0, 0], sizes = [1, 1, 8], strides = [1, 1, 1]} : vector<1x8x8xf32> to vector<1x1x8xf32>
    %1708 = vector.shape_cast %1707 : vector<1x1x8xf32> to vector<1x8xf32>
    %1709 = vector.broadcast %1706 : f32 to vector<1x8xf32>
    %1710 = arith.mulf %1709, %1708 : vector<1x8xf32>
    %1711 = arith.addf %1705, %1710 : vector<1x8xf32>
    %c7_561 = arith.constant 7 : index
    %c1_562 = arith.constant 1 : index
    %1712 = memref.load %arg4[%c7_561, %c1_562] : memref<8x24xf32, #tpu.memory_space<smem>>
    %1713 = vector.extract_strided_slice %642 {offsets = [0, 0, 0], sizes = [1, 1, 8], strides = [1, 1, 1]} : vector<1x8x8xf32> to vector<1x1x8xf32>
    %1714 = vector.shape_cast %1713 : vector<1x1x8xf32> to vector<1x8xf32>
    %1715 = vector.broadcast %1712 : f32 to vector<1x8xf32>
    %1716 = arith.mulf %1715, %1714 : vector<1x8xf32>
    %1717 = arith.addf %1711, %1716 : vector<1x8xf32>
    %c7_563 = arith.constant 7 : index
    %c2_564 = arith.constant 2 : index
    %1718 = memref.load %arg4[%c7_563, %c2_564] : memref<8x24xf32, #tpu.memory_space<smem>>
    %1719 = vector.extract_strided_slice %647 {offsets = [0, 0, 0], sizes = [1, 1, 8], strides = [1, 1, 1]} : vector<1x8x8xf32> to vector<1x1x8xf32>
    %1720 = vector.shape_cast %1719 : vector<1x1x8xf32> to vector<1x8xf32>
    %1721 = vector.broadcast %1718 : f32 to vector<1x8xf32>
    %1722 = arith.mulf %1721, %1720 : vector<1x8xf32>
    %1723 = arith.addf %1717, %1722 : vector<1x8xf32>
    %c7_565 = arith.constant 7 : index
    %c3_566 = arith.constant 3 : index
    %1724 = memref.load %arg4[%c7_565, %c3_566] : memref<8x24xf32, #tpu.memory_space<smem>>
    %1725 = vector.extract_strided_slice %645 {offsets = [0, 1, 0], sizes = [1, 1, 8], strides = [1, 1, 1]} : vector<1x8x8xf32> to vector<1x1x8xf32>
    %1726 = vector.shape_cast %1725 : vector<1x1x8xf32> to vector<1x8xf32>
    %1727 = vector.broadcast %1724 : f32 to vector<1x8xf32>
    %1728 = arith.mulf %1727, %1726 : vector<1x8xf32>
    %1729 = arith.addf %1723, %1728 : vector<1x8xf32>
    %c7_567 = arith.constant 7 : index
    %c4_568 = arith.constant 4 : index
    %1730 = memref.load %arg4[%c7_567, %c4_568] : memref<8x24xf32, #tpu.memory_space<smem>>
    %1731 = vector.extract_strided_slice %642 {offsets = [0, 1, 0], sizes = [1, 1, 8], strides = [1, 1, 1]} : vector<1x8x8xf32> to vector<1x1x8xf32>
    %1732 = vector.shape_cast %1731 : vector<1x1x8xf32> to vector<1x8xf32>
    %1733 = vector.broadcast %1730 : f32 to vector<1x8xf32>
    %1734 = arith.mulf %1733, %1732 : vector<1x8xf32>
    %1735 = arith.addf %1729, %1734 : vector<1x8xf32>
    %c7_569 = arith.constant 7 : index
    %c5_570 = arith.constant 5 : index
    %1736 = memref.load %arg4[%c7_569, %c5_570] : memref<8x24xf32, #tpu.memory_space<smem>>
    %1737 = vector.extract_strided_slice %647 {offsets = [0, 1, 0], sizes = [1, 1, 8], strides = [1, 1, 1]} : vector<1x8x8xf32> to vector<1x1x8xf32>
    %1738 = vector.shape_cast %1737 : vector<1x1x8xf32> to vector<1x8xf32>
    %1739 = vector.broadcast %1736 : f32 to vector<1x8xf32>
    %1740 = arith.mulf %1739, %1738 : vector<1x8xf32>
    %1741 = arith.addf %1735, %1740 : vector<1x8xf32>
    %c7_571 = arith.constant 7 : index
    %c6_572 = arith.constant 6 : index
    %1742 = memref.load %arg4[%c7_571, %c6_572] : memref<8x24xf32, #tpu.memory_space<smem>>
    %1743 = vector.extract_strided_slice %645 {offsets = [0, 2, 0], sizes = [1, 1, 8], strides = [1, 1, 1]} : vector<1x8x8xf32> to vector<1x1x8xf32>
    %1744 = vector.shape_cast %1743 : vector<1x1x8xf32> to vector<1x8xf32>
    %1745 = vector.broadcast %1742 : f32 to vector<1x8xf32>
    %1746 = arith.mulf %1745, %1744 : vector<1x8xf32>
    %1747 = arith.addf %1741, %1746 : vector<1x8xf32>
    %c7_573 = arith.constant 7 : index
    %c7_574 = arith.constant 7 : index
    %1748 = memref.load %arg4[%c7_573, %c7_574] : memref<8x24xf32, #tpu.memory_space<smem>>
    %1749 = vector.extract_strided_slice %642 {offsets = [0, 2, 0], sizes = [1, 1, 8], strides = [1, 1, 1]} : vector<1x8x8xf32> to vector<1x1x8xf32>
    %1750 = vector.shape_cast %1749 : vector<1x1x8xf32> to vector<1x8xf32>
    %1751 = vector.broadcast %1748 : f32 to vector<1x8xf32>
    %1752 = arith.mulf %1751, %1750 : vector<1x8xf32>
    %1753 = arith.addf %1747, %1752 : vector<1x8xf32>
    %c7_575 = arith.constant 7 : index
    %c8_576 = arith.constant 8 : index
    %1754 = memref.load %arg4[%c7_575, %c8_576] : memref<8x24xf32, #tpu.memory_space<smem>>
    %1755 = vector.extract_strided_slice %647 {offsets = [0, 2, 0], sizes = [1, 1, 8], strides = [1, 1, 1]} : vector<1x8x8xf32> to vector<1x1x8xf32>
    %1756 = vector.shape_cast %1755 : vector<1x1x8xf32> to vector<1x8xf32>
    %1757 = vector.broadcast %1754 : f32 to vector<1x8xf32>
    %1758 = arith.mulf %1757, %1756 : vector<1x8xf32>
    %1759 = arith.addf %1753, %1758 : vector<1x8xf32>
    %c7_577 = arith.constant 7 : index
    %c9_578 = arith.constant 9 : index
    %1760 = memref.load %arg4[%c7_577, %c9_578] : memref<8x24xf32, #tpu.memory_space<smem>>
    %1761 = vector.extract_strided_slice %645 {offsets = [0, 3, 0], sizes = [1, 1, 8], strides = [1, 1, 1]} : vector<1x8x8xf32> to vector<1x1x8xf32>
    %1762 = vector.shape_cast %1761 : vector<1x1x8xf32> to vector<1x8xf32>
    %1763 = vector.broadcast %1760 : f32 to vector<1x8xf32>
    %1764 = arith.mulf %1763, %1762 : vector<1x8xf32>
    %1765 = arith.addf %1759, %1764 : vector<1x8xf32>
    %c7_579 = arith.constant 7 : index
    %c10_580 = arith.constant 10 : index
    %1766 = memref.load %arg4[%c7_579, %c10_580] : memref<8x24xf32, #tpu.memory_space<smem>>
    %1767 = vector.extract_strided_slice %642 {offsets = [0, 3, 0], sizes = [1, 1, 8], strides = [1, 1, 1]} : vector<1x8x8xf32> to vector<1x1x8xf32>
    %1768 = vector.shape_cast %1767 : vector<1x1x8xf32> to vector<1x8xf32>
    %1769 = vector.broadcast %1766 : f32 to vector<1x8xf32>
    %1770 = arith.mulf %1769, %1768 : vector<1x8xf32>
    %1771 = arith.addf %1765, %1770 : vector<1x8xf32>
    %c7_581 = arith.constant 7 : index
    %c11_582 = arith.constant 11 : index
    %1772 = memref.load %arg4[%c7_581, %c11_582] : memref<8x24xf32, #tpu.memory_space<smem>>
    %1773 = vector.extract_strided_slice %647 {offsets = [0, 3, 0], sizes = [1, 1, 8], strides = [1, 1, 1]} : vector<1x8x8xf32> to vector<1x1x8xf32>
    %1774 = vector.shape_cast %1773 : vector<1x1x8xf32> to vector<1x8xf32>
    %1775 = vector.broadcast %1772 : f32 to vector<1x8xf32>
    %1776 = arith.mulf %1775, %1774 : vector<1x8xf32>
    %1777 = arith.addf %1771, %1776 : vector<1x8xf32>
    %c7_583 = arith.constant 7 : index
    %c12_584 = arith.constant 12 : index
    %1778 = memref.load %arg4[%c7_583, %c12_584] : memref<8x24xf32, #tpu.memory_space<smem>>
    %1779 = vector.extract_strided_slice %645 {offsets = [0, 4, 0], sizes = [1, 1, 8], strides = [1, 1, 1]} : vector<1x8x8xf32> to vector<1x1x8xf32>
    %1780 = vector.shape_cast %1779 : vector<1x1x8xf32> to vector<1x8xf32>
    %1781 = vector.broadcast %1778 : f32 to vector<1x8xf32>
    %1782 = arith.mulf %1781, %1780 : vector<1x8xf32>
    %1783 = arith.addf %1777, %1782 : vector<1x8xf32>
    %c7_585 = arith.constant 7 : index
    %c13_586 = arith.constant 13 : index
    %1784 = memref.load %arg4[%c7_585, %c13_586] : memref<8x24xf32, #tpu.memory_space<smem>>
    %1785 = vector.extract_strided_slice %642 {offsets = [0, 4, 0], sizes = [1, 1, 8], strides = [1, 1, 1]} : vector<1x8x8xf32> to vector<1x1x8xf32>
    %1786 = vector.shape_cast %1785 : vector<1x1x8xf32> to vector<1x8xf32>
    %1787 = vector.broadcast %1784 : f32 to vector<1x8xf32>
    %1788 = arith.mulf %1787, %1786 : vector<1x8xf32>
    %1789 = arith.addf %1783, %1788 : vector<1x8xf32>
    %c7_587 = arith.constant 7 : index
    %c14_588 = arith.constant 14 : index
    %1790 = memref.load %arg4[%c7_587, %c14_588] : memref<8x24xf32, #tpu.memory_space<smem>>
    %1791 = vector.extract_strided_slice %647 {offsets = [0, 4, 0], sizes = [1, 1, 8], strides = [1, 1, 1]} : vector<1x8x8xf32> to vector<1x1x8xf32>
    %1792 = vector.shape_cast %1791 : vector<1x1x8xf32> to vector<1x8xf32>
    %1793 = vector.broadcast %1790 : f32 to vector<1x8xf32>
    %1794 = arith.mulf %1793, %1792 : vector<1x8xf32>
    %1795 = arith.addf %1789, %1794 : vector<1x8xf32>
    %c7_589 = arith.constant 7 : index
    %c15_590 = arith.constant 15 : index
    %1796 = memref.load %arg4[%c7_589, %c15_590] : memref<8x24xf32, #tpu.memory_space<smem>>
    %1797 = vector.extract_strided_slice %645 {offsets = [0, 5, 0], sizes = [1, 1, 8], strides = [1, 1, 1]} : vector<1x8x8xf32> to vector<1x1x8xf32>
    %1798 = vector.shape_cast %1797 : vector<1x1x8xf32> to vector<1x8xf32>
    %1799 = vector.broadcast %1796 : f32 to vector<1x8xf32>
    %1800 = arith.mulf %1799, %1798 : vector<1x8xf32>
    %1801 = arith.addf %1795, %1800 : vector<1x8xf32>
    %c7_591 = arith.constant 7 : index
    %c16_592 = arith.constant 16 : index
    %1802 = memref.load %arg4[%c7_591, %c16_592] : memref<8x24xf32, #tpu.memory_space<smem>>
    %1803 = vector.extract_strided_slice %642 {offsets = [0, 5, 0], sizes = [1, 1, 8], strides = [1, 1, 1]} : vector<1x8x8xf32> to vector<1x1x8xf32>
    %1804 = vector.shape_cast %1803 : vector<1x1x8xf32> to vector<1x8xf32>
    %1805 = vector.broadcast %1802 : f32 to vector<1x8xf32>
    %1806 = arith.mulf %1805, %1804 : vector<1x8xf32>
    %1807 = arith.addf %1801, %1806 : vector<1x8xf32>
    %c7_593 = arith.constant 7 : index
    %c17_594 = arith.constant 17 : index
    %1808 = memref.load %arg4[%c7_593, %c17_594] : memref<8x24xf32, #tpu.memory_space<smem>>
    %1809 = vector.extract_strided_slice %647 {offsets = [0, 5, 0], sizes = [1, 1, 8], strides = [1, 1, 1]} : vector<1x8x8xf32> to vector<1x1x8xf32>
    %1810 = vector.shape_cast %1809 : vector<1x1x8xf32> to vector<1x8xf32>
    %1811 = vector.broadcast %1808 : f32 to vector<1x8xf32>
    %1812 = arith.mulf %1811, %1810 : vector<1x8xf32>
    %1813 = arith.addf %1807, %1812 : vector<1x8xf32>
    %c7_595 = arith.constant 7 : index
    %c18_596 = arith.constant 18 : index
    %1814 = memref.load %arg4[%c7_595, %c18_596] : memref<8x24xf32, #tpu.memory_space<smem>>
    %1815 = vector.extract_strided_slice %645 {offsets = [0, 6, 0], sizes = [1, 1, 8], strides = [1, 1, 1]} : vector<1x8x8xf32> to vector<1x1x8xf32>
    %1816 = vector.shape_cast %1815 : vector<1x1x8xf32> to vector<1x8xf32>
    %1817 = vector.broadcast %1814 : f32 to vector<1x8xf32>
    %1818 = arith.mulf %1817, %1816 : vector<1x8xf32>
    %1819 = arith.addf %1813, %1818 : vector<1x8xf32>
    %c7_597 = arith.constant 7 : index
    %c19_598 = arith.constant 19 : index
    %1820 = memref.load %arg4[%c7_597, %c19_598] : memref<8x24xf32, #tpu.memory_space<smem>>
    %1821 = vector.extract_strided_slice %642 {offsets = [0, 6, 0], sizes = [1, 1, 8], strides = [1, 1, 1]} : vector<1x8x8xf32> to vector<1x1x8xf32>
    %1822 = vector.shape_cast %1821 : vector<1x1x8xf32> to vector<1x8xf32>
    %1823 = vector.broadcast %1820 : f32 to vector<1x8xf32>
    %1824 = arith.mulf %1823, %1822 : vector<1x8xf32>
    %1825 = arith.addf %1819, %1824 : vector<1x8xf32>
    %c7_599 = arith.constant 7 : index
    %c20_600 = arith.constant 20 : index
    %1826 = memref.load %arg4[%c7_599, %c20_600] : memref<8x24xf32, #tpu.memory_space<smem>>
    %1827 = vector.extract_strided_slice %647 {offsets = [0, 6, 0], sizes = [1, 1, 8], strides = [1, 1, 1]} : vector<1x8x8xf32> to vector<1x1x8xf32>
    %1828 = vector.shape_cast %1827 : vector<1x1x8xf32> to vector<1x8xf32>
    %1829 = vector.broadcast %1826 : f32 to vector<1x8xf32>
    %1830 = arith.mulf %1829, %1828 : vector<1x8xf32>
    %1831 = arith.addf %1825, %1830 : vector<1x8xf32>
    %c7_601 = arith.constant 7 : index
    %c21_602 = arith.constant 21 : index
    %1832 = memref.load %arg4[%c7_601, %c21_602] : memref<8x24xf32, #tpu.memory_space<smem>>
    %1833 = vector.extract_strided_slice %645 {offsets = [0, 7, 0], sizes = [1, 1, 8], strides = [1, 1, 1]} : vector<1x8x8xf32> to vector<1x1x8xf32>
    %1834 = vector.shape_cast %1833 : vector<1x1x8xf32> to vector<1x8xf32>
    %1835 = vector.broadcast %1832 : f32 to vector<1x8xf32>
    %1836 = arith.mulf %1835, %1834 : vector<1x8xf32>
    %1837 = arith.addf %1831, %1836 : vector<1x8xf32>
    %c7_603 = arith.constant 7 : index
    %c22_604 = arith.constant 22 : index
    %1838 = memref.load %arg4[%c7_603, %c22_604] : memref<8x24xf32, #tpu.memory_space<smem>>
    %1839 = vector.extract_strided_slice %642 {offsets = [0, 7, 0], sizes = [1, 1, 8], strides = [1, 1, 1]} : vector<1x8x8xf32> to vector<1x1x8xf32>
    %1840 = vector.shape_cast %1839 : vector<1x1x8xf32> to vector<1x8xf32>
    %1841 = vector.broadcast %1838 : f32 to vector<1x8xf32>
    %1842 = arith.mulf %1841, %1840 : vector<1x8xf32>
    %1843 = arith.addf %1837, %1842 : vector<1x8xf32>
    %c7_605 = arith.constant 7 : index
    %c23_606 = arith.constant 23 : index
    %1844 = memref.load %arg4[%c7_605, %c23_606] : memref<8x24xf32, #tpu.memory_space<smem>>
    %1845 = vector.extract_strided_slice %647 {offsets = [0, 7, 0], sizes = [1, 1, 8], strides = [1, 1, 1]} : vector<1x8x8xf32> to vector<1x1x8xf32>
    %1846 = vector.shape_cast %1845 : vector<1x1x8xf32> to vector<1x8xf32>
    %1847 = vector.broadcast %1844 : f32 to vector<1x8xf32>
    %1848 = arith.mulf %1847, %1846 : vector<1x8xf32>
    %1849 = arith.addf %1843, %1848 : vector<1x8xf32>
    %c7_607 = arith.constant 7 : index
    %1850 = memref.load %arg5[%c7_607] : memref<8xf32, #tpu.memory_space<smem>>
    %1851 = vector.broadcast %1850 : f32 to vector<1x8xf32>
    %1852 = arith.addf %1849, %1851 : vector<1x8xf32>
    %cst_608 = arith.constant 0.000000e+00 : f32
    %1853 = vector.broadcast %cst_608 : f32 to vector<1x8xf32>
    %1854 = arith.maximumf %1852, %1853 : vector<1x8xf32>
    %1855 = vector.shape_cast %1854 : vector<1x8xf32> to vector<1x1x8xf32>
    %1856 = tpu.concatenate %798, %949, %1100, %1251, %1402, %1553, %1704, %1855 in 1 : vector<1x1x8xf32>, vector<1x1x8xf32>, vector<1x1x8xf32>, vector<1x1x8xf32>, vector<1x1x8xf32>, vector<1x1x8xf32>, vector<1x1x8xf32>, vector<1x1x8xf32> -> vector<1x8x8xf32>
    %c0_609 = arith.constant 0 : index
    %c0_610 = arith.constant 0 : index
    %c0_611 = arith.constant 0 : index
    %1857 = vector.load %arg6[%c0_609, %c0_610, %c0_611] : memref<1x8x8xf32, #tpu.memory_space<vmem>>, vector<1x8x8xf32>
    tpu.vector_store %arg6[%c0_609, %c0_610, %c0_611], %1856 {strides = array<i32>} : memref<1x8x8xf32, #tpu.memory_space<vmem>>, vector<1x8x8xf32>,
    return
  }
  func.func @transform_0(%arg0: i32) -> (i32, i32, i32, i32) {
    %c0_i32 = arith.constant 0 : i32
    %c0_i32_0 = arith.constant 0 : i32
    %c0_i32_1 = arith.constant 0 : i32
    %c0_i32_2 = arith.constant 0 : i32
    return %arg0, %c0_i32, %c0_i32_0, %c0_i32_1 : i32, i32, i32, i32
  }
  func.func @transform_1(%arg0: i32) -> (i32, i32) {
    %c0_i32 = arith.constant 0 : i32
    %c0_i32_0 = arith.constant 0 : i32
    %c0_i32_1 = arith.constant 0 : i32
    return %c0_i32, %c0_i32_0 : i32, i32
  }
  func.func @transform_2(%arg0: i32) -> i32 {
    %c0_i32 = arith.constant 0 : i32
    %c0_i32_0 = arith.constant 0 : i32
    return %c0_i32 : i32
  }
  func.func @transform_3(%arg0: i32) -> (i32, i32) {
    %c0_i32 = arith.constant 0 : i32
    %c0_i32_0 = arith.constant 0 : i32
    %c0_i32_1 = arith.constant 0 : i32
    return %c0_i32, %c0_i32_0 : i32, i32
  }
  func.func @transform_4(%arg0: i32) -> i32 {
    %c0_i32 = arith.constant 0 : i32
    %c0_i32_0 = arith.constant 0 : i32
    return %c0_i32 : i32
  }
  func.func @transform_5(%arg0: i32) -> (i32, i32, i32) {
    %c0_i32 = arith.constant 0 : i32
    %c0_i32_0 = arith.constant 0 : i32
    %c0_i32_1 = arith.constant 0 : i32
    return %arg0, %c0_i32, %c0_i32_0 : i32, i32, i32
  }
}

</mosaic_0001>

<llo_original>
// kernel: tpu_custom_call.1
$region0: #{tpu_custom_call.1}
  #allocation0 [shape = 'u32[]', space=smem, size = 0x4, offset = 0x4, fixed_abs, tag = 'smem constant byte address 0x4 - core index']
  #allocation1 [shape = 'u32[144,128]{1,0:T(1,128)}', space=vmem, size = 0x12000, scoped, tag = 'internal scratch']
  %s0 = inlined_call_operand.hbm [shape: f32[2,2,4,8], index: 0, kind: input, shape index: {}]
  %s1 = inlined_call_operand.hbm [shape: f32[8,12], index: 1, kind: input, shape index: {}]
  %s2 = inlined_call_operand.vmem [shape: f32[8], index: 2, kind: input, shape index: {}]
  %s3 = inlined_call_operand.vmem [shape: f32[8,24], index: 3, kind: input, shape index: {}]
  %s4 = inlined_call_operand.vmem [shape: f32[8], index: 4, kind: input, shape index: {}]
  %s5 = inlined_call_operand.hbm [shape: f32[2,8,8], index: 5, kind: output, shape index: {}]
  %s6 = sld [smem:[#allocation0]]
  $region73: #{tpu_custom_call.1} parent=0
    _
  %s8 = ssub.s32 1, %s6
  %s9 = scalar_select 0, %s8, %s6
  $region1: #{tpu_custom_call.1} parent=0
    #allocation2 [shape = 'u8[8192]{0}', space=vmem, size = 0x2000, scoped, tag = 'input window, operand 0']
    #allocation3 [shape = 's32[2]{0}', space=sflag, size = 0x8, scoped, tag = 'scoped memory for tpu_custom_call.1']
    #allocation4 [shape = 's32[2]{0}', space=sflag, size = 0x8, scoped, tag = 'scoped memory for tpu_custom_call.1']
    #allocation5 [shape = 's32[2]{0}', space=sflag, size = 0x8, scoped, tag = 'scoped memory for tpu_custom_call.1']
    #allocation6 [shape = 's32[2]{0}', space=sflag, size = 0x8, scoped, tag = 'scoped memory for tpu_custom_call.1']
    #allocation7 [shape = 'u8[4096]{0}', space=smem, size = 0x1000, scoped, tag = 'input window, operand 1, single buffered']
    #allocation8 [shape = 'u8[512]{0}', space=smem, size = 0x200, scoped, tag = 'input window, operand 2, single buffered']
    #allocation9 [shape = 'u8[4096]{0}', space=smem, size = 0x1000, scoped, tag = 'input window, operand 3, single buffered']
    #allocation10 [shape = 's32[1]{0}', space=sflag, size = 0x4, scoped, tag = 'scoped memory for tpu_custom_call.1']
    #allocation11 [shape = 'u8[512]{0}', space=smem, size = 0x200, scoped, tag = 'input window, operand 4, single buffered']
    #allocation12 [shape = 'u8[8192]{0}', space=vmem, size = 0x2000, scoped, tag = 'output window, operand 0']
    %10 = vsyncpa [#allocation3], 0
    %s11 = scalar_lea.sflag [#allocation3], 1
    %12 = vsyncpa %s11, 0
    %13 = vsyncpa [#allocation5], 0
    %14 = vsyncpa [#allocation6], 0
    %15 = vsyncpa [#allocation10], 0
    %16 = vsyncpa [#allocation4], 0
    %s17 = scalar_lea.sflag [#allocation4], 1
    %18 = vsyncpa %s17, 0
    loop: start=0, step=1, limit=4
    $region2: #{tpu_custom_call.1} parent=1 // loop_pre_header
      _
    $region3: #{tpu_custom_call.1} parent=1 // loop_header
      %s20 = sphi 0, %s24
      %p21 = scmp.ge.s32.totalorder %s20, 4
      %s30 = sphi 0, %s32
      %s33 = sphi 0, %s30
      %s34 = sphi 0, %s33
      %s50 = sphi 0, %s34
      %s54 = sphi 0, %s54
      %s56 = sphi 0, %s54
      %s57 = sphi 0, %s56
      %s71 = sphi 0, %s57
      %s75 = sphi 0, %s75
      %s77 = sphi 0, %s75
      %s78 = sphi 0, %s77
      %s92 = sphi 0, %s78
      %s96 = sphi 0, %s96
      %s98 = sphi 0, %s96
      %s99 = sphi 0, %s98
      %s113 = sphi 0, %s99
      %s117 = sphi 0, %s117
      %s119 = sphi 0, %s117
      %s120 = sphi 0, %s119
      %s134 = sphi 0, %s120
      %s140 = sphi 0, %s142
      %s143 = sphi 0, %s140
      %s144 = sphi 0, %s143
      %s160 = sphi 0, %s144
    $region4: #{tpu_custom_call.1} parent=1 // loop_header_branch
      %23 = sbr.rel (%p21) target = $region8
    $region5: #{tpu_custom_call.1} parent=1 // loop_body
      %s25 = ssub.s32 %s20, 1
      %s26 = ssub.s32 %s20, 2
      %s27 = sadd.s32 %s20, 1
      %s28 = ssub.s32 %s20, %s27
      %p29 = scmp.eq.s32.totalorder %s28, 0
      %s31 = sadd.s32 %s30, 1
      %s32 = scalar_select %p29, %s30, %s31
      %p35 = pneg %p29
      %p36 = scmp.eq.s32.totalorder %s20, 1
      %p37 = por %p35, %p36
      %p38 = scmp.ne.s32.totalorder %s30, %s33
      %p39 = scmp.eq.s32.totalorder %s20, 0
      %p40 = por %p38, %p39
      %p41 = scmp.ne.s32.totalorder %s30, %s33
      %p42 = scmp.eq.s32.totalorder %s25, 1
      %p43 = por %p41, %p42
      %p44 = scmp.ne.s32.totalorder %s33, %s34
      %p45 = scmp.eq.s32.totalorder %s25, 0
      %p46 = por %p44, %p45
      %p47 = scmp.ne.s32.totalorder %s33, %s34
      %p48 = scmp.eq.s32.totalorder %s26, 1
      %p49 = por %p47, %p48
      %p51 = scmp.ne.s32.totalorder %s34, %s50
      %p52 = scmp.eq.s32.totalorder %s26, 0
      %p53 = por %p51, %p52
      %s55 = sadd.s32 %s54, 1
      %p58 = scmp.eq.s32.totalorder %s20, 1
      %p59 = scmp.ne.s32.totalorder %s54, %s56
      %p60 = scmp.eq.s32.totalorder %s20, 0
      %p61 = por %p59, %p60
      %p62 = scmp.ne.s32.totalorder %s54, %s56
      %p63 = scmp.eq.s32.totalorder %s25, 1
      %p64 = por %p62, %p63
      %p65 = scmp.ne.s32.totalorder %s56, %s57
      %p66 = scmp.eq.s32.totalorder %s25, 0
      %p67 = por %p65, %p66
      %p68 = scmp.ne.s32.totalorder %s56, %s57
      %p69 = scmp.eq.s32.totalorder %s26, 1
      %p70 = por %p68, %p69
      %p72 = scmp.ne.s32.totalorder %s57, %s71
      %p73 = scmp.eq.s32.totalorder %s26, 0
      %p74 = por %p72, %p73
      %s76 = sadd.s32 %s75, 1
      %p79 = scmp.eq.s32.totalorder %s20, 1
      %p80 = scmp.ne.s32.totalorder %s75, %s77
      %p81 = scmp.eq.s32.totalorder %s20, 0
      %p82 = por %p80, %p81
      %p83 = scmp.ne.s32.totalorder %s75, %s77
      %p84 = scmp.eq.s32.totalorder %s25, 1
      %p85 = por %p83, %p84
      %p86 = scmp.ne.s32.totalorder %s77, %s78
      %p87 = scmp.eq.s32.totalorder %s25, 0
      %p88 = por %p86, %p87
      %p89 = scmp.ne.s32.totalorder %s77, %s78
      %p90 = scmp.eq.s32.totalorder %s26, 1
      %p91 = por %p89, %p90
      %p93 = scmp.ne.s32.totalorder %s78, %s92
      %p94 = scmp.eq.s32.totalorder %s26, 0
      %p95 = por %p93, %p94
      %s97 = sadd.s32 %s96, 1
      %p100 = scmp.eq.s32.totalorder %s20, 1
      %p101 = scmp.ne.s32.totalorder %s96, %s98
      %p102 = scmp.eq.s32.totalorder %s20, 0
      %p103 = por %p101, %p102
      %p104 = scmp.ne.s32.totalorder %s96, %s98
      %p105 = scmp.eq.s32.totalorder %s25, 1
      %p106 = por %p104, %p105
      %p107 = scmp.ne.s32.totalorder %s98, %s99
      %p108 = scmp.eq.s32.totalorder %s25, 0
      %p109 = por %p107, %p108
      %p110 = scmp.ne.s32.totalorder %s98, %s99
      %p111 = scmp.eq.s32.totalorder %s26, 1
      %p112 = por %p110, %p111
      %p114 = scmp.ne.s32.totalorder %s99, %s113
      %p115 = scmp.eq.s32.totalorder %s26, 0
      %p116 = por %p114, %p115
      %s118 = sadd.s32 %s117, 1
      %p121 = scmp.eq.s32.totalorder %s20, 1
      %p122 = scmp.ne.s32.totalorder %s117, %s119
      %p123 = scmp.eq.s32.totalorder %s20, 0
      %p124 = por %p122, %p123
      %p125 = scmp.ne.s32.totalorder %s117, %s119
      %p126 = scmp.eq.s32.totalorder %s25, 1
      %p127 = por %p125, %p126
      %p128 = scmp.ne.s32.totalorder %s119, %s120
      %p129 = scmp.eq.s32.totalorder %s25, 0
      %p130 = por %p128, %p129
      %p131 = scmp.ne.s32.totalorder %s119, %s120
      %p132 = scmp.eq.s32.totalorder %s26, 1
      %p133 = por %p131, %p132
      %p135 = scmp.ne.s32.totalorder %s120, %s134
      %p136 = scmp.eq.s32.totalorder %s26, 0
      %p137 = por %p135, %p136
      %s138 = ssub.s32 %s20, %s27
      %p139 = scmp.eq.s32.totalorder %s138, 0
      %s141 = sadd.s32 %s140, 1
      %s142 = scalar_select %p139, %s140, %s141
      %p145 = pneg %p139
      %p146 = scmp.eq.s32.totalorder %s20, 1
      %p147 = por %p145, %p146
      %p148 = scmp.ne.s32.totalorder %s140, %s143
      %p149 = scmp.eq.s32.totalorder %s20, 0
      %p150 = por %p148, %p149
      %p151 = scmp.ne.s32.totalorder %s140, %s143
      %p152 = scmp.eq.s32.totalorder %s25, 1
      %p153 = por %p151, %p152
      %p154 = scmp.ne.s32.totalorder %s143, %s144
      %p155 = scmp.eq.s32.totalorder %s25, 0
      %p156 = por %p154, %p155
      %p157 = scmp.ne.s32.totalorder %s143, %s144
      %p158 = scmp.eq.s32.totalorder %s26, 1
      %p159 = por %p157, %p158
      %p161 = scmp.ne.s32.totalorder %s144, %s160
      %p162 = scmp.eq.s32.totalorder %s26, 0
      %p163 = por %p161, %p162
      %p164 = scmp.le.s32.totalorder 1, %s20
      %p165 = scmp.lt.s32.totalorder %s20, 3
      %p166 = pnand %p164, %p165
      %p167 = pneg %p166
      // Predicated region
      $region9: #{tpu_custom_call.1} parent=5 // pred_check
        _
      $region10: #{tpu_custom_call.1} parent=5 // pred_check_branch
        %169 = sbr.rel (%p166) target = $region12
      $region11: #{tpu_custom_call.1} parent=5 // pred_region
        %s170 = ssub.s32 %s20, 1
        // Predicated region
        $region13: #{tpu_custom_call.1} parent=11 // pred_check
          %p171 = pneg %p67
        $region14: #{tpu_custom_call.1} parent=11 // pred_check_branch
          %173 = sbr.rel (%p171) target = $region16
        $region15: #{tpu_custom_call.1} parent=11 // pred_region
          %s175 = ssub.s32 128, 128
          %176 = vsyncadd [#allocation5], %s175
          %179 = dma.hbm_to_smem %s1, 128, [#allocation7], [#allocation5]
        $region16: #{tpu_custom_call.1} parent=11 // pred_fallthru
          _
        // Predicated region
        $region17: #{tpu_custom_call.1} parent=11 // pred_check
          %p180 = pneg %p88
        $region18: #{tpu_custom_call.1} parent=11 // pred_check_branch
          %182 = sbr.rel (%p180) target = $region20
        $region19: #{tpu_custom_call.1} parent=11 // pred_region
          %s184 = ssub.s32 16, 16
          %185 = vsyncadd [#allocation6], %s184
          %s187 = sshll.u32 %s2, 4
          %s188 = int_to_ptr.vmem [resolvable:$true] %s187
          %190 = dma.vmem_to_smem %s188, 16, [#allocation8], [#allocation6]
        $region20: #{tpu_custom_call.1} parent=11 // pred_fallthru
          _
        // Predicated region
        $region21: #{tpu_custom_call.1} parent=11 // pred_check
          %p191 = pneg %p109
        $region22: #{tpu_custom_call.1} parent=11 // pred_check_branch
          %193 = sbr.rel (%p191) target = $region24
        $region23: #{tpu_custom_call.1} parent=11 // pred_region
          %s195 = ssub.s32 128, 128
          %196 = vsyncadd [#allocation10], %s195
          %s198 = sshll.u32 %s3, 4
          %s199 = int_to_ptr.vmem [resolvable:$true] %s198
          %201 = dma.vmem_to_smem %s199, 128, [#allocation9], [#allocation10]
        $region24: #{tpu_custom_call.1} parent=11 // pred_fallthru
          _
        // Predicated region
        $region25: #{tpu_custom_call.1} parent=11 // pred_check
          %p202 = pneg %p130
        $region26: #{tpu_custom_call.1} parent=11 // pred_check_branch
          %204 = sbr.rel (%p202) target = $region28
        $region27: #{tpu_custom_call.1} parent=11 // pred_region
          %s206 = ssub.s32 16, 16
          %207 = vsyncadd [#allocation10], %s206
          %s209 = sshll.u32 %s4, 4
          %s210 = int_to_ptr.vmem [resolvable:$true] %s209
          %212 = dma.vmem_to_smem %s210, 16, [#allocation11], [#allocation10]
        $region28: #{tpu_custom_call.1} parent=11 // pred_fallthru
          _
      $region12: #{tpu_custom_call.1} parent=5 // pred_fallthru
        _
      %p213 = scmp.lt.s32.totalorder %s20, 2
      // Predicated region
      $region29: #{tpu_custom_call.1} parent=5 // pred_check
        %p214 = pneg %p213
      $region30: #{tpu_custom_call.1} parent=5 // pred_check_branch
        %216 = sbr.rel (%p214) target = $region32
      $region31: #{tpu_custom_call.1} parent=5 // pred_region
        // Predicated region
        $region33: #{tpu_custom_call.1} parent=31 // pred_check
          %p217 = pneg %p40
        $region34: #{tpu_custom_call.1} parent=31 // pred_check_branch
          %219 = sbr.rel (%p217) target = $region36
        $region35: #{tpu_custom_call.1} parent=31 // pred_region
          %s220 = sand.u32 %s30, 1
          %s221 = scalar_lea.sflag [#allocation3], %s220
          %s222 = sand.u32 %s30, 1
          %s223 = smul.addr %s222, 8
          %s224 = scalar_lea.vmem [#allocation2], %s223
          %s226 = ssub.s32 128, 128
          %227 = vsyncadd %s221, %s226
          %s228 = smul.addr %s20, 2
          %s229 = smul.addr %s228, 64
          %s230 = scalar_lea.hbm %s0, %s229
          %s231 = sshll.u32 %s224, 4
          %s232 = int_to_ptr.vmem [resolvable:$true] %s231
          %237 = dma.hbm_to_vmem [thread:$0]  %s230, 128, %s232, %s221, 64, 64, 4
        $region36: #{tpu_custom_call.1} parent=31 // pred_fallthru
          _
      $region32: #{tpu_custom_call.1} parent=5 // pred_fallthru
        _
      %p238 = scmp.le.s32.totalorder 1, %s20
      %p239 = scmp.lt.s32.totalorder %s20, 3
      %p240 = pnand %p238, %p239
      %p241 = pneg %p240
      // Predicated region
      $region37: #{tpu_custom_call.1} parent=5 // pred_check
        _
      $region38: #{tpu_custom_call.1} parent=5 // pred_check_branch
        %243 = sbr.rel (%p240) target = $region40
      $region39: #{tpu_custom_call.1} parent=5 // pred_region
        %s244 = ssub.s32 %s20, 1
        %s245 = sand.u32 %s33, 1
        %s246 = scalar_lea.sflag [#allocation3], %s245
        %s247 = sand.u32 %s33, 1
        %s248 = smul.addr %s247, 8
        %s249 = scalar_lea.vmem [#allocation2], %s248
        // Predicated region
        $region41: #{tpu_custom_call.1} parent=39 // pred_check
          %p250 = pneg %p46
        $region42: #{tpu_custom_call.1} parent=39 // pred_check_branch
          %252 = sbr.rel (%p250) target = $region44
        $region43: #{tpu_custom_call.1} parent=39 // pred_region
          %253 = dma.done %s246, 128
        $region44: #{tpu_custom_call.1} parent=39 // pred_fallthru
          _
        // Predicated region
        $region45: #{tpu_custom_call.1} parent=39 // pred_check
          %p254 = pneg %p67
        $region46: #{tpu_custom_call.1} parent=39 // pred_check_branch
          %256 = sbr.rel (%p254) target = $region48
        $region47: #{tpu_custom_call.1} parent=39 // pred_region
          %257 = dma.done [#allocation5], 128
        $region48: #{tpu_custom_call.1} parent=39 // pred_fallthru
          _
        // Predicated region
        $region49: #{tpu_custom_call.1} parent=39 // pred_check
          %p258 = pneg %p88
        $region50: #{tpu_custom_call.1} parent=39 // pred_check_branch
          %260 = sbr.rel (%p258) target = $region52
        $region51: #{tpu_custom_call.1} parent=39 // pred_region
          %261 = dma.done [#allocation6], 16
        $region52: #{tpu_custom_call.1} parent=39 // pred_fallthru
          _
        // Predicated region
        $region53: #{tpu_custom_call.1} parent=39 // pred_check
          %p262 = pneg %p109
        $region54: #{tpu_custom_call.1} parent=39 // pred_check_branch
          %264 = sbr.rel (%p262) target = $region56
        $region55: #{tpu_custom_call.1} parent=39 // pred_region
          %265 = dma.done [#allocation10], 128
        $region56: #{tpu_custom_call.1} parent=39 // pred_fallthru
          _
        // Predicated region
        $region57: #{tpu_custom_call.1} parent=39 // pred_check
          %p266 = pneg %p130
        $region58: #{tpu_custom_call.1} parent=39 // pred_check_branch
          %268 = sbr.rel (%p266) target = $region60
        $region59: #{tpu_custom_call.1} parent=39 // pred_region
          %269 = dma.done [#allocation10], 16
        $region60: #{tpu_custom_call.1} parent=39 // pred_fallthru
          _
        %270 = sfence
        %s271 = sand.u32 %s33, 1
        %s272 = scalar_lea.sflag [#allocation3], %s271
        %s273 = sand.u32 %s33, 1
        %s274 = smul.addr %s273, 8
        %s275 = scalar_lea.vmem [#allocation2], %s274
        %p276 = pneg %p46
        %p277 = pneg %p43
        %p278 = pneg %p67
        %p279 = pneg %p64
        %p280 = pneg %p88
        %p281 = pneg %p85
        %p282 = pneg %p109
        %p283 = pneg %p106
        %p284 = pneg %p130
        %p285 = pneg %p127
        %p286 = pneg %p156
        %p287 = pneg %p153
        %s288 = sand.u32 %s143, 1
        %s289 = scalar_lea.sflag [#allocation4], %s288
        %s290 = sand.u32 %s143, 1
        %s291 = smul.addr %s290, 8
        %s292 = scalar_lea.vmem [#allocation12], %s291
        %v293 = vld [vmem:[%s249] sm:$0xf]
        %s294 = scalar_lea.vmem %s249, 4 [#allocation2]
        %v295 = vld [vmem:[%s294] sm:$0xf]
        %v296 = vmax.f32 %v293, %v295
        %298 = vrot.lane.b32.xlu0 %v296, 1
        %v299 = vpop.permute.xlu0 %298
        %vm301 = vcmask 7168
        %v302 = vsel %vm301, 0.0, %v299
        %303 = vrot.lane.b32.xlu0 %v296, 127
        %v304 = vpop.permute.xlu0 %303
        %vm306 = vcmask 56320
        %v307 = vsel %vm306, %v304, 0.0
        %s308 = sld [smem:[#allocation7]]
        %v309 = vstv %s308
        %v310 = vmul.f32 %v309, %v302
        %v311 = vadd.f32 %v310, 0.0
        %s312 = sld [smem:[#allocation7 + $0x1]]
        %v313 = vstv %s312
        %v314 = vmul.f32 %v313, %v296
        %v315 = vadd.f32 %v311, %v314
        %s316 = sld [smem:[#allocation7 + $0x2]]
        %v317 = vstv %s316
        %v318 = vmul.f32 %v317, %v307
        %v319 = vadd.f32 %v315, %v318
        %s320 = sld [smem:[#allocation7 + $0x3]]
        %v321 = vstv %s320
        %v322 = vmul.f32 %v321, %v302
        %v324 = vrot.slane %v322, 1
        %v326 = vadd.f32 %v319, %v324
        %s327 = sld [smem:[#allocation7 + $0x4]]
        %v328 = vstv %s327
        %v329 = vmul.f32 %v328, %v296
        %v331 = vrot.slane %v329, 1
        %v333 = vadd.f32 %v326, %v331
        %s334 = sld [smem:[#allocation7 + $0x5]]
        %v335 = vstv %s334
        %v336 = vmul.f32 %v335, %v307
        %v338 = vrot.slane %v336, 1
        %v340 = vadd.f32 %v333, %v338
        %s341 = sld [smem:[#allocation7 + $0x6]]
        %v342 = vstv %s341
        %v343 = vmul.f32 %v342, %v302
        %v345 = vrot.slane %v343, 2
        %v347 = vadd.f32 %v340, %v345
        %s348 = sld [smem:[#allocation7 + $0x7]]
        %v349 = vstv %s348
        %v350 = vmul.f32 %v349, %v296
        %v352 = vrot.slane %v350, 2
        %v354 = vadd.f32 %v347, %v352
        %s355 = sld [smem:[#allocation7 + $0x8]]
        %v356 = vstv %s355
        %v357 = vmul.f32 %v356, %v307
        %v359 = vrot.slane %v357, 2
        %v361 = vadd.f32 %v354, %v359
        %s362 = sld [smem:[#allocation7 + $0x9]]
        %v363 = vstv %s362
        %v364 = vmul.f32 %v363, %v302
        %v366 = vrot.slane %v364, 3
        %v368 = vadd.f32 %v361, %v366
        %s369 = sld [smem:[#allocation7 + $0xa]]
        %v370 = vstv %s369
        %v371 = vmul.f32 %v370, %v296
        %v373 = vrot.slane %v371, 3
        %v375 = vadd.f32 %v368, %v373
        %s376 = sld [smem:[#allocation7 + $0xb]]
        %v377 = vstv %s376
        %v378 = vmul.f32 %v377, %v307
        %v380 = vrot.slane %v378, 3
        %v382 = vadd.f32 %v375, %v380
        %s383 = sld [smem:[#allocation8]]
        %v384 = vstv %s383
        %v385 = vadd.f32 %v382, %v384
        %v386 = vmax.f32 %v385, 0.0
        %s387 = sld [smem:[#allocation7 + $0x80]]
        %v388 = vstv %s387
        %v389 = vmul.f32 %v388, %v302
        %v390 = vadd.f32 %v389, 0.0
        %s391 = sld [smem:[#allocation7 + $0x81]]
        %v392 = vstv %s391
        %v393 = vmul.f32 %v392, %v296
        %v394 = vadd.f32 %v390, %v393
        %s395 = sld [smem:[#allocation7 + $0x82]]
        %v396 = vstv %s395
        %v397 = vmul.f32 %v396, %v307
        %v398 = vadd.f32 %v394, %v397
        %s399 = sld [smem:[#allocation7 + $0x83]]
        %v400 = vstv %s399
        %v401 = vmul.f32 %v400, %v302
        %v403 = vrot.slane %v401, 1
        %v405 = vadd.f32 %v398, %v403
        %s406 = sld [smem:[#allocation7 + $0x84]]
        %v407 = vstv %s406
        %v408 = vmul.f32 %v407, %v296
        %v410 = vrot.slane %v408, 1
        %v412 = vadd.f32 %v405, %v410
        %s413 = sld [smem:[#allocation7 + $0x85]]
        %v414 = vstv %s413
        %v415 = vmul.f32 %v414, %v307
        %v417 = vrot.slane %v415, 1
        %v419 = vadd.f32 %v412, %v417
        %s420 = sld [smem:[#allocation7 + $0x86]]
        %v421 = vstv %s420
        %v422 = vmul.f32 %v421, %v302
        %v424 = vrot.slane %v422, 2
        %v426 = vadd.f32 %v419, %v424
        %s427 = sld [smem:[#allocation7 + $0x87]]
        %v428 = vstv %s427
        %v429 = vmul.f32 %v428, %v296
        %v431 = vrot.slane %v429, 2
        %v433 = vadd.f32 %v426, %v431
        %s434 = sld [smem:[#allocation7 + $0x88]]
        %v435 = vstv %s434
        %v436 = vmul.f32 %v435, %v307
        %v438 = vrot.slane %v436, 2
        %v440 = vadd.f32 %v433, %v438
        %s441 = sld [smem:[#allocation7 + $0x89]]
        %v442 = vstv %s441
        %v443 = vmul.f32 %v442, %v302
        %v445 = vrot.slane %v443, 3
        %v447 = vadd.f32 %v440, %v445
        %s448 = sld [smem:[#allocation7 + $0x8a]]
        %v449 = vstv %s448
        %v450 = vmul.f32 %v449, %v296
        %v452 = vrot.slane %v450, 3
        %v454 = vadd.f32 %v447, %v452
        %s455 = sld [smem:[#allocation7 + $0x8b]]
        %v456 = vstv %s455
        %v457 = vmul.f32 %v456, %v307
        %v459 = vrot.slane %v457, 3
        %v461 = vadd.f32 %v454, %v459
        %s462 = sld [smem:[#allocation8 + $0x1]]
        %v463 = vstv %s462
        %v464 = vadd.f32 %v461, %v463
        %v465 = vmax.f32 %v464, 0.0
        %s466 = sld [smem:[#allocation7 + $0x100]]
        %v467 = vstv %s466
        %v468 = vmul.f32 %v467, %v302
        %v469 = vadd.f32 %v468, 0.0
        %s470 = sld [smem:[#allocation7 + $0x101]]
        %v471 = vstv %s470
        %v472 = vmul.f32 %v471, %v296
        %v473 = vadd.f32 %v469, %v472
        %s474 = sld [smem:[#allocation7 + $0x102]]
        %v475 = vstv %s474
        %v476 = vmul.f32 %v475, %v307
        %v477 = vadd.f32 %v473, %v476
        %s478 = sld [smem:[#allocation7 + $0x103]]
        %v479 = vstv %s478
        %v480 = vmul.f32 %v479, %v302
        %v482 = vrot.slane %v480, 1
        %v484 = vadd.f32 %v477, %v482
        %s485 = sld [smem:[#allocation7 + $0x104]]
        %v486 = vstv %s485
        %v487 = vmul.f32 %v486, %v296
        %v489 = vrot.slane %v487, 1
        %v491 = vadd.f32 %v484, %v489
        %s492 = sld [smem:[#allocation7 + $0x105]]
        %v493 = vstv %s492
        %v494 = vmul.f32 %v493, %v307
        %v496 = vrot.slane %v494, 1
        %v498 = vadd.f32 %v491, %v496
        %s499 = sld [smem:[#allocation7 + $0x106]]
        %v500 = vstv %s499
        %v501 = vmul.f32 %v500, %v302
        %v503 = vrot.slane %v501, 2
        %v505 = vadd.f32 %v498, %v503
        %s506 = sld [smem:[#allocation7 + $0x107]]
        %v507 = vstv %s506
        %v508 = vmul.f32 %v507, %v296
        %v510 = vrot.slane %v508, 2
        %v512 = vadd.f32 %v505, %v510
        %s513 = sld [smem:[#allocation7 + $0x108]]
        %v514 = vstv %s513
        %v515 = vmul.f32 %v514, %v307
        %v517 = vrot.slane %v515, 2
        %v519 = vadd.f32 %v512, %v517
        %s520 = sld [smem:[#allocation7 + $0x109]]
        %v521 = vstv %s520
        %v522 = vmul.f32 %v521, %v302
        %v524 = vrot.slane %v522, 3
        %v526 = vadd.f32 %v519, %v524
        %s527 = sld [smem:[#allocation7 + $0x10a]]
        %v528 = vstv %s527
        %v529 = vmul.f32 %v528, %v296
        %v531 = vrot.slane %v529, 3
        %v533 = vadd.f32 %v526, %v531
        %s534 = sld [smem:[#allocation7 + $0x10b]]
        %v535 = vstv %s534
        %v536 = vmul.f32 %v535, %v307
        %v538 = vrot.slane %v536, 3
        %v540 = vadd.f32 %v533, %v538
        %s541 = sld [smem:[#allocation8 + $0x2]]
        %v542 = vstv %s541
        %v543 = vadd.f32 %v540, %v542
        %v544 = vmax.f32 %v543, 0.0
        %s545 = sld [smem:[#allocation7 + $0x180]]
        %v546 = vstv %s545
        %v547 = vmul.f32 %v546, %v302
        %v548 = vadd.f32 %v547, 0.0
        %s549 = sld [smem:[#allocation7 + $0x181]]
        %v550 = vstv %s549
        %v551 = vmul.f32 %v550, %v296
        %v552 = vadd.f32 %v548, %v551
        %s553 = sld [smem:[#allocation7 + $0x182]]
        %v554 = vstv %s553
        %v555 = vmul.f32 %v554, %v307
        %v556 = vadd.f32 %v552, %v555
        %s557 = sld [smem:[#allocation7 + $0x183]]
        %v558 = vstv %s557
        %v559 = vmul.f32 %v558, %v302
        %v561 = vrot.slane %v559, 1
        %v563 = vadd.f32 %v556, %v561
        %s564 = sld [smem:[#allocation7 + $0x184]]
        %v565 = vstv %s564
        %v566 = vmul.f32 %v565, %v296
        %v568 = vrot.slane %v566, 1
        %v570 = vadd.f32 %v563, %v568
        %s571 = sld [smem:[#allocation7 + $0x185]]
        %v572 = vstv %s571
        %v573 = vmul.f32 %v572, %v307
        %v575 = vrot.slane %v573, 1
        %v577 = vadd.f32 %v570, %v575
        %s578 = sld [smem:[#allocation7 + $0x186]]
        %v579 = vstv %s578
        %v580 = vmul.f32 %v579, %v302
        %v582 = vrot.slane %v580, 2
        %v584 = vadd.f32 %v577, %v582
        %s585 = sld [smem:[#allocation7 + $0x187]]
        %v586 = vstv %s585
        %v587 = vmul.f32 %v586, %v296
        %v589 = vrot.slane %v587, 2
        %v591 = vadd.f32 %v584, %v589
        %s592 = sld [smem:[#allocation7 + $0x188]]
        %v593 = vstv %s592
        %v594 = vmul.f32 %v593, %v307
        %v596 = vrot.slane %v594, 2
        %v598 = vadd.f32 %v591, %v596
        %s599 = sld [smem:[#allocation7 + $0x189]]
        %v600 = vstv %s599
        %v601 = vmul.f32 %v600, %v302
        %v603 = vrot.slane %v601, 3
        %v605 = vadd.f32 %v598, %v603
        %s606 = sld [smem:[#allocation7 + $0x18a]]
        %v607 = vstv %s606
        %v608 = vmul.f32 %v607, %v296
        %v610 = vrot.slane %v608, 3
        %v612 = vadd.f32 %v605, %v610
        %s613 = sld [smem:[#allocation7 + $0x18b]]
        %v614 = vstv %s613
        %v615 = vmul.f32 %v614, %v307
        %v617 = vrot.slane %v615, 3
        %v619 = vadd.f32 %v612, %v617
        %s620 = sld [smem:[#allocation8 + $0x3]]
        %v621 = vstv %s620
        %v622 = vadd.f32 %v619, %v621
        %v623 = vmax.f32 %v622, 0.0
        %s624 = sld [smem:[#allocation7 + $0x200]]
        %v625 = vstv %s624
        %v626 = vmul.f32 %v625, %v302
        %v627 = vadd.f32 %v626, 0.0
        %s628 = sld [smem:[#allocation7 + $0x201]]
        %v629 = vstv %s628
        %v630 = vmul.f32 %v629, %v296
        %v631 = vadd.f32 %v627, %v630
        %s632 = sld [smem:[#allocation7 + $0x202]]
        %v633 = vstv %s632
        %v634 = vmul.f32 %v633, %v307
        %v635 = vadd.f32 %v631, %v634
        %s636 = sld [smem:[#allocation7 + $0x203]]
        %v637 = vstv %s636
        %v638 = vmul.f32 %v637, %v302
        %v640 = vrot.slane %v638, 1
        %v642 = vadd.f32 %v635, %v640
        %s643 = sld [smem:[#allocation7 + $0x204]]
        %v644 = vstv %s643
        %v645 = vmul.f32 %v644, %v296
        %v647 = vrot.slane %v645, 1
        %v649 = vadd.f32 %v642, %v647
        %s650 = sld [smem:[#allocation7 + $0x205]]
        %v651 = vstv %s650
        %v652 = vmul.f32 %v651, %v307
        %v654 = vrot.slane %v652, 1
        %v656 = vadd.f32 %v649, %v654
        %s657 = sld [smem:[#allocation7 + $0x206]]
        %v658 = vstv %s657
        %v659 = vmul.f32 %v658, %v302
        %v661 = vrot.slane %v659, 2
        %v663 = vadd.f32 %v656, %v661
        %s664 = sld [smem:[#allocation7 + $0x207]]
        %v665 = vstv %s664
        %v666 = vmul.f32 %v665, %v296
        %v668 = vrot.slane %v666, 2
        %v670 = vadd.f32 %v663, %v668
        %s671 = sld [smem:[#allocation7 + $0x208]]
        %v672 = vstv %s671
        %v673 = vmul.f32 %v672, %v307
        %v675 = vrot.slane %v673, 2
        %v677 = vadd.f32 %v670, %v675
        %s678 = sld [smem:[#allocation7 + $0x209]]
        %v679 = vstv %s678
        %v680 = vmul.f32 %v679, %v302
        %v682 = vrot.slane %v680, 3
        %v684 = vadd.f32 %v677, %v682
        %s685 = sld [smem:[#allocation7 + $0x20a]]
        %v686 = vstv %s685
        %v687 = vmul.f32 %v686, %v296
        %v689 = vrot.slane %v687, 3
        %v691 = vadd.f32 %v684, %v689
        %s692 = sld [smem:[#allocation7 + $0x20b]]
        %v693 = vstv %s692
        %v694 = vmul.f32 %v693, %v307
        %v696 = vrot.slane %v694, 3
        %v698 = vadd.f32 %v691, %v696
        %s699 = sld [smem:[#allocation8 + $0x4]]
        %v700 = vstv %s699
        %v701 = vadd.f32 %v698, %v700
        %v702 = vmax.f32 %v701, 0.0
        %s703 = sld [smem:[#allocation7 + $0x280]]
        %v704 = vstv %s703
        %v705 = vmul.f32 %v704, %v302
        %v706 = vadd.f32 %v705, 0.0
        %s707 = sld [smem:[#allocation7 + $0x281]]
        %v708 = vstv %s707
        %v709 = vmul.f32 %v708, %v296
        %v710 = vadd.f32 %v706, %v709
        %s711 = sld [smem:[#allocation7 + $0x282]]
        %v712 = vstv %s711
        %v713 = vmul.f32 %v712, %v307
        %v714 = vadd.f32 %v710, %v713
        %s715 = sld [smem:[#allocation7 + $0x283]]
        %v716 = vstv %s715
        %v717 = vmul.f32 %v716, %v302
        %v719 = vrot.slane %v717, 1
        %v721 = vadd.f32 %v714, %v719
        %s722 = sld [smem:[#allocation7 + $0x284]]
        %v723 = vstv %s722
        %v724 = vmul.f32 %v723, %v296
        %v726 = vrot.slane %v724, 1
        %v728 = vadd.f32 %v721, %v726
        %s729 = sld [smem:[#allocation7 + $0x285]]
        %v730 = vstv %s729
        %v731 = vmul.f32 %v730, %v307
        %v733 = vrot.slane %v731, 1
        %v735 = vadd.f32 %v728, %v733
        %s736 = sld [smem:[#allocation7 + $0x286]]
        %v737 = vstv %s736
        %v738 = vmul.f32 %v737, %v302
        %v740 = vrot.slane %v738, 2
        %v742 = vadd.f32 %v735, %v740
        %s743 = sld [smem:[#allocation7 + $0x287]]
        %v744 = vstv %s743
        %v745 = vmul.f32 %v744, %v296
        %v747 = vrot.slane %v745, 2
        %v749 = vadd.f32 %v742, %v747
        %s750 = sld [smem:[#allocation7 + $0x288]]
        %v751 = vstv %s750
        %v752 = vmul.f32 %v751, %v307
        %v754 = vrot.slane %v752, 2
        %v756 = vadd.f32 %v749, %v754
        %s757 = sld [smem:[#allocation7 + $0x289]]
        %v758 = vstv %s757
        %v759 = vmul.f32 %v758, %v302
        %v761 = vrot.slane %v759, 3
        %v763 = vadd.f32 %v756, %v761
        %s764 = sld [smem:[#allocation7 + $0x28a]]
        %v765 = vstv %s764
        %v766 = vmul.f32 %v765, %v296
        %v768 = vrot.slane %v766, 3
        %v770 = vadd.f32 %v763, %v768
        %s771 = sld [smem:[#allocation7 + $0x28b]]
        %v772 = vstv %s771
        %v773 = vmul.f32 %v772, %v307
        %v775 = vrot.slane %v773, 3
        %v777 = vadd.f32 %v770, %v775
        %s778 = sld [smem:[#allocation8 + $0x5]]
        %v779 = vstv %s778
        %v780 = vadd.f32 %v777, %v779
        %v781 = vmax.f32 %v780, 0.0
        %s782 = sld [smem:[#allocation7 + $0x300]]
        %v783 = vstv %s782
        %v784 = vmul.f32 %v783, %v302
        %v785 = vadd.f32 %v784, 0.0
        %s786 = sld [smem:[#allocation7 + $0x301]]
        %v787 = vstv %s786
        %v788 = vmul.f32 %v787, %v296
        %v789 = vadd.f32 %v785, %v788
        %s790 = sld [smem:[#allocation7 + $0x302]]
        %v791 = vstv %s790
        %v792 = vmul.f32 %v791, %v307
        %v793 = vadd.f32 %v789, %v792
        %s794 = sld [smem:[#allocation7 + $0x303]]
        %v795 = vstv %s794
        %v796 = vmul.f32 %v795, %v302
        %v798 = vrot.slane %v796, 1
        %v800 = vadd.f32 %v793, %v798
        %s801 = sld [smem:[#allocation7 + $0x304]]
        %v802 = vstv %s801
        %v803 = vmul.f32 %v802, %v296
        %v805 = vrot.slane %v803, 1
        %v807 = vadd.f32 %v800, %v805
        %s808 = sld [smem:[#allocation7 + $0x305]]
        %v809 = vstv %s808
        %v810 = vmul.f32 %v809, %v307
        %v812 = vrot.slane %v810, 1
        %v814 = vadd.f32 %v807, %v812
        %s815 = sld [smem:[#allocation7 + $0x306]]
        %v816 = vstv %s815
        %v817 = vmul.f32 %v816, %v302
        %v819 = vrot.slane %v817, 2
        %v821 = vadd.f32 %v814, %v819
        %s822 = sld [smem:[#allocation7 + $0x307]]
        %v823 = vstv %s822
        %v824 = vmul.f32 %v823, %v296
        %v826 = vrot.slane %v824, 2
        %v828 = vadd.f32 %v821, %v826
        %s829 = sld [smem:[#allocation7 + $0x308]]
        %v830 = vstv %s829
        %v831 = vmul.f32 %v830, %v307
        %v833 = vrot.slane %v831, 2
        %v835 = vadd.f32 %v828, %v833
        %s836 = sld [smem:[#allocation7 + $0x309]]
        %v837 = vstv %s836
        %v838 = vmul.f32 %v837, %v302
        %v840 = vrot.slane %v838, 3
        %v842 = vadd.f32 %v835, %v840
        %s843 = sld [smem:[#allocation7 + $0x30a]]
        %v844 = vstv %s843
        %v845 = vmul.f32 %v844, %v296
        %v847 = vrot.slane %v845, 3
        %v849 = vadd.f32 %v842, %v847
        %s850 = sld [smem:[#allocation7 + $0x30b]]
        %v851 = vstv %s850
        %v852 = vmul.f32 %v851, %v307
        %v854 = vrot.slane %v852, 3
        %v856 = vadd.f32 %v849, %v854
        %s857 = sld [smem:[#allocation8 + $0x6]]
        %v858 = vstv %s857
        %v859 = vadd.f32 %v856, %v858
        %v860 = vmax.f32 %v859, 0.0
        %s861 = sld [smem:[#allocation7 + $0x380]]
        %v862 = vstv %s861
        %v863 = vmul.f32 %v862, %v302
        %v864 = vadd.f32 %v863, 0.0
        %s865 = sld [smem:[#allocation7 + $0x381]]
        %v866 = vstv %s865
        %v867 = vmul.f32 %v866, %v296
        %v868 = vadd.f32 %v864, %v867
        %s869 = sld [smem:[#allocation7 + $0x382]]
        %v870 = vstv %s869
        %v871 = vmul.f32 %v870, %v307
        %v872 = vadd.f32 %v868, %v871
        %s873 = sld [smem:[#allocation7 + $0x383]]
        %v874 = vstv %s873
        %v875 = vmul.f32 %v874, %v302
        %v877 = vrot.slane %v875, 1
        %v879 = vadd.f32 %v872, %v877
        %s880 = sld [smem:[#allocation7 + $0x384]]
        %v881 = vstv %s880
        %v882 = vmul.f32 %v881, %v296
        %v884 = vrot.slane %v882, 1
        %v886 = vadd.f32 %v879, %v884
        %s887 = sld [smem:[#allocation7 + $0x385]]
        %v888 = vstv %s887
        %v889 = vmul.f32 %v888, %v307
        %v891 = vrot.slane %v889, 1
        %v893 = vadd.f32 %v886, %v891
        %s894 = sld [smem:[#allocation7 + $0x386]]
        %v895 = vstv %s894
        %v896 = vmul.f32 %v895, %v302
        %v898 = vrot.slane %v896, 2
        %v900 = vadd.f32 %v893, %v898
        %s901 = sld [smem:[#allocation7 + $0x387]]
        %v902 = vstv %s901
        %v903 = vmul.f32 %v902, %v296
        %v905 = vrot.slane %v903, 2
        %v907 = vadd.f32 %v900, %v905
        %s908 = sld [smem:[#allocation7 + $0x388]]
        %v909 = vstv %s908
        %v910 = vmul.f32 %v909, %v307
        %v912 = vrot.slane %v910, 2
        %v914 = vadd.f32 %v907, %v912
        %s915 = sld [smem:[#allocation7 + $0x389]]
        %v916 = vstv %s915
        %v917 = vmul.f32 %v916, %v302
        %v919 = vrot.slane %v917, 3
        %v921 = vadd.f32 %v914, %v919
        %s922 = sld [smem:[#allocation7 + $0x38a]]
        %v923 = vstv %s922
        %v924 = vmul.f32 %v923, %v296
        %v926 = vrot.slane %v924, 3
        %v928 = vadd.f32 %v921, %v926
        %s929 = sld [smem:[#allocation7 + $0x38b]]
        %v930 = vstv %s929
        %v931 = vmul.f32 %v930, %v307
        %v933 = vrot.slane %v931, 3
        %v935 = vadd.f32 %v928, %v933
        %s936 = sld [smem:[#allocation8 + $0x7]]
        %v937 = vstv %s936
        %v938 = vadd.f32 %v935, %v937
        %v939 = vmax.f32 %v938, 0.0
        %v941 = vrot.slane %v465, 7
        %v944 = vrot.slane %v544, 6
        %v947 = vrot.slane %v623, 5
        %v950 = vrot.slane %v702, 4
        %v953 = vrot.slane %v781, 3
        %v956 = vrot.slane %v860, 2
        %v959 = vrot.slane %v939, 1
        %vm961 = vcmask 1040384
        %v962 = vsel %vm961, %v386, %v941
        %vm963 = vcmask 1041408
        %v964 = vsel %vm963, %v962, %v944
        %vm965 = vcmask 1042432
        %v966 = vsel %vm965, %v964, %v947
        %vm967 = vcmask 1043456
        %v968 = vsel %vm967, %v966, %v950
        %vm969 = vcmask 1044480
        %v970 = vsel %vm969, %v968, %v953
        %vm971 = vcmask 1045504
        %v972 = vsel %vm971, %v970, %v956
        %vm973 = vcmask 1046528
        %v974 = vsel %vm973, %v972, %v959
        %976 = vrot.lane.b32.xlu0 %v974, 1
        %v977 = vpop.permute.xlu0 %976
        %v979 = vsel %vm301, 0.0, %v977
        %980 = vrot.lane.b32.xlu0 %v974, 127
        %v981 = vpop.permute.xlu0 %980
        %v983 = vsel %vm306, %v981, 0.0
        %s984 = sld [smem:[#allocation9]]
        %v985 = vstv %s984
        %v986 = vmul.f32 %v985, %v979
        %v987 = vadd.f32 %v986, 0.0
        %s988 = sld [smem:[#allocation9 + $0x1]]
        %v989 = vstv %s988
        %v990 = vmul.f32 %v989, %v974
        %v991 = vadd.f32 %v987, %v990
        %s992 = sld [smem:[#allocation9 + $0x2]]
        %v993 = vstv %s992
        %v994 = vmul.f32 %v993, %v983
        %v995 = vadd.f32 %v991, %v994
        %s996 = sld [smem:[#allocation9 + $0x3]]
        %v997 = vstv %s996
        %v998 = vmul.f32 %v997, %v979
        %v1000 = vrot.slane %v998, 1
        %v1002 = vadd.f32 %v995, %v1000
        %s1003 = sld [smem:[#allocation9 + $0x4]]
        %v1004 = vstv %s1003
        %v1005 = vmul.f32 %v1004, %v974
        %v1007 = vrot.slane %v1005, 1
        %v1009 = vadd.f32 %v1002, %v1007
        %s1010 = sld [smem:[#allocation9 + $0x5]]
        %v1011 = vstv %s1010
        %v1012 = vmul.f32 %v1011, %v983
        %v1014 = vrot.slane %v1012, 1
        %v1016 = vadd.f32 %v1009, %v1014
        %s1017 = sld [smem:[#allocation9 + $0x6]]
        %v1018 = vstv %s1017
        %v1019 = vmul.f32 %v1018, %v979
        %v1021 = vrot.slane %v1019, 2
        %v1023 = vadd.f32 %v1016, %v1021
        %s1024 = sld [smem:[#allocation9 + $0x7]]
        %v1025 = vstv %s1024
        %v1026 = vmul.f32 %v1025, %v974
        %v1028 = vrot.slane %v1026, 2
        %v1030 = vadd.f32 %v1023, %v1028
        %s1031 = sld [smem:[#allocation9 + $0x8]]
        %v1032 = vstv %s1031
        %v1033 = vmul.f32 %v1032, %v983
        %v1035 = vrot.slane %v1033, 2
        %v1037 = vadd.f32 %v1030, %v1035
        %s1038 = sld [smem:[#allocation9 + $0x9]]
        %v1039 = vstv %s1038
        %v1040 = vmul.f32 %v1039, %v979
        %v1042 = vrot.slane %v1040, 3
        %v1044 = vadd.f32 %v1037, %v1042
        %s1045 = sld [smem:[#allocation9 + $0xa]]
        %v1046 = vstv %s1045
        %v1047 = vmul.f32 %v1046, %v974
        %v1049 = vrot.slane %v1047, 3
        %v1051 = vadd.f32 %v1044, %v1049
        %s1052 = sld [smem:[#allocation9 + $0xb]]
        %v1053 = vstv %s1052
        %v1054 = vmul.f32 %v1053, %v983
        %v1056 = vrot.slane %v1054, 3
        %v1058 = vadd.f32 %v1051, %v1056
        %s1059 = sld [smem:[#allocation9 + $0xc]]
        %v1060 = vstv %s1059
        %v1061 = vmul.f32 %v1060, %v979
        %v1063 = vrot.slane %v1061, 4
        %v1065 = vadd.f32 %v1058, %v1063
        %s1066 = sld [smem:[#allocation9 + $0xd]]
        %v1067 = vstv %s1066
        %v1068 = vmul.f32 %v1067, %v974
        %v1070 = vrot.slane %v1068, 4
        %v1072 = vadd.f32 %v1065, %v1070
        %s1073 = sld [smem:[#allocation9 + $0xe]]
        %v1074 = vstv %s1073
        %v1075 = vmul.f32 %v1074, %v983
        %v1077 = vrot.slane %v1075, 4
        %v1079 = vadd.f32 %v1072, %v1077
        %s1080 = sld [smem:[#allocation9 + $0xf]]
        %v1081 = vstv %s1080
        %v1082 = vmul.f32 %v1081, %v979
        %v1084 = vrot.slane %v1082, 5
        %v1086 = vadd.f32 %v1079, %v1084
        %s1087 = sld [smem:[#allocation9 + $0x10]]
        %v1088 = vstv %s1087
        %v1089 = vmul.f32 %v1088, %v974
        %v1091 = vrot.slane %v1089, 5
        %v1093 = vadd.f32 %v1086, %v1091
        %s1094 = sld [smem:[#allocation9 + $0x11]]
        %v1095 = vstv %s1094
        %v1096 = vmul.f32 %v1095, %v983
        %v1098 = vrot.slane %v1096, 5
        %v1100 = vadd.f32 %v1093, %v1098
        %s1101 = sld [smem:[#allocation9 + $0x12]]
        %v1102 = vstv %s1101
        %v1103 = vmul.f32 %v1102, %v979
        %v1105 = vrot.slane %v1103, 6
        %v1107 = vadd.f32 %v1100, %v1105
        %s1108 = sld [smem:[#allocation9 + $0x13]]
        %v1109 = vstv %s1108
        %v1110 = vmul.f32 %v1109, %v974
        %v1112 = vrot.slane %v1110, 6
        %v1114 = vadd.f32 %v1107, %v1112
        %s1115 = sld [smem:[#allocation9 + $0x14]]
        %v1116 = vstv %s1115
        %v1117 = vmul.f32 %v1116, %v983
        %v1119 = vrot.slane %v1117, 6
        %v1121 = vadd.f32 %v1114, %v1119
        %s1122 = sld [smem:[#allocation9 + $0x15]]
        %v1123 = vstv %s1122
        %v1124 = vmul.f32 %v1123, %v979
        %v1126 = vrot.slane %v1124, 7
        %v1128 = vadd.f32 %v1121, %v1126
        %s1129 = sld [smem:[#allocation9 + $0x16]]
        %v1130 = vstv %s1129
        %v1131 = vmul.f32 %v1130, %v974
        %v1133 = vrot.slane %v1131, 7
        %v1135 = vadd.f32 %v1128, %v1133
        %s1136 = sld [smem:[#allocation9 + $0x17]]
        %v1137 = vstv %s1136
        %v1138 = vmul.f32 %v1137, %v983
        %v1140 = vrot.slane %v1138, 7
        %v1142 = vadd.f32 %v1135, %v1140
        %s1143 = sld [smem:[#allocation11]]
        %v1144 = vstv %s1143
        %v1145 = vadd.f32 %v1142, %v1144
        %v1146 = vmax.f32 %v1145, 0.0
        %s1147 = sld [smem:[#allocation9 + $0x80]]
        %v1148 = vstv %s1147
        %v1149 = vmul.f32 %v1148, %v979
        %v1150 = vadd.f32 %v1149, 0.0
        %s1151 = sld [smem:[#allocation9 + $0x81]]
        %v1152 = vstv %s1151
        %v1153 = vmul.f32 %v1152, %v974
        %v1154 = vadd.f32 %v1150, %v1153
        %s1155 = sld [smem:[#allocation9 + $0x82]]
        %v1156 = vstv %s1155
        %v1157 = vmul.f32 %v1156, %v983
        %v1158 = vadd.f32 %v1154, %v1157
        %s1159 = sld [smem:[#allocation9 + $0x83]]
        %v1160 = vstv %s1159
        %v1161 = vmul.f32 %v1160, %v979
        %v1163 = vrot.slane %v1161, 1
        %v1165 = vadd.f32 %v1158, %v1163
        %s1166 = sld [smem:[#allocation9 + $0x84]]
        %v1167 = vstv %s1166
        %v1168 = vmul.f32 %v1167, %v974
        %v1170 = vrot.slane %v1168, 1
        %v1172 = vadd.f32 %v1165, %v1170
        %s1173 = sld [smem:[#allocation9 + $0x85]]
        %v1174 = vstv %s1173
        %v1175 = vmul.f32 %v1174, %v983
        %v1177 = vrot.slane %v1175, 1
        %v1179 = vadd.f32 %v1172, %v1177
        %s1180 = sld [smem:[#allocation9 + $0x86]]
        %v1181 = vstv %s1180
        %v1182 = vmul.f32 %v1181, %v979
        %v1184 = vrot.slane %v1182, 2
        %v1186 = vadd.f32 %v1179, %v1184
        %s1187 = sld [smem:[#allocation9 + $0x87]]
        %v1188 = vstv %s1187
        %v1189 = vmul.f32 %v1188, %v974
        %v1191 = vrot.slane %v1189, 2
        %v1193 = vadd.f32 %v1186, %v1191
        %s1194 = sld [smem:[#allocation9 + $0x88]]
        %v1195 = vstv %s1194
        %v1196 = vmul.f32 %v1195, %v983
        %v1198 = vrot.slane %v1196, 2
        %v1200 = vadd.f32 %v1193, %v1198
        %s1201 = sld [smem:[#allocation9 + $0x89]]
        %v1202 = vstv %s1201
        %v1203 = vmul.f32 %v1202, %v979
        %v1205 = vrot.slane %v1203, 3
        %v1207 = vadd.f32 %v1200, %v1205
        %s1208 = sld [smem:[#allocation9 + $0x8a]]
        %v1209 = vstv %s1208
        %v1210 = vmul.f32 %v1209, %v974
        %v1212 = vrot.slane %v1210, 3
        %v1214 = vadd.f32 %v1207, %v1212
        %s1215 = sld [smem:[#allocation9 + $0x8b]]
        %v1216 = vstv %s1215
        %v1217 = vmul.f32 %v1216, %v983
        %v1219 = vrot.slane %v1217, 3
        %v1221 = vadd.f32 %v1214, %v1219
        %s1222 = sld [smem:[#allocation9 + $0x8c]]
        %v1223 = vstv %s1222
        %v1224 = vmul.f32 %v1223, %v979
        %v1226 = vrot.slane %v1224, 4
        %v1228 = vadd.f32 %v1221, %v1226
        %s1229 = sld [smem:[#allocation9 + $0x8d]]
        %v1230 = vstv %s1229
        %v1231 = vmul.f32 %v1230, %v974
        %v1233 = vrot.slane %v1231, 4
        %v1235 = vadd.f32 %v1228, %v1233
        %s1236 = sld [smem:[#allocation9 + $0x8e]]
        %v1237 = vstv %s1236
        %v1238 = vmul.f32 %v1237, %v983
        %v1240 = vrot.slane %v1238, 4
        %v1242 = vadd.f32 %v1235, %v1240
        %s1243 = sld [smem:[#allocation9 + $0x8f]]
        %v1244 = vstv %s1243
        %v1245 = vmul.f32 %v1244, %v979
        %v1247 = vrot.slane %v1245, 5
        %v1249 = vadd.f32 %v1242, %v1247
        %s1250 = sld [smem:[#allocation9 + $0x90]]
        %v1251 = vstv %s1250
        %v1252 = vmul.f32 %v1251, %v974
        %v1254 = vrot.slane %v1252, 5
        %v1256 = vadd.f32 %v1249, %v1254
        %s1257 = sld [smem:[#allocation9 + $0x91]]
        %v1258 = vstv %s1257
        %v1259 = vmul.f32 %v1258, %v983
        %v1261 = vrot.slane %v1259, 5
        %v1263 = vadd.f32 %v1256, %v1261
        %s1264 = sld [smem:[#allocation9 + $0x92]]
        %v1265 = vstv %s1264
        %v1266 = vmul.f32 %v1265, %v979
        %v1268 = vrot.slane %v1266, 6
        %v1270 = vadd.f32 %v1263, %v1268
        %s1271 = sld [smem:[#allocation9 + $0x93]]
        %v1272 = vstv %s1271
        %v1273 = vmul.f32 %v1272, %v974
        %v1275 = vrot.slane %v1273, 6
        %v1277 = vadd.f32 %v1270, %v1275
        %s1278 = sld [smem:[#allocation9 + $0x94]]
        %v1279 = vstv %s1278
        %v1280 = vmul.f32 %v1279, %v983
        %v1282 = vrot.slane %v1280, 6
        %v1284 = vadd.f32 %v1277, %v1282
        %s1285 = sld [smem:[#allocation9 + $0x95]]
        %v1286 = vstv %s1285
        %v1287 = vmul.f32 %v1286, %v979
        %v1289 = vrot.slane %v1287, 7
        %v1291 = vadd.f32 %v1284, %v1289
        %s1292 = sld [smem:[#allocation9 + $0x96]]
        %v1293 = vstv %s1292
        %v1294 = vmul.f32 %v1293, %v974
        %v1296 = vrot.slane %v1294, 7
        %v1298 = vadd.f32 %v1291, %v1296
        %s1299 = sld [smem:[#allocation9 + $0x97]]
        %v1300 = vstv %s1299
        %v1301 = vmul.f32 %v1300, %v983
        %v1303 = vrot.slane %v1301, 7
        %v1305 = vadd.f32 %v1298, %v1303
        %s1306 = sld [smem:[#allocation11 + $0x1]]
        %v1307 = vstv %s1306
        %v1308 = vadd.f32 %v1305, %v1307
        %v1309 = vmax.f32 %v1308, 0.0
        %s1310 = sld [smem:[#allocation9 + $0x100]]
        %v1311 = vstv %s1310
        %v1312 = vmul.f32 %v1311, %v979
        %v1313 = vadd.f32 %v1312, 0.0
        %s1314 = sld [smem:[#allocation9 + $0x101]]
        %v1315 = vstv %s1314
        %v1316 = vmul.f32 %v1315, %v974
        %v1317 = vadd.f32 %v1313, %v1316
        %s1318 = sld [smem:[#allocation9 + $0x102]]
        %v1319 = vstv %s1318
        %v1320 = vmul.f32 %v1319, %v983
        %v1321 = vadd.f32 %v1317, %v1320
        %s1322 = sld [smem:[#allocation9 + $0x103]]
        %v1323 = vstv %s1322
        %v1324 = vmul.f32 %v1323, %v979
        %v1326 = vrot.slane %v1324, 1
        %v1328 = vadd.f32 %v1321, %v1326
        %s1329 = sld [smem:[#allocation9 + $0x104]]
        %v1330 = vstv %s1329
        %v1331 = vmul.f32 %v1330, %v974
        %v1333 = vrot.slane %v1331, 1
        %v1335 = vadd.f32 %v1328, %v1333
        %s1336 = sld [smem:[#allocation9 + $0x105]]
        %v1337 = vstv %s1336
        %v1338 = vmul.f32 %v1337, %v983
        %v1340 = vrot.slane %v1338, 1
        %v1342 = vadd.f32 %v1335, %v1340
        %s1343 = sld [smem:[#allocation9 + $0x106]]
        %v1344 = vstv %s1343
        %v1345 = vmul.f32 %v1344, %v979
        %v1347 = vrot.slane %v1345, 2
        %v1349 = vadd.f32 %v1342, %v1347
        %s1350 = sld [smem:[#allocation9 + $0x107]]
        %v1351 = vstv %s1350
        %v1352 = vmul.f32 %v1351, %v974
        %v1354 = vrot.slane %v1352, 2
        %v1356 = vadd.f32 %v1349, %v1354
        %s1357 = sld [smem:[#allocation9 + $0x108]]
        %v1358 = vstv %s1357
        %v1359 = vmul.f32 %v1358, %v983
        %v1361 = vrot.slane %v1359, 2
        %v1363 = vadd.f32 %v1356, %v1361
        %s1364 = sld [smem:[#allocation9 + $0x109]]
        %v1365 = vstv %s1364
        %v1366 = vmul.f32 %v1365, %v979
        %v1368 = vrot.slane %v1366, 3
        %v1370 = vadd.f32 %v1363, %v1368
        %s1371 = sld [smem:[#allocation9 + $0x10a]]
        %v1372 = vstv %s1371
        %v1373 = vmul.f32 %v1372, %v974
        %v1375 = vrot.slane %v1373, 3
        %v1377 = vadd.f32 %v1370, %v1375
        %s1378 = sld [smem:[#allocation9 + $0x10b]]
        %v1379 = vstv %s1378
        %v1380 = vmul.f32 %v1379, %v983
        %v1382 = vrot.slane %v1380, 3
        %v1384 = vadd.f32 %v1377, %v1382
        %s1385 = sld [smem:[#allocation9 + $0x10c]]
        %v1386 = vstv %s1385
        %v1387 = vmul.f32 %v1386, %v979
        %v1389 = vrot.slane %v1387, 4
        %v1391 = vadd.f32 %v1384, %v1389
        %s1392 = sld [smem:[#allocation9 + $0x10d]]
        %v1393 = vstv %s1392
        %v1394 = vmul.f32 %v1393, %v974
        %v1396 = vrot.slane %v1394, 4
        %v1398 = vadd.f32 %v1391, %v1396
        %s1399 = sld [smem:[#allocation9 + $0x10e]]
        %v1400 = vstv %s1399
        %v1401 = vmul.f32 %v1400, %v983
        %v1403 = vrot.slane %v1401, 4
        %v1405 = vadd.f32 %v1398, %v1403
        %s1406 = sld [smem:[#allocation9 + $0x10f]]
        %v1407 = vstv %s1406
        %v1408 = vmul.f32 %v1407, %v979
        %v1410 = vrot.slane %v1408, 5
        %v1412 = vadd.f32 %v1405, %v1410
        %s1413 = sld [smem:[#allocation9 + $0x110]]
        %v1414 = vstv %s1413
        %v1415 = vmul.f32 %v1414, %v974
        %v1417 = vrot.slane %v1415, 5
        %v1419 = vadd.f32 %v1412, %v1417
        %s1420 = sld [smem:[#allocation9 + $0x111]]
        %v1421 = vstv %s1420
        %v1422 = vmul.f32 %v1421, %v983
        %v1424 = vrot.slane %v1422, 5
        %v1426 = vadd.f32 %v1419, %v1424
        %s1427 = sld [smem:[#allocation9 + $0x112]]
        %v1428 = vstv %s1427
        %v1429 = vmul.f32 %v1428, %v979
        %v1431 = vrot.slane %v1429, 6
        %v1433 = vadd.f32 %v1426, %v1431
        %s1434 = sld [smem:[#allocation9 + $0x113]]
        %v1435 = vstv %s1434
        %v1436 = vmul.f32 %v1435, %v974
        %v1438 = vrot.slane %v1436, 6
        %v1440 = vadd.f32 %v1433, %v1438
        %s1441 = sld [smem:[#allocation9 + $0x114]]
        %v1442 = vstv %s1441
        %v1443 = vmul.f32 %v1442, %v983
        %v1445 = vrot.slane %v1443, 6
        %v1447 = vadd.f32 %v1440, %v1445
        %s1448 = sld [smem:[#allocation9 + $0x115]]
        %v1449 = vstv %s1448
        %v1450 = vmul.f32 %v1449, %v979
        %v1452 = vrot.slane %v1450, 7
        %v1454 = vadd.f32 %v1447, %v1452
        %s1455 = sld [smem:[#allocation9 + $0x116]]
        %v1456 = vstv %s1455
        %v1457 = vmul.f32 %v1456, %v974
        %v1459 = vrot.slane %v1457, 7
        %v1461 = vadd.f32 %v1454, %v1459
        %s1462 = sld [smem:[#allocation9 + $0x117]]
        %v1463 = vstv %s1462
        %v1464 = vmul.f32 %v1463, %v983
        %v1466 = vrot.slane %v1464, 7
        %v1468 = vadd.f32 %v1461, %v1466
        %s1469 = sld [smem:[#allocation11 + $0x2]]
        %v1470 = vstv %s1469
        %v1471 = vadd.f32 %v1468, %v1470
        %v1472 = vmax.f32 %v1471, 0.0
        %s1473 = sld [smem:[#allocation9 + $0x180]]
        %v1474 = vstv %s1473
        %v1475 = vmul.f32 %v1474, %v979
        %v1476 = vadd.f32 %v1475, 0.0
        %s1477 = sld [smem:[#allocation9 + $0x181]]
        %v1478 = vstv %s1477
        %v1479 = vmul.f32 %v1478, %v974
        %v1480 = vadd.f32 %v1476, %v1479
        %s1481 = sld [smem:[#allocation9 + $0x182]]
        %v1482 = vstv %s1481
        %v1483 = vmul.f32 %v1482, %v983
        %v1484 = vadd.f32 %v1480, %v1483
        %s1485 = sld [smem:[#allocation9 + $0x183]]
        %v1486 = vstv %s1485
        %v1487 = vmul.f32 %v1486, %v979
        %v1489 = vrot.slane %v1487, 1
        %v1491 = vadd.f32 %v1484, %v1489
        %s1492 = sld [smem:[#allocation9 + $0x184]]
        %v1493 = vstv %s1492
        %v1494 = vmul.f32 %v1493, %v974
        %v1496 = vrot.slane %v1494, 1
        %v1498 = vadd.f32 %v1491, %v1496
        %s1499 = sld [smem:[#allocation9 + $0x185]]
        %v1500 = vstv %s1499
        %v1501 = vmul.f32 %v1500, %v983
        %v1503 = vrot.slane %v1501, 1
        %v1505 = vadd.f32 %v1498, %v1503
        %s1506 = sld [smem:[#allocation9 + $0x186]]
        %v1507 = vstv %s1506
        %v1508 = vmul.f32 %v1507, %v979
        %v1510 = vrot.slane %v1508, 2
        %v1512 = vadd.f32 %v1505, %v1510
        %s1513 = sld [smem:[#allocation9 + $0x187]]
        %v1514 = vstv %s1513
        %v1515 = vmul.f32 %v1514, %v974
        %v1517 = vrot.slane %v1515, 2
        %v1519 = vadd.f32 %v1512, %v1517
        %s1520 = sld [smem:[#allocation9 + $0x188]]
        %v1521 = vstv %s1520
        %v1522 = vmul.f32 %v1521, %v983
        %v1524 = vrot.slane %v1522, 2
        %v1526 = vadd.f32 %v1519, %v1524
        %s1527 = sld [smem:[#allocation9 + $0x189]]
        %v1528 = vstv %s1527
        %v1529 = vmul.f32 %v1528, %v979
        %v1531 = vrot.slane %v1529, 3
        %v1533 = vadd.f32 %v1526, %v1531
        %s1534 = sld [smem:[#allocation9 + $0x18a]]
        %v1535 = vstv %s1534
        %v1536 = vmul.f32 %v1535, %v974
        %v1538 = vrot.slane %v1536, 3
        %v1540 = vadd.f32 %v1533, %v1538
        %s1541 = sld [smem:[#allocation9 + $0x18b]]
        %v1542 = vstv %s1541
        %v1543 = vmul.f32 %v1542, %v983
        %v1545 = vrot.slane %v1543, 3
        %v1547 = vadd.f32 %v1540, %v1545
        %s1548 = sld [smem:[#allocation9 + $0x18c]]
        %v1549 = vstv %s1548
        %v1550 = vmul.f32 %v1549, %v979
        %v1552 = vrot.slane %v1550, 4
        %v1554 = vadd.f32 %v1547, %v1552
        %s1555 = sld [smem:[#allocation9 + $0x18d]]
        %v1556 = vstv %s1555
        %v1557 = vmul.f32 %v1556, %v974
        %v1559 = vrot.slane %v1557, 4
        %v1561 = vadd.f32 %v1554, %v1559
        %s1562 = sld [smem:[#allocation9 + $0x18e]]
        %v1563 = vstv %s1562
        %v1564 = vmul.f32 %v1563, %v983
        %v1566 = vrot.slane %v1564, 4
        %v1568 = vadd.f32 %v1561, %v1566
        %s1569 = sld [smem:[#allocation9 + $0x18f]]
        %v1570 = vstv %s1569
        %v1571 = vmul.f32 %v1570, %v979
        %v1573 = vrot.slane %v1571, 5
        %v1575 = vadd.f32 %v1568, %v1573
        %s1576 = sld [smem:[#allocation9 + $0x190]]
        %v1577 = vstv %s1576
        %v1578 = vmul.f32 %v1577, %v974
        %v1580 = vrot.slane %v1578, 5
        %v1582 = vadd.f32 %v1575, %v1580
        %s1583 = sld [smem:[#allocation9 + $0x191]]
        %v1584 = vstv %s1583
        %v1585 = vmul.f32 %v1584, %v983
        %v1587 = vrot.slane %v1585, 5
        %v1589 = vadd.f32 %v1582, %v1587
        %s1590 = sld [smem:[#allocation9 + $0x192]]
        %v1591 = vstv %s1590
        %v1592 = vmul.f32 %v1591, %v979
        %v1594 = vrot.slane %v1592, 6
        %v1596 = vadd.f32 %v1589, %v1594
        %s1597 = sld [smem:[#allocation9 + $0x193]]
        %v1598 = vstv %s1597
        %v1599 = vmul.f32 %v1598, %v974
        %v1601 = vrot.slane %v1599, 6
        %v1603 = vadd.f32 %v1596, %v1601
        %s1604 = sld [smem:[#allocation9 + $0x194]]
        %v1605 = vstv %s1604
        %v1606 = vmul.f32 %v1605, %v983
        %v1608 = vrot.slane %v1606, 6
        %v1610 = vadd.f32 %v1603, %v1608
        %s1611 = sld [smem:[#allocation9 + $0x195]]
        %v1612 = vstv %s1611
        %v1613 = vmul.f32 %v1612, %v979
        %v1615 = vrot.slane %v1613, 7
        %v1617 = vadd.f32 %v1610, %v1615
        %s1618 = sld [smem:[#allocation9 + $0x196]]
        %v1619 = vstv %s1618
        %v1620 = vmul.f32 %v1619, %v974
        %v1622 = vrot.slane %v1620, 7
        %v1624 = vadd.f32 %v1617, %v1622
        %s1625 = sld [smem:[#allocation9 + $0x197]]
        %v1626 = vstv %s1625
        %v1627 = vmul.f32 %v1626, %v983
        %v1629 = vrot.slane %v1627, 7
        %v1631 = vadd.f32 %v1624, %v1629
        %s1632 = sld [smem:[#allocation11 + $0x3]]
        %v1633 = vstv %s1632
        %v1634 = vadd.f32 %v1631, %v1633
        %v1635 = vmax.f32 %v1634, 0.0
        %s1636 = sld [smem:[#allocation9 + $0x200]]
        %v1637 = vstv %s1636
        %v1638 = vmul.f32 %v1637, %v979
        %v1639 = vadd.f32 %v1638, 0.0
        %s1640 = sld [smem:[#allocation9 + $0x201]]
        %v1641 = vstv %s1640
        %v1642 = vmul.f32 %v1641, %v974
        %v1643 = vadd.f32 %v1639, %v1642
        %s1644 = sld [smem:[#allocation9 + $0x202]]
        %v1645 = vstv %s1644
        %v1646 = vmul.f32 %v1645, %v983
        %v1647 = vadd.f32 %v1643, %v1646
        %s1648 = sld [smem:[#allocation9 + $0x203]]
        %v1649 = vstv %s1648
        %v1650 = vmul.f32 %v1649, %v979
        %v1652 = vrot.slane %v1650, 1
        %v1654 = vadd.f32 %v1647, %v1652
        %s1655 = sld [smem:[#allocation9 + $0x204]]
        %v1656 = vstv %s1655
        %v1657 = vmul.f32 %v1656, %v974
        %v1659 = vrot.slane %v1657, 1
        %v1661 = vadd.f32 %v1654, %v1659
        %s1662 = sld [smem:[#allocation9 + $0x205]]
        %v1663 = vstv %s1662
        %v1664 = vmul.f32 %v1663, %v983
        %v1666 = vrot.slane %v1664, 1
        %v1668 = vadd.f32 %v1661, %v1666
        %s1669 = sld [smem:[#allocation9 + $0x206]]
        %v1670 = vstv %s1669
        %v1671 = vmul.f32 %v1670, %v979
        %v1673 = vrot.slane %v1671, 2
        %v1675 = vadd.f32 %v1668, %v1673
        %s1676 = sld [smem:[#allocation9 + $0x207]]
        %v1677 = vstv %s1676
        %v1678 = vmul.f32 %v1677, %v974
        %v1680 = vrot.slane %v1678, 2
        %v1682 = vadd.f32 %v1675, %v1680
        %s1683 = sld [smem:[#allocation9 + $0x208]]
        %v1684 = vstv %s1683
        %v1685 = vmul.f32 %v1684, %v983
        %v1687 = vrot.slane %v1685, 2
        %v1689 = vadd.f32 %v1682, %v1687
        %s1690 = sld [smem:[#allocation9 + $0x209]]
        %v1691 = vstv %s1690
        %v1692 = vmul.f32 %v1691, %v979
        %v1694 = vrot.slane %v1692, 3
        %v1696 = vadd.f32 %v1689, %v1694
        %s1697 = sld [smem:[#allocation9 + $0x20a]]
        %v1698 = vstv %s1697
        %v1699 = vmul.f32 %v1698, %v974
        %v1701 = vrot.slane %v1699, 3
        %v1703 = vadd.f32 %v1696, %v1701
        %s1704 = sld [smem:[#allocation9 + $0x20b]]
        %v1705 = vstv %s1704
        %v1706 = vmul.f32 %v1705, %v983
        %v1708 = vrot.slane %v1706, 3
        %v1710 = vadd.f32 %v1703, %v1708
        %s1711 = sld [smem:[#allocation9 + $0x20c]]
        %v1712 = vstv %s1711
        %v1713 = vmul.f32 %v1712, %v979
        %v1715 = vrot.slane %v1713, 4
        %v1717 = vadd.f32 %v1710, %v1715
        %s1718 = sld [smem:[#allocation9 + $0x20d]]
        %v1719 = vstv %s1718
        %v1720 = vmul.f32 %v1719, %v974
        %v1722 = vrot.slane %v1720, 4
        %v1724 = vadd.f32 %v1717, %v1722
        %s1725 = sld [smem:[#allocation9 + $0x20e]]
        %v1726 = vstv %s1725
        %v1727 = vmul.f32 %v1726, %v983
        %v1729 = vrot.slane %v1727, 4
        %v1731 = vadd.f32 %v1724, %v1729
        %s1732 = sld [smem:[#allocation9 + $0x20f]]
        %v1733 = vstv %s1732
        %v1734 = vmul.f32 %v1733, %v979
        %v1736 = vrot.slane %v1734, 5
        %v1738 = vadd.f32 %v1731, %v1736
        %s1739 = sld [smem:[#allocation9 + $0x210]]
        %v1740 = vstv %s1739
        %v1741 = vmul.f32 %v1740, %v974
        %v1743 = vrot.slane %v1741, 5
        %v1745 = vadd.f32 %v1738, %v1743
        %s1746 = sld [smem:[#allocation9 + $0x211]]
        %v1747 = vstv %s1746
        %v1748 = vmul.f32 %v1747, %v983
        %v1750 = vrot.slane %v1748, 5
        %v1752 = vadd.f32 %v1745, %v1750
        %s1753 = sld [smem:[#allocation9 + $0x212]]
        %v1754 = vstv %s1753
        %v1755 = vmul.f32 %v1754, %v979
        %v1757 = vrot.slane %v1755, 6
        %v1759 = vadd.f32 %v1752, %v1757
        %s1760 = sld [smem:[#allocation9 + $0x213]]
        %v1761 = vstv %s1760
        %v1762 = vmul.f32 %v1761, %v974
        %v1764 = vrot.slane %v1762, 6
        %v1766 = vadd.f32 %v1759, %v1764
        %s1767 = sld [smem:[#allocation9 + $0x214]]
        %v1768 = vstv %s1767
        %v1769 = vmul.f32 %v1768, %v983
        %v1771 = vrot.slane %v1769, 6
        %v1773 = vadd.f32 %v1766, %v1771
        %s1774 = sld [smem:[#allocation9 + $0x215]]
        %v1775 = vstv %s1774
        %v1776 = vmul.f32 %v1775, %v979
        %v1778 = vrot.slane %v1776, 7
        %v1780 = vadd.f32 %v1773, %v1778
        %s1781 = sld [smem:[#allocation9 + $0x216]]
        %v1782 = vstv %s1781
        %v1783 = vmul.f32 %v1782, %v974
        %v1785 = vrot.slane %v1783, 7
        %v1787 = vadd.f32 %v1780, %v1785
        %s1788 = sld [smem:[#allocation9 + $0x217]]
        %v1789 = vstv %s1788
        %v1790 = vmul.f32 %v1789, %v983
        %v1792 = vrot.slane %v1790, 7
        %v1794 = vadd.f32 %v1787, %v1792
        %s1795 = sld [smem:[#allocation11 + $0x4]]
        %v1796 = vstv %s1795
        %v1797 = vadd.f32 %v1794, %v1796
        %v1798 = vmax.f32 %v1797, 0.0
        %s1799 = sld [smem:[#allocation9 + $0x280]]
        %v1800 = vstv %s1799
        %v1801 = vmul.f32 %v1800, %v979
        %v1802 = vadd.f32 %v1801, 0.0
        %s1803 = sld [smem:[#allocation9 + $0x281]]
        %v1804 = vstv %s1803
        %v1805 = vmul.f32 %v1804, %v974
        %v1806 = vadd.f32 %v1802, %v1805
        %s1807 = sld [smem:[#allocation9 + $0x282]]
        %v1808 = vstv %s1807
        %v1809 = vmul.f32 %v1808, %v983
        %v1810 = vadd.f32 %v1806, %v1809
        %s1811 = sld [smem:[#allocation9 + $0x283]]
        %v1812 = vstv %s1811
        %v1813 = vmul.f32 %v1812, %v979
        %v1815 = vrot.slane %v1813, 1
        %v1817 = vadd.f32 %v1810, %v1815
        %s1818 = sld [smem:[#allocation9 + $0x284]]
        %v1819 = vstv %s1818
        %v1820 = vmul.f32 %v1819, %v974
        %v1822 = vrot.slane %v1820, 1
        %v1824 = vadd.f32 %v1817, %v1822
        %s1825 = sld [smem:[#allocation9 + $0x285]]
        %v1826 = vstv %s1825
        %v1827 = vmul.f32 %v1826, %v983
        %v1829 = vrot.slane %v1827, 1
        %v1831 = vadd.f32 %v1824, %v1829
        %s1832 = sld [smem:[#allocation9 + $0x286]]
        %v1833 = vstv %s1832
        %v1834 = vmul.f32 %v1833, %v979
        %v1836 = vrot.slane %v1834, 2
        %v1838 = vadd.f32 %v1831, %v1836
        %s1839 = sld [smem:[#allocation9 + $0x287]]
        %v1840 = vstv %s1839
        %v1841 = vmul.f32 %v1840, %v974
        %v1843 = vrot.slane %v1841, 2
        %v1845 = vadd.f32 %v1838, %v1843
        %s1846 = sld [smem:[#allocation9 + $0x288]]
        %v1847 = vstv %s1846
        %v1848 = vmul.f32 %v1847, %v983
        %v1850 = vrot.slane %v1848, 2
        %v1852 = vadd.f32 %v1845, %v1850
        %s1853 = sld [smem:[#allocation9 + $0x289]]
        %v1854 = vstv %s1853
        %v1855 = vmul.f32 %v1854, %v979
        %v1857 = vrot.slane %v1855, 3
        %v1859 = vadd.f32 %v1852, %v1857
        %s1860 = sld [smem:[#allocation9 + $0x28a]]
        %v1861 = vstv %s1860
        %v1862 = vmul.f32 %v1861, %v974
        %v1864 = vrot.slane %v1862, 3
        %v1866 = vadd.f32 %v1859, %v1864
        %s1867 = sld [smem:[#allocation9 + $0x28b]]
        %v1868 = vstv %s1867
        %v1869 = vmul.f32 %v1868, %v983
        %v1871 = vrot.slane %v1869, 3
        %v1873 = vadd.f32 %v1866, %v1871
        %s1874 = sld [smem:[#allocation9 + $0x28c]]
        %v1875 = vstv %s1874
        %v1876 = vmul.f32 %v1875, %v979
        %v1878 = vrot.slane %v1876, 4
        %v1880 = vadd.f32 %v1873, %v1878
        %s1881 = sld [smem:[#allocation9 + $0x28d]]
        %v1882 = vstv %s1881
        %v1883 = vmul.f32 %v1882, %v974
        %v1885 = vrot.slane %v1883, 4
        %v1887 = vadd.f32 %v1880, %v1885
        %s1888 = sld [smem:[#allocation9 + $0x28e]]
        %v1889 = vstv %s1888
        %v1890 = vmul.f32 %v1889, %v983
        %v1892 = vrot.slane %v1890, 4
        %v1894 = vadd.f32 %v1887, %v1892
        %s1895 = sld [smem:[#allocation9 + $0x28f]]
        %v1896 = vstv %s1895
        %v1897 = vmul.f32 %v1896, %v979
        %v1899 = vrot.slane %v1897, 5
        %v1901 = vadd.f32 %v1894, %v1899
        %s1902 = sld [smem:[#allocation9 + $0x290]]
        %v1903 = vstv %s1902
        %v1904 = vmul.f32 %v1903, %v974
        %v1906 = vrot.slane %v1904, 5
        %v1908 = vadd.f32 %v1901, %v1906
        %s1909 = sld [smem:[#allocation9 + $0x291]]
        %v1910 = vstv %s1909
        %v1911 = vmul.f32 %v1910, %v983
        %v1913 = vrot.slane %v1911, 5
        %v1915 = vadd.f32 %v1908, %v1913
        %s1916 = sld [smem:[#allocation9 + $0x292]]
        %v1917 = vstv %s1916
        %v1918 = vmul.f32 %v1917, %v979
        %v1920 = vrot.slane %v1918, 6
        %v1922 = vadd.f32 %v1915, %v1920
        %s1923 = sld [smem:[#allocation9 + $0x293]]
        %v1924 = vstv %s1923
        %v1925 = vmul.f32 %v1924, %v974
        %v1927 = vrot.slane %v1925, 6
        %v1929 = vadd.f32 %v1922, %v1927
        %s1930 = sld [smem:[#allocation9 + $0x294]]
        %v1931 = vstv %s1930
        %v1932 = vmul.f32 %v1931, %v983
        %v1934 = vrot.slane %v1932, 6
        %v1936 = vadd.f32 %v1929, %v1934
        %s1937 = sld [smem:[#allocation9 + $0x295]]
        %v1938 = vstv %s1937
        %v1939 = vmul.f32 %v1938, %v979
        %v1941 = vrot.slane %v1939, 7
        %v1943 = vadd.f32 %v1936, %v1941
        %s1944 = sld [smem:[#allocation9 + $0x296]]
        %v1945 = vstv %s1944
        %v1946 = vmul.f32 %v1945, %v974
        %v1948 = vrot.slane %v1946, 7
        %v1950 = vadd.f32 %v1943, %v1948
        %s1951 = sld [smem:[#allocation9 + $0x297]]
        %v1952 = vstv %s1951
        %v1953 = vmul.f32 %v1952, %v983
        %v1955 = vrot.slane %v1953, 7
        %v1957 = vadd.f32 %v1950, %v1955
        %s1958 = sld [smem:[#allocation11 + $0x5]]
        %v1959 = vstv %s1958
        %v1960 = vadd.f32 %v1957, %v1959
        %v1961 = vmax.f32 %v1960, 0.0
        %s1962 = sld [smem:[#allocation9 + $0x300]]
        %v1963 = vstv %s1962
        %v1964 = vmul.f32 %v1963, %v979
        %v1965 = vadd.f32 %v1964, 0.0
        %s1966 = sld [smem:[#allocation9 + $0x301]]
        %v1967 = vstv %s1966
        %v1968 = vmul.f32 %v1967, %v974
        %v1969 = vadd.f32 %v1965, %v1968
        %s1970 = sld [smem:[#allocation9 + $0x302]]
        %v1971 = vstv %s1970
        %v1972 = vmul.f32 %v1971, %v983
        %v1973 = vadd.f32 %v1969, %v1972
        %s1974 = sld [smem:[#allocation9 + $0x303]]
        %v1975 = vstv %s1974
        %v1976 = vmul.f32 %v1975, %v979
        %v1978 = vrot.slane %v1976, 1
        %v1980 = vadd.f32 %v1973, %v1978
        %s1981 = sld [smem:[#allocation9 + $0x304]]
        %v1982 = vstv %s1981
        %v1983 = vmul.f32 %v1982, %v974
        %v1985 = vrot.slane %v1983, 1
        %v1987 = vadd.f32 %v1980, %v1985
        %s1988 = sld [smem:[#allocation9 + $0x305]]
        %v1989 = vstv %s1988
        %v1990 = vmul.f32 %v1989, %v983
        %v1992 = vrot.slane %v1990, 1
        %v1994 = vadd.f32 %v1987, %v1992
        %s1995 = sld [smem:[#allocation9 + $0x306]]
        %v1996 = vstv %s1995
        %v1997 = vmul.f32 %v1996, %v979
        %v1999 = vrot.slane %v1997, 2
        %v2001 = vadd.f32 %v1994, %v1999
        %s2002 = sld [smem:[#allocation9 + $0x307]]
        %v2003 = vstv %s2002
        %v2004 = vmul.f32 %v2003, %v974
        %v2006 = vrot.slane %v2004, 2
        %v2008 = vadd.f32 %v2001, %v2006
        %s2009 = sld [smem:[#allocation9 + $0x308]]
        %v2010 = vstv %s2009
        %v2011 = vmul.f32 %v2010, %v983
        %v2013 = vrot.slane %v2011, 2
        %v2015 = vadd.f32 %v2008, %v2013
        %s2016 = sld [smem:[#allocation9 + $0x309]]
        %v2017 = vstv %s2016
        %v2018 = vmul.f32 %v2017, %v979
        %v2020 = vrot.slane %v2018, 3
        %v2022 = vadd.f32 %v2015, %v2020
        %s2023 = sld [smem:[#allocation9 + $0x30a]]
        %v2024 = vstv %s2023
        %v2025 = vmul.f32 %v2024, %v974
        %v2027 = vrot.slane %v2025, 3
        %v2029 = vadd.f32 %v2022, %v2027
        %s2030 = sld [smem:[#allocation9 + $0x30b]]
        %v2031 = vstv %s2030
        %v2032 = vmul.f32 %v2031, %v983
        %v2034 = vrot.slane %v2032, 3
        %v2036 = vadd.f32 %v2029, %v2034
        %s2037 = sld [smem:[#allocation9 + $0x30c]]
        %v2038 = vstv %s2037
        %v2039 = vmul.f32 %v2038, %v979
        %v2041 = vrot.slane %v2039, 4
        %v2043 = vadd.f32 %v2036, %v2041
        %s2044 = sld [smem:[#allocation9 + $0x30d]]
        %v2045 = vstv %s2044
        %v2046 = vmul.f32 %v2045, %v974
        %v2048 = vrot.slane %v2046, 4
        %v2050 = vadd.f32 %v2043, %v2048
        %s2051 = sld [smem:[#allocation9 + $0x30e]]
        %v2052 = vstv %s2051
        %v2053 = vmul.f32 %v2052, %v983
        %v2055 = vrot.slane %v2053, 4
        %v2057 = vadd.f32 %v2050, %v2055
        %s2058 = sld [smem:[#allocation9 + $0x30f]]
        %v2059 = vstv %s2058
        %v2060 = vmul.f32 %v2059, %v979
        %v2062 = vrot.slane %v2060, 5
        %v2064 = vadd.f32 %v2057, %v2062
        %s2065 = sld [smem:[#allocation9 + $0x310]]
        %v2066 = vstv %s2065
        %v2067 = vmul.f32 %v2066, %v974
        %v2069 = vrot.slane %v2067, 5
        %v2071 = vadd.f32 %v2064, %v2069
        %s2072 = sld [smem:[#allocation9 + $0x311]]
        %v2073 = vstv %s2072
        %v2074 = vmul.f32 %v2073, %v983
        %v2076 = vrot.slane %v2074, 5
        %v2078 = vadd.f32 %v2071, %v2076
        %s2079 = sld [smem:[#allocation9 + $0x312]]
        %v2080 = vstv %s2079
        %v2081 = vmul.f32 %v2080, %v979
        %v2083 = vrot.slane %v2081, 6
        %v2085 = vadd.f32 %v2078, %v2083
        %s2086 = sld [smem:[#allocation9 + $0x313]]
        %v2087 = vstv %s2086
        %v2088 = vmul.f32 %v2087, %v974
        %v2090 = vrot.slane %v2088, 6
        %v2092 = vadd.f32 %v2085, %v2090
        %s2093 = sld [smem:[#allocation9 + $0x314]]
        %v2094 = vstv %s2093
        %v2095 = vmul.f32 %v2094, %v983
        %v2097 = vrot.slane %v2095, 6
        %v2099 = vadd.f32 %v2092, %v2097
        %s2100 = sld [smem:[#allocation9 + $0x315]]
        %v2101 = vstv %s2100
        %v2102 = vmul.f32 %v2101, %v979
        %v2104 = vrot.slane %v2102, 7
        %v2106 = vadd.f32 %v2099, %v2104
        %s2107 = sld [smem:[#allocation9 + $0x316]]
        %v2108 = vstv %s2107
        %v2109 = vmul.f32 %v2108, %v974
        %v2111 = vrot.slane %v2109, 7
        %v2113 = vadd.f32 %v2106, %v2111
        %s2114 = sld [smem:[#allocation9 + $0x317]]
        %v2115 = vstv %s2114
        %v2116 = vmul.f32 %v2115, %v983
        %v2118 = vrot.slane %v2116, 7
        %v2120 = vadd.f32 %v2113, %v2118
        %s2121 = sld [smem:[#allocation11 + $0x6]]
        %v2122 = vstv %s2121
        %v2123 = vadd.f32 %v2120, %v2122
        %v2124 = vmax.f32 %v2123, 0.0
        %s2125 = sld [smem:[#allocation9 + $0x380]]
        %v2126 = vstv %s2125
        %v2127 = vmul.f32 %v2126, %v979
        %v2128 = vadd.f32 %v2127, 0.0
        %s2129 = sld [smem:[#allocation9 + $0x381]]
        %v2130 = vstv %s2129
        %v2131 = vmul.f32 %v2130, %v974
        %v2132 = vadd.f32 %v2128, %v2131
        %s2133 = sld [smem:[#allocation9 + $0x382]]
        %v2134 = vstv %s2133
        %v2135 = vmul.f32 %v2134, %v983
        %v2136 = vadd.f32 %v2132, %v2135
        %s2137 = sld [smem:[#allocation9 + $0x383]]
        %v2138 = vstv %s2137
        %v2139 = vmul.f32 %v2138, %v979
        %v2141 = vrot.slane %v2139, 1
        %v2143 = vadd.f32 %v2136, %v2141
        %s2144 = sld [smem:[#allocation9 + $0x384]]
        %v2145 = vstv %s2144
        %v2146 = vmul.f32 %v2145, %v974
        %v2148 = vrot.slane %v2146, 1
        %v2150 = vadd.f32 %v2143, %v2148
        %s2151 = sld [smem:[#allocation9 + $0x385]]
        %v2152 = vstv %s2151
        %v2153 = vmul.f32 %v2152, %v983
        %v2155 = vrot.slane %v2153, 1
        %v2157 = vadd.f32 %v2150, %v2155
        %s2158 = sld [smem:[#allocation9 + $0x386]]
        %v2159 = vstv %s2158
        %v2160 = vmul.f32 %v2159, %v979
        %v2162 = vrot.slane %v2160, 2
        %v2164 = vadd.f32 %v2157, %v2162
        %s2165 = sld [smem:[#allocation9 + $0x387]]
        %v2166 = vstv %s2165
        %v2167 = vmul.f32 %v2166, %v974
        %v2169 = vrot.slane %v2167, 2
        %v2171 = vadd.f32 %v2164, %v2169
        %s2172 = sld [smem:[#allocation9 + $0x388]]
        %v2173 = vstv %s2172
        %v2174 = vmul.f32 %v2173, %v983
        %v2176 = vrot.slane %v2174, 2
        %v2178 = vadd.f32 %v2171, %v2176
        %s2179 = sld [smem:[#allocation9 + $0x389]]
        %v2180 = vstv %s2179
        %v2181 = vmul.f32 %v2180, %v979
        %v2183 = vrot.slane %v2181, 3
        %v2185 = vadd.f32 %v2178, %v2183
        %s2186 = sld [smem:[#allocation9 + $0x38a]]
        %v2187 = vstv %s2186
        %v2188 = vmul.f32 %v2187, %v974
        %v2190 = vrot.slane %v2188, 3
        %v2192 = vadd.f32 %v2185, %v2190
        %s2193 = sld [smem:[#allocation9 + $0x38b]]
        %v2194 = vstv %s2193
        %v2195 = vmul.f32 %v2194, %v983
        %v2197 = vrot.slane %v2195, 3
        %v2199 = vadd.f32 %v2192, %v2197
        %s2200 = sld [smem:[#allocation9 + $0x38c]]
        %v2201 = vstv %s2200
        %v2202 = vmul.f32 %v2201, %v979
        %v2204 = vrot.slane %v2202, 4
        %v2206 = vadd.f32 %v2199, %v2204
        %s2207 = sld [smem:[#allocation9 + $0x38d]]
        %v2208 = vstv %s2207
        %v2209 = vmul.f32 %v2208, %v974
        %v2211 = vrot.slane %v2209, 4
        %v2213 = vadd.f32 %v2206, %v2211
        %s2214 = sld [smem:[#allocation9 + $0x38e]]
        %v2215 = vstv %s2214
        %v2216 = vmul.f32 %v2215, %v983
        %v2218 = vrot.slane %v2216, 4
        %v2220 = vadd.f32 %v2213, %v2218
        %s2221 = sld [smem:[#allocation9 + $0x38f]]
        %v2222 = vstv %s2221
        %v2223 = vmul.f32 %v2222, %v979
        %v2225 = vrot.slane %v2223, 5
        %v2227 = vadd.f32 %v2220, %v2225
        %s2228 = sld [smem:[#allocation9 + $0x390]]
        %v2229 = vstv %s2228
        %v2230 = vmul.f32 %v2229, %v974
        %v2232 = vrot.slane %v2230, 5
        %v2234 = vadd.f32 %v2227, %v2232
        %s2235 = sld [smem:[#allocation9 + $0x391]]
        %v2236 = vstv %s2235
        %v2237 = vmul.f32 %v2236, %v983
        %v2239 = vrot.slane %v2237, 5
        %v2241 = vadd.f32 %v2234, %v2239
        %s2242 = sld [smem:[#allocation9 + $0x392]]
        %v2243 = vstv %s2242
        %v2244 = vmul.f32 %v2243, %v979
        %v2246 = vrot.slane %v2244, 6
        %v2248 = vadd.f32 %v2241, %v2246
        %s2249 = sld [smem:[#allocation9 + $0x393]]
        %v2250 = vstv %s2249
        %v2251 = vmul.f32 %v2250, %v974
        %v2253 = vrot.slane %v2251, 6
        %v2255 = vadd.f32 %v2248, %v2253
        %s2256 = sld [smem:[#allocation9 + $0x394]]
        %v2257 = vstv %s2256
        %v2258 = vmul.f32 %v2257, %v983
        %v2260 = vrot.slane %v2258, 6
        %v2262 = vadd.f32 %v2255, %v2260
        %s2263 = sld [smem:[#allocation9 + $0x395]]
        %v2264 = vstv %s2263
        %v2265 = vmul.f32 %v2264, %v979
        %v2267 = vrot.slane %v2265, 7
        %v2269 = vadd.f32 %v2262, %v2267
        %s2270 = sld [smem:[#allocation9 + $0x396]]
        %v2271 = vstv %s2270
        %v2272 = vmul.f32 %v2271, %v974
        %v2274 = vrot.slane %v2272, 7
        %v2276 = vadd.f32 %v2269, %v2274
        %s2277 = sld [smem:[#allocation9 + $0x397]]
        %v2278 = vstv %s2277
        %v2279 = vmul.f32 %v2278, %v983
        %v2281 = vrot.slane %v2279, 7
        %v2283 = vadd.f32 %v2276, %v2281
        %s2284 = sld [smem:[#allocation11 + $0x7]]
        %v2285 = vstv %s2284
        %v2286 = vadd.f32 %v2283, %v2285
        %v2287 = vmax.f32 %v2286, 0.0
        %v2289 = vrot.slane %v1309, 7
        %v2292 = vrot.slane %v1472, 6
        %v2295 = vrot.slane %v1635, 5
        %v2298 = vrot.slane %v1798, 4
        %v2301 = vrot.slane %v1961, 3
        %v2304 = vrot.slane %v2124, 2
        %v2307 = vrot.slane %v2287, 1
        %v2309 = vsel %vm961, %v1146, %v2289
        %v2310 = vsel %vm963, %v2309, %v2292
        %v2311 = vsel %vm965, %v2310, %v2295
        %v2312 = vsel %vm967, %v2311, %v2298
        %v2313 = vsel %vm969, %v2312, %v2301
        %v2314 = vsel %vm971, %v2313, %v2304
        %v2315 = vsel %vm973, %v2314, %v2307
        %vm2316 = vcmask 64512
        %2317 = vst.msk [vmem:[%s292] sm:$0xff] %vm2316, %v2315
        %s2318 = sand.u32 %s143, 1
        %s2319 = scalar_lea.sflag [#allocation4], %s2318
        %s2320 = sand.u32 %s143, 1
        %s2321 = smul.addr %s2320, 8
        %s2322 = scalar_lea.vmem [#allocation12], %s2321
        // Predicated region
        $region61: #{tpu_custom_call.1} parent=39 // pred_check
          %p2323 = pneg %p153
        $region62: #{tpu_custom_call.1} parent=39 // pred_check_branch
          %2325 = sbr.rel (%p2323) target = $region64
        $region63: #{tpu_custom_call.1} parent=39 // pred_region
          %s2327 = ssub.s32 128, 128
          %2328 = vsyncadd %s2319, %s2327
          %s2329 = smul.addr %s25, 128
          %s2330 = scalar_lea.hbm %s5, %s2329
          %s2332 = sshll.u32 %s2322, 4
          %s2333 = int_to_ptr.vmem [resolvable:$true] %s2332
          %2335 = dma.vmem_to_hbm [thread:$0]  %s2333, 128, %s2330, %s2319
        $region64: #{tpu_custom_call.1} parent=39 // pred_fallthru
          _
      $region40: #{tpu_custom_call.1} parent=5 // pred_fallthru
        _
      %p2336 = scmp.le.s32.totalorder 2, %s20
      // Predicated region
      $region65: #{tpu_custom_call.1} parent=5 // pred_check
        %p2337 = pneg %p2336
      $region66: #{tpu_custom_call.1} parent=5 // pred_check_branch
        %2339 = sbr.rel (%p2337) target = $region68
      $region67: #{tpu_custom_call.1} parent=5 // pred_region
        %s2340 = ssub.s32 %s20, 2
        // Predicated region
        $region69: #{tpu_custom_call.1} parent=67 // pred_check
          %p2341 = pneg %p159
        $region70: #{tpu_custom_call.1} parent=67 // pred_check_branch
          %2343 = sbr.rel (%p2341) target = $region72
        $region71: #{tpu_custom_call.1} parent=67 // pred_region
          %s2344 = sand.u32 %s144, 1
          %s2345 = scalar_lea.sflag [#allocation4], %s2344
          %s2346 = sand.u32 %s144, 1
          %s2347 = smul.addr %s2346, 8
          %s2348 = scalar_lea.vmem [#allocation12], %s2347
          %2349 = dma.done %s2345, 128
        $region72: #{tpu_custom_call.1} parent=67 // pred_fallthru
          _
      $region68: #{tpu_custom_call.1} parent=5 // pred_fallthru
        _
    $region6: #{tpu_custom_call.1} parent=1 // loop_footer
      %s24 = sadd.s32 1, %s20
    $region7: #{tpu_custom_call.1} parent=1 // loop_footer_branch
      %19 = sbr.rel target = $region3
    $region8: #{tpu_custom_call.1} parent=1 // loop_exit
      _
    %2350 = vsyncpa [#allocation3], 1
    %s2351 = scalar_lea.sflag [#allocation3], 1
    %2352 = vsyncpa %s2351, 1
    %2353 = vsyncpa [#allocation4], 1
    %s2354 = scalar_lea.sflag [#allocation4], 1
    %2355 = vsyncpa %s2354, 1
    %2356 = vsyncpa [#allocation5], 1
    %s2357 = scalar_lea.sflag [#allocation5], 1
    %2358 = vsyncpa %s2357, 1
    %2359 = vsyncpa [#allocation6], 1
    %s2360 = scalar_lea.sflag [#allocation6], 1
    %2361 = vsyncpa %s2360, 1
    %2362 = vsyncpa [#allocation10], 1

</llo_original>
